<compile_context>
chip_gen: v7x
topology: tpu7x:2x2x1
jax: 0.10.0
libtpu: 0.0.40
codegen_flags: <defaults>
</compile_context>

<pallas_src>
import functools
import math

import jax
import jax.numpy as jnp
from jax import lax
from jax.experimental import pallas as pl
from jax.experimental.pallas import tpu as pltpu


def _dconv_kernel(x_ref, xh_ref, w_ref, b_ref, o_ref, *, TD, H_out, KD, KH):
    # x_ref  : (TD, Hp, Wp*Cin)          main padded-input planes of this D tile
    # xh_ref : (max(KD-1,1), Hp, Wp*Cin) D-halo planes (padded rows TD .. TD+KD-2)
    # w_ref  : (KD*KH, Wp*Cin, Wout*Cout) banded (Toeplitz-over-W) weights, VMEM resident
    # b_ref  : (1, Wout*Cout)            bias broadcast over w (float32)
    # o_ref  : (TD, H_out, Wout*Cout)    float32 output block (also the accumulator)
    wc = o_ref.shape[-1]
    bias = jnp.broadcast_to(b_ref[...], (H_out, wc))  # hoisted broadcast

    for d in range(TD):                               # static unroll over output planes
        o_ref[d] = bias
        for kd in range(KD):
            src = d + kd
            if src < TD:                              # trace-time choice: tile vs halo ref
                plane_ref, row = x_ref, src
            else:
                plane_ref, row = xh_ref, src - TD
            for kh in range(KH):
                xs = plane_ref[row, pl.ds(kh, H_out), :]        # (H_out, Wp*Cin)
                o_ref[d] += lax.dot_general(
                    xs, w_ref[kd * KH + kh],
                    dimension_numbers=(((1,), (0,)), ((), ())),
                    preferred_element_type=jnp.float32)


def _build_banded_weight(weight_oidhw, W_out, Wp, dtype):
    """(Cout,Cin,KD,KH,KW) -> (KD*KH, Wp*Cin, W_out*Cout) banded-over-W matrix.

    M[kd*KH+kh, p*Cin+ci, w*Cout+co] = weight[co, ci, kd, kh, p-w] if 0 <= p-w < KW else 0.
    Folding kw + Cin into one contraction gives lane-dense MXU matmuls.
    """
    C_out, C_in, KD, KH, KW = weight_oidhw.shape
    w_t = jnp.transpose(weight_oidhw, (2, 3, 4, 1, 0))        # (KD,KH,KW,Cin,Cout)
    w_idx = jnp.arange(W_out)[:, None]
    k_idx = jnp.arange(KW)[None, :]
    band = jnp.zeros((W_out, Wp, KW), weight_oidhw.dtype)
    band = band.at[w_idx, w_idx + k_idx, k_idx].set(1.0)      # band[w, w+kw, kw] = 1
    m = jnp.einsum("wpk,dhkio->dhpiwo", band, w_t)            # (KD,KH,Wp,Cin,W_out,Cout)
    m = m.reshape(KD * KH, Wp * C_in, W_out * C_out)
    return m.astype(dtype)


def d_conv_forward(x_ncdhw, weight_oidhw, bias, *, small_kernel, large_kernel,
                   tile_d=4, compute_dtype=jnp.float32):
    """Forward pass matching torch D_Conv (groups=1).

    x_ncdhw:      (N, Cin, D, H, W)
    weight_oidhw: (Cout, Cin, kD, kH, kW)   with (kD, kH, kW) = (small, small, large)
    bias:         (Cout,)
    returns       (N, Cout, D_out, H_out, W_out)
    """
    N, C_in, D, H, W = x_ncdhw.shape
    C_out = weight_oidhw.shape[0]
    KD = KH = small_kernel
    KW = large_kernel
    pd = ph = (small_kernel - 1) // 2
    pw = (large_kernel - 1) // 2

    # torch Conv3d output sizes for this stride-1 padding.
    D_out = D + 2 * pd - KD + 1
    H_out = H + 2 * ph - KH + 1
    W_out = W + 2 * pw - KW + 1
    Hp, Wp = H + 2 * ph, W + 2 * pw

    # D tiling: TD output planes per grid step; the KD-1 halo planes are fetched via a
    # second BlockSpec on the same array, which requires TD % HALO == 0.
    HALO = max(KD - 1, 1)
    TD = min(max(tile_d, 1), D_out)
    TD = ((TD + HALO - 1) // HALO) * HALO
    nD = -(-D_out // TD)
    D_out_pad = nD * TD

    # Pad + flatten the input to a lane-dense (N, Dp, Hp, Wp*Cin) slab.
    dp_needed = D_out_pad + HALO
    extra_d = max(0, dp_needed - (D + 2 * pd))
    x = jnp.transpose(x_ncdhw, (0, 2, 3, 4, 1))               # NDHWC
    x = jnp.pad(x, ((0, 0), (pd, pd + extra_d), (ph, ph), (pw, pw), (0, 0)))
    Dp = x.shape[1]
    x_flat = x.reshape(N, Dp, Hp, Wp * C_in).astype(compute_dtype)

    w_band = _build_banded_weight(weight_oidhw, W_out, Wp, compute_dtype)
    b_row = jnp.tile(bias.astype(jnp.float32), W_out).reshape(1, W_out * C_out)

    WpC = Wp * C_in
    WC = W_out * C_out
    halo_stride = TD // HALO   # block-index multiplier so halo offset = (dt+1)*TD

    kernel = functools.partial(_dconv_kernel, TD=TD, H_out=H_out, KD=KD, KH=KH)

    out_padded = pl.pallas_call(
        kernel,
        out_shape=jax.ShapeDtypeStruct((N, D_out_pad, H_out, WC), jnp.float32),
        grid_spec=pltpu.PrefetchScalarGridSpec(
            num_scalar_prefetch=0,
            grid=(N, nD),
            in_specs=[
                # main TD padded-input planes of this D tile
                pl.BlockSpec((None, TD, Hp, WpC), lambda n, dt: (n, dt, 0, 0)),
                # D halo: the next KD-1 planes (same array, second BlockSpec)
                pl.BlockSpec((None, HALO, Hp, WpC),
                             lambda n, dt: (n, (dt + 1) * halo_stride, 0, 0)),
                # banded weights + bias: constant block index -> stay resident in VMEM
                pl.BlockSpec((KD * KH, WpC, WC), lambda n, dt: (0, 0, 0)),
                pl.BlockSpec((1, WC), lambda n, dt: (0, 0)),
            ],
            out_specs=pl.BlockSpec((None, TD, H_out, WC),
                                   lambda n, dt: (n, dt, 0, 0)),
        ),
        compiler_params=pltpu.CompilerParams(
            dimension_semantics=("parallel", "parallel"),
            vmem_limit_bytes=32 * 1024 * 1024,
        ),
    )(x_flat, x_flat, w_band, b_row)

    out = out_padded[:, :D_out]                               # drop D tiling pad
    out = out.reshape(N, D_out, H_out, W_out, C_out)
    return jnp.transpose(out, (0, 4, 1, 2, 3))                # back to NCDHW


if __name__ == "__main__":
    # Module config (groups=1)
    in_channels, out_channels = 4, 4
    small_kernel, large_kernel = 3, 5

    key = jax.random.PRNGKey(0)
    kx, kw_, kb = jax.random.split(key, 3)

    N, D, H, W = 2, 8, 8, 8
    x = jax.random.normal(kx, (N, in_channels, D, H, W), dtype=jnp.float32)

    # Deterministic init mimicking nn.Conv3d default (uniform in +-1/sqrt(fan_in)).
    fan_in = in_channels * small_kernel * small_kernel * large_kernel
    bound = 1.0 / math.sqrt(fan_in)
    weight = jax.random.uniform(
        kw_, (out_channels, in_channels, small_kernel, small_kernel, large_kernel),
        minval=-bound, maxval=bound, dtype=jnp.float32)
    bias = jax.random.uniform(
        kb, (out_channels,), minval=-bound, maxval=bound, dtype=jnp.float32)

    out = d_conv_forward(x, weight, bias, small_kernel=small_kernel,
                         large_kernel=large_kernel, tile_d=4)
    out = jax.block_until_ready(out)

    # Reference: XLA conv with the same semantics as torch Conv3d.
    ref = lax.conv_general_dilated(
        x, weight,
        window_strides=(1, 1, 1),
        padding=[((small_kernel - 1) // 2,) * 2,
                 ((small_kernel - 1) // 2,) * 2,
                 ((large_kernel - 1) // 2,) * 2],
        dimension_numbers=("NCDHW", "OIDHW", "NCDHW"),
    ) + bias.reshape(1, -1, 1, 1, 1)

    assert out.shape == ref.shape, (out.shape, ref.shape)
    assert jnp.allclose(out, ref, atol=1e-3, rtol=1e-3), \
        float(jnp.max(jnp.abs(out - ref)))

    print("KERNEL_OK")
</pallas_src>

<mosaic_0001>
module attributes {stable_mosaic.version = 11 : i64} {
  func.func @_dconv_kernel(%arg0: i32, %arg1: i32, %arg2: memref<1x4x10x48xf32, #tpu.memory_space<vmem>>, %arg3: memref<1x2x10x48xf32, #tpu.memory_space<vmem>>, %arg4: memref<9x48x32xf32, #tpu.memory_space<vmem>>, %arg5: memref<1x32xf32, #tpu.memory_space<vmem>>, %arg6: memref<1x4x8x32xf32, #tpu.memory_space<vmem>>) attributes {dimension_semantics = [#tpu.dimension_semantics<parallel>, #tpu.dimension_semantics<parallel>], iteration_bounds = array<i64: 2, 2>, scalar_prefetch = 0 : i64, scratch_operands = 0 : i64, tpu.core_type = #tpu.core_type<tc>, window_params = [{transform_indices = @transform_0, window_bounds = array<i64: 1, 4, 10, 48>}, {transform_indices = @transform_1, window_bounds = array<i64: 1, 2, 10, 48>}, {pipeline_mode = #tpu.pipeline_mode<synchronous>, transform_indices = @transform_2, window_bounds = array<i64: 9, 48, 32>}, {pipeline_mode = #tpu.pipeline_mode<synchronous>, transform_indices = @transform_3, window_bounds = array<i64: 1, 32>}, {transform_indices = @transform_4, window_bounds = array<i64: 1, 4, 8, 32>}]} {
    %c0 = arith.constant 0 : index
    %c0_0 = arith.constant 0 : index
    %0 = vector.load %arg5[%c0, %c0_0] : memref<1x32xf32, #tpu.memory_space<vmem>>, vector<1x32xf32>
    %1 = vector.shape_cast %0 : vector<1x32xf32> to vector<1x32xf32>
    %2 = vector.broadcast %1 : vector<1x32xf32> to vector<8x32xf32>
    %c0_1 = arith.constant 0 : index
    %c0_2 = arith.constant 0 : index
    %c0_3 = arith.constant 0 : index
    %c0_4 = arith.constant 0 : index
    %3 = vector.load %arg6[%c0_1, %c0_2, %c0_3, %c0_4] : memref<1x4x8x32xf32, #tpu.memory_space<vmem>>, vector<1x1x8x32xf32>
    %4 = vector.shape_cast %3 : vector<1x1x8x32xf32> to vector<8x32xf32>
    %5 = vector.shape_cast %2 : vector<8x32xf32> to vector<1x1x8x32xf32>
    tpu.vector_store %arg6[%c0_1, %c0_2, %c0_3, %c0_4], %5 {strides = array<i32>} : memref<1x4x8x32xf32, #tpu.memory_space<vmem>>, vector<1x1x8x32xf32>,
    %c0_5 = arith.constant 0 : index
    %c0_6 = arith.constant 0 : index
    %c0_7 = arith.constant 0 : index
    %c0_8 = arith.constant 0 : index
    %6 = vector.load %arg2[%c0_5, %c0_6, %c0_7, %c0_8] : memref<1x4x10x48xf32, #tpu.memory_space<vmem>>, vector<1x1x8x48xf32>
    %7 = vector.shape_cast %6 : vector<1x1x8x48xf32> to vector<8x48xf32>
    %c0_9 = arith.constant 0 : index
    %c0_10 = arith.constant 0 : index
    %c0_11 = arith.constant 0 : index
    %c0_12 = arith.constant 0 : index
    %8 = vector.load %arg6[%c0_9, %c0_10, %c0_11, %c0_12] : memref<1x4x8x32xf32, #tpu.memory_space<vmem>>, vector<1x1x8x32xf32>
    %9 = vector.shape_cast %8 : vector<1x1x8x32xf32> to vector<8x32xf32>
    %c0_13 = arith.constant 0 : index
    %c0_14 = arith.constant 0 : index
    %c0_15 = arith.constant 0 : index
    %10 = vector.load %arg4[%c0_13, %c0_14, %c0_15] : memref<9x48x32xf32, #tpu.memory_space<vmem>>, vector<1x48x32xf32>
    %11 = vector.shape_cast %10 : vector<1x48x32xf32> to vector<48x32xf32>
    %cst = arith.constant dense<0.000000e+00> : vector<8x32xf32>
    %12 = tpu.matmul %7, %11, %cst {dimension_numbers = #tpu.dot_dimension_numbers<[1], [0], [0], [1], [0, 0, 1, 1], [], []>} : vector<8x48xf32>, vector<48x32xf32>, vector<8x32xf32> -> vector<8x32xf32>
    %13 = arith.addf %9, %12 : vector<8x32xf32>
    %c0_16 = arith.constant 0 : index
    %c0_17 = arith.constant 0 : index
    %c0_18 = arith.constant 0 : index
    %c0_19 = arith.constant 0 : index
    %14 = vector.load %arg6[%c0_16, %c0_17, %c0_18, %c0_19] : memref<1x4x8x32xf32, #tpu.memory_space<vmem>>, vector<1x1x8x32xf32>
    %15 = vector.shape_cast %14 : vector<1x1x8x32xf32> to vector<8x32xf32>
    %16 = vector.shape_cast %13 : vector<8x32xf32> to vector<1x1x8x32xf32>
    tpu.vector_store %arg6[%c0_16, %c0_17, %c0_18, %c0_19], %16 {strides = array<i32>} : memref<1x4x8x32xf32, #tpu.memory_space<vmem>>, vector<1x1x8x32xf32>,
    %c0_20 = arith.constant 0 : index
    %c0_21 = arith.constant 0 : index
    %c1 = arith.constant 1 : index
    %c0_22 = arith.constant 0 : index
    %17 = vector.load %arg2[%c0_20, %c0_21, %c1, %c0_22] : memref<1x4x10x48xf32, #tpu.memory_space<vmem>>, vector<1x1x8x48xf32>
    %18 = vector.shape_cast %17 : vector<1x1x8x48xf32> to vector<8x48xf32>
    %c0_23 = arith.constant 0 : index
    %c0_24 = arith.constant 0 : index
    %c0_25 = arith.constant 0 : index
    %c0_26 = arith.constant 0 : index
    %19 = vector.load %arg6[%c0_23, %c0_24, %c0_25, %c0_26] : memref<1x4x8x32xf32, #tpu.memory_space<vmem>>, vector<1x1x8x32xf32>
    %20 = vector.shape_cast %19 : vector<1x1x8x32xf32> to vector<8x32xf32>
    %c1_27 = arith.constant 1 : index
    %c0_28 = arith.constant 0 : index
    %c0_29 = arith.constant 0 : index
    %21 = vector.load %arg4[%c1_27, %c0_28, %c0_29] : memref<9x48x32xf32, #tpu.memory_space<vmem>>, vector<1x48x32xf32>
    %22 = vector.shape_cast %21 : vector<1x48x32xf32> to vector<48x32xf32>
    %cst_30 = arith.constant dense<0.000000e+00> : vector<8x32xf32>
    %23 = tpu.matmul %18, %22, %cst_30 {dimension_numbers = #tpu.dot_dimension_numbers<[1], [0], [0], [1], [0, 0, 1, 1], [], []>} : vector<8x48xf32>, vector<48x32xf32>, vector<8x32xf32> -> vector<8x32xf32>
    %24 = arith.addf %20, %23 : vector<8x32xf32>
    %c0_31 = arith.constant 0 : index
    %c0_32 = arith.constant 0 : index
    %c0_33 = arith.constant 0 : index
    %c0_34 = arith.constant 0 : index
    %25 = vector.load %arg6[%c0_31, %c0_32, %c0_33, %c0_34] : memref<1x4x8x32xf32, #tpu.memory_space<vmem>>, vector<1x1x8x32xf32>
    %26 = vector.shape_cast %25 : vector<1x1x8x32xf32> to vector<8x32xf32>
    %27 = vector.shape_cast %24 : vector<8x32xf32> to vector<1x1x8x32xf32>
    tpu.vector_store %arg6[%c0_31, %c0_32, %c0_33, %c0_34], %27 {strides = array<i32>} : memref<1x4x8x32xf32, #tpu.memory_space<vmem>>, vector<1x1x8x32xf32>,
    %c0_35 = arith.constant 0 : index
    %c0_36 = arith.constant 0 : index
    %c2 = arith.constant 2 : index
    %c0_37 = arith.constant 0 : index
    %28 = vector.load %arg2[%c0_35, %c0_36, %c2, %c0_37] : memref<1x4x10x48xf32, #tpu.memory_space<vmem>>, vector<1x1x8x48xf32>
    %29 = vector.shape_cast %28 : vector<1x1x8x48xf32> to vector<8x48xf32>
    %c0_38 = arith.constant 0 : index
    %c0_39 = arith.constant 0 : index
    %c0_40 = arith.constant 0 : index
    %c0_41 = arith.constant 0 : index
    %30 = vector.load %arg6[%c0_38, %c0_39, %c0_40, %c0_41] : memref<1x4x8x32xf32, #tpu.memory_space<vmem>>, vector<1x1x8x32xf32>
    %31 = vector.shape_cast %30 : vector<1x1x8x32xf32> to vector<8x32xf32>
    %c2_42 = arith.constant 2 : index
    %c0_43 = arith.constant 0 : index
    %c0_44 = arith.constant 0 : index
    %32 = vector.load %arg4[%c2_42, %c0_43, %c0_44] : memref<9x48x32xf32, #tpu.memory_space<vmem>>, vector<1x48x32xf32>
    %33 = vector.shape_cast %32 : vector<1x48x32xf32> to vector<48x32xf32>
    %cst_45 = arith.constant dense<0.000000e+00> : vector<8x32xf32>
    %34 = tpu.matmul %29, %33, %cst_45 {dimension_numbers = #tpu.dot_dimension_numbers<[1], [0], [0], [1], [0, 0, 1, 1], [], []>} : vector<8x48xf32>, vector<48x32xf32>, vector<8x32xf32> -> vector<8x32xf32>
    %35 = arith.addf %31, %34 : vector<8x32xf32>
    %c0_46 = arith.constant 0 : index
    %c0_47 = arith.constant 0 : index
    %c0_48 = arith.constant 0 : index
    %c0_49 = arith.constant 0 : index
    %36 = vector.load %arg6[%c0_46, %c0_47, %c0_48, %c0_49] : memref<1x4x8x32xf32, #tpu.memory_space<vmem>>, vector<1x1x8x32xf32>
    %37 = vector.shape_cast %36 : vector<1x1x8x32xf32> to vector<8x32xf32>
    %38 = vector.shape_cast %35 : vector<8x32xf32> to vector<1x1x8x32xf32>
    tpu.vector_store %arg6[%c0_46, %c0_47, %c0_48, %c0_49], %38 {strides = array<i32>} : memref<1x4x8x32xf32, #tpu.memory_space<vmem>>, vector<1x1x8x32xf32>,
    %c0_50 = arith.constant 0 : index
    %c1_51 = arith.constant 1 : index
    %c0_52 = arith.constant 0 : index
    %c0_53 = arith.constant 0 : index
    %39 = vector.load %arg2[%c0_50, %c1_51, %c0_52, %c0_53] : memref<1x4x10x48xf32, #tpu.memory_space<vmem>>, vector<1x1x8x48xf32>
    %40 = vector.shape_cast %39 : vector<1x1x8x48xf32> to vector<8x48xf32>
    %c0_54 = arith.constant 0 : index
    %c0_55 = arith.constant 0 : index
    %c0_56 = arith.constant 0 : index
    %c0_57 = arith.constant 0 : index
    %41 = vector.load %arg6[%c0_54, %c0_55, %c0_56, %c0_57] : memref<1x4x8x32xf32, #tpu.memory_space<vmem>>, vector<1x1x8x32xf32>
    %42 = vector.shape_cast %41 : vector<1x1x8x32xf32> to vector<8x32xf32>
    %c3 = arith.constant 3 : index
    %c0_58 = arith.constant 0 : index
    %c0_59 = arith.constant 0 : index
    %43 = vector.load %arg4[%c3, %c0_58, %c0_59] : memref<9x48x32xf32, #tpu.memory_space<vmem>>, vector<1x48x32xf32>
    %44 = vector.shape_cast %43 : vector<1x48x32xf32> to vector<48x32xf32>
    %cst_60 = arith.constant dense<0.000000e+00> : vector<8x32xf32>
    %45 = tpu.matmul %40, %44, %cst_60 {dimension_numbers = #tpu.dot_dimension_numbers<[1], [0], [0], [1], [0, 0, 1, 1], [], []>} : vector<8x48xf32>, vector<48x32xf32>, vector<8x32xf32> -> vector<8x32xf32>
    %46 = arith.addf %42, %45 : vector<8x32xf32>
    %c0_61 = arith.constant 0 : index
    %c0_62 = arith.constant 0 : index
    %c0_63 = arith.constant 0 : index
    %c0_64 = arith.constant 0 : index
    %47 = vector.load %arg6[%c0_61, %c0_62, %c0_63, %c0_64] : memref<1x4x8x32xf32, #tpu.memory_space<vmem>>, vector<1x1x8x32xf32>
    %48 = vector.shape_cast %47 : vector<1x1x8x32xf32> to vector<8x32xf32>
    %49 = vector.shape_cast %46 : vector<8x32xf32> to vector<1x1x8x32xf32>
    tpu.vector_store %arg6[%c0_61, %c0_62, %c0_63, %c0_64], %49 {strides = array<i32>} : memref<1x4x8x32xf32, #tpu.memory_space<vmem>>, vector<1x1x8x32xf32>,
    %c0_65 = arith.constant 0 : index
    %c1_66 = arith.constant 1 : index
    %c1_67 = arith.constant 1 : index
    %c0_68 = arith.constant 0 : index
    %50 = vector.load %arg2[%c0_65, %c1_66, %c1_67, %c0_68] : memref<1x4x10x48xf32, #tpu.memory_space<vmem>>, vector<1x1x8x48xf32>
    %51 = vector.shape_cast %50 : vector<1x1x8x48xf32> to vector<8x48xf32>
    %c0_69 = arith.constant 0 : index
    %c0_70 = arith.constant 0 : index
    %c0_71 = arith.constant 0 : index
    %c0_72 = arith.constant 0 : index
    %52 = vector.load %arg6[%c0_69, %c0_70, %c0_71, %c0_72] : memref<1x4x8x32xf32, #tpu.memory_space<vmem>>, vector<1x1x8x32xf32>
    %53 = vector.shape_cast %52 : vector<1x1x8x32xf32> to vector<8x32xf32>
    %c4 = arith.constant 4 : index
    %c0_73 = arith.constant 0 : index
    %c0_74 = arith.constant 0 : index
    %54 = vector.load %arg4[%c4, %c0_73, %c0_74] : memref<9x48x32xf32, #tpu.memory_space<vmem>>, vector<1x48x32xf32>
    %55 = vector.shape_cast %54 : vector<1x48x32xf32> to vector<48x32xf32>
    %cst_75 = arith.constant dense<0.000000e+00> : vector<8x32xf32>
    %56 = tpu.matmul %51, %55, %cst_75 {dimension_numbers = #tpu.dot_dimension_numbers<[1], [0], [0], [1], [0, 0, 1, 1], [], []>} : vector<8x48xf32>, vector<48x32xf32>, vector<8x32xf32> -> vector<8x32xf32>
    %57 = arith.addf %53, %56 : vector<8x32xf32>
    %c0_76 = arith.constant 0 : index
    %c0_77 = arith.constant 0 : index
    %c0_78 = arith.constant 0 : index
    %c0_79 = arith.constant 0 : index
    %58 = vector.load %arg6[%c0_76, %c0_77, %c0_78, %c0_79] : memref<1x4x8x32xf32, #tpu.memory_space<vmem>>, vector<1x1x8x32xf32>
    %59 = vector.shape_cast %58 : vector<1x1x8x32xf32> to vector<8x32xf32>
    %60 = vector.shape_cast %57 : vector<8x32xf32> to vector<1x1x8x32xf32>
    tpu.vector_store %arg6[%c0_76, %c0_77, %c0_78, %c0_79], %60 {strides = array<i32>} : memref<1x4x8x32xf32, #tpu.memory_space<vmem>>, vector<1x1x8x32xf32>,
    %c0_80 = arith.constant 0 : index
    %c1_81 = arith.constant 1 : index
    %c2_82 = arith.constant 2 : index
    %c0_83 = arith.constant 0 : index
    %61 = vector.load %arg2[%c0_80, %c1_81, %c2_82, %c0_83] : memref<1x4x10x48xf32, #tpu.memory_space<vmem>>, vector<1x1x8x48xf32>
    %62 = vector.shape_cast %61 : vector<1x1x8x48xf32> to vector<8x48xf32>
    %c0_84 = arith.constant 0 : index
    %c0_85 = arith.constant 0 : index
    %c0_86 = arith.constant 0 : index
    %c0_87 = arith.constant 0 : index
    %63 = vector.load %arg6[%c0_84, %c0_85, %c0_86, %c0_87] : memref<1x4x8x32xf32, #tpu.memory_space<vmem>>, vector<1x1x8x32xf32>
    %64 = vector.shape_cast %63 : vector<1x1x8x32xf32> to vector<8x32xf32>
    %c5 = arith.constant 5 : index
    %c0_88 = arith.constant 0 : index
    %c0_89 = arith.constant 0 : index
    %65 = vector.load %arg4[%c5, %c0_88, %c0_89] : memref<9x48x32xf32, #tpu.memory_space<vmem>>, vector<1x48x32xf32>
    %66 = vector.shape_cast %65 : vector<1x48x32xf32> to vector<48x32xf32>
    %cst_90 = arith.constant dense<0.000000e+00> : vector<8x32xf32>
    %67 = tpu.matmul %62, %66, %cst_90 {dimension_numbers = #tpu.dot_dimension_numbers<[1], [0], [0], [1], [0, 0, 1, 1], [], []>} : vector<8x48xf32>, vector<48x32xf32>, vector<8x32xf32> -> vector<8x32xf32>
    %68 = arith.addf %64, %67 : vector<8x32xf32>
    %c0_91 = arith.constant 0 : index
    %c0_92 = arith.constant 0 : index
    %c0_93 = arith.constant 0 : index
    %c0_94 = arith.constant 0 : index
    %69 = vector.load %arg6[%c0_91, %c0_92, %c0_93, %c0_94] : memref<1x4x8x32xf32, #tpu.memory_space<vmem>>, vector<1x1x8x32xf32>
    %70 = vector.shape_cast %69 : vector<1x1x8x32xf32> to vector<8x32xf32>
    %71 = vector.shape_cast %68 : vector<8x32xf32> to vector<1x1x8x32xf32>
    tpu.vector_store %arg6[%c0_91, %c0_92, %c0_93, %c0_94], %71 {strides = array<i32>} : memref<1x4x8x32xf32, #tpu.memory_space<vmem>>, vector<1x1x8x32xf32>,
    %c0_95 = arith.constant 0 : index
    %c2_96 = arith.constant 2 : index
    %c0_97 = arith.constant 0 : index
    %c0_98 = arith.constant 0 : index
    %72 = vector.load %arg2[%c0_95, %c2_96, %c0_97, %c0_98] : memref<1x4x10x48xf32, #tpu.memory_space<vmem>>, vector<1x1x8x48xf32>
    %73 = vector.shape_cast %72 : vector<1x1x8x48xf32> to vector<8x48xf32>
    %c0_99 = arith.constant 0 : index
    %c0_100 = arith.constant 0 : index
    %c0_101 = arith.constant 0 : index
    %c0_102 = arith.constant 0 : index
    %74 = vector.load %arg6[%c0_99, %c0_100, %c0_101, %c0_102] : memref<1x4x8x32xf32, #tpu.memory_space<vmem>>, vector<1x1x8x32xf32>
    %75 = vector.shape_cast %74 : vector<1x1x8x32xf32> to vector<8x32xf32>
    %c6 = arith.constant 6 : index
    %c0_103 = arith.constant 0 : index
    %c0_104 = arith.constant 0 : index
    %76 = vector.load %arg4[%c6, %c0_103, %c0_104] : memref<9x48x32xf32, #tpu.memory_space<vmem>>, vector<1x48x32xf32>
    %77 = vector.shape_cast %76 : vector<1x48x32xf32> to vector<48x32xf32>
    %cst_105 = arith.constant dense<0.000000e+00> : vector<8x32xf32>
    %78 = tpu.matmul %73, %77, %cst_105 {dimension_numbers = #tpu.dot_dimension_numbers<[1], [0], [0], [1], [0, 0, 1, 1], [], []>} : vector<8x48xf32>, vector<48x32xf32>, vector<8x32xf32> -> vector<8x32xf32>
    %79 = arith.addf %75, %78 : vector<8x32xf32>
    %c0_106 = arith.constant 0 : index
    %c0_107 = arith.constant 0 : index
    %c0_108 = arith.constant 0 : index
    %c0_109 = arith.constant 0 : index
    %80 = vector.load %arg6[%c0_106, %c0_107, %c0_108, %c0_109] : memref<1x4x8x32xf32, #tpu.memory_space<vmem>>, vector<1x1x8x32xf32>
    %81 = vector.shape_cast %80 : vector<1x1x8x32xf32> to vector<8x32xf32>
    %82 = vector.shape_cast %79 : vector<8x32xf32> to vector<1x1x8x32xf32>
    tpu.vector_store %arg6[%c0_106, %c0_107, %c0_108, %c0_109], %82 {strides = array<i32>} : memref<1x4x8x32xf32, #tpu.memory_space<vmem>>, vector<1x1x8x32xf32>,
    %c0_110 = arith.constant 0 : index
    %c2_111 = arith.constant 2 : index
    %c1_112 = arith.constant 1 : index
    %c0_113 = arith.constant 0 : index
    %83 = vector.load %arg2[%c0_110, %c2_111, %c1_112, %c0_113] : memref<1x4x10x48xf32, #tpu.memory_space<vmem>>, vector<1x1x8x48xf32>
    %84 = vector.shape_cast %83 : vector<1x1x8x48xf32> to vector<8x48xf32>
    %c0_114 = arith.constant 0 : index
    %c0_115 = arith.constant 0 : index
    %c0_116 = arith.constant 0 : index
    %c0_117 = arith.constant 0 : index
    %85 = vector.load %arg6[%c0_114, %c0_115, %c0_116, %c0_117] : memref<1x4x8x32xf32, #tpu.memory_space<vmem>>, vector<1x1x8x32xf32>
    %86 = vector.shape_cast %85 : vector<1x1x8x32xf32> to vector<8x32xf32>
    %c7 = arith.constant 7 : index
    %c0_118 = arith.constant 0 : index
    %c0_119 = arith.constant 0 : index
    %87 = vector.load %arg4[%c7, %c0_118, %c0_119] : memref<9x48x32xf32, #tpu.memory_space<vmem>>, vector<1x48x32xf32>
    %88 = vector.shape_cast %87 : vector<1x48x32xf32> to vector<48x32xf32>
    %cst_120 = arith.constant dense<0.000000e+00> : vector<8x32xf32>
    %89 = tpu.matmul %84, %88, %cst_120 {dimension_numbers = #tpu.dot_dimension_numbers<[1], [0], [0], [1], [0, 0, 1, 1], [], []>} : vector<8x48xf32>, vector<48x32xf32>, vector<8x32xf32> -> vector<8x32xf32>
    %90 = arith.addf %86, %89 : vector<8x32xf32>
    %c0_121 = arith.constant 0 : index
    %c0_122 = arith.constant 0 : index
    %c0_123 = arith.constant 0 : index
    %c0_124 = arith.constant 0 : index
    %91 = vector.load %arg6[%c0_121, %c0_122, %c0_123, %c0_124] : memref<1x4x8x32xf32, #tpu.memory_space<vmem>>, vector<1x1x8x32xf32>
    %92 = vector.shape_cast %91 : vector<1x1x8x32xf32> to vector<8x32xf32>
    %93 = vector.shape_cast %90 : vector<8x32xf32> to vector<1x1x8x32xf32>
    tpu.vector_store %arg6[%c0_121, %c0_122, %c0_123, %c0_124], %93 {strides = array<i32>} : memref<1x4x8x32xf32, #tpu.memory_space<vmem>>, vector<1x1x8x32xf32>,
    %c0_125 = arith.constant 0 : index
    %c2_126 = arith.constant 2 : index
    %c2_127 = arith.constant 2 : index
    %c0_128 = arith.constant 0 : index
    %94 = vector.load %arg2[%c0_125, %c2_126, %c2_127, %c0_128] : memref<1x4x10x48xf32, #tpu.memory_space<vmem>>, vector<1x1x8x48xf32>
    %95 = vector.shape_cast %94 : vector<1x1x8x48xf32> to vector<8x48xf32>
    %c0_129 = arith.constant 0 : index
    %c0_130 = arith.constant 0 : index
    %c0_131 = arith.constant 0 : index
    %c0_132 = arith.constant 0 : index
    %96 = vector.load %arg6[%c0_129, %c0_130, %c0_131, %c0_132] : memref<1x4x8x32xf32, #tpu.memory_space<vmem>>, vector<1x1x8x32xf32>
    %97 = vector.shape_cast %96 : vector<1x1x8x32xf32> to vector<8x32xf32>
    %c8 = arith.constant 8 : index
    %c0_133 = arith.constant 0 : index
    %c0_134 = arith.constant 0 : index
    %98 = vector.load %arg4[%c8, %c0_133, %c0_134] : memref<9x48x32xf32, #tpu.memory_space<vmem>>, vector<1x48x32xf32>
    %99 = vector.shape_cast %98 : vector<1x48x32xf32> to vector<48x32xf32>
    %cst_135 = arith.constant dense<0.000000e+00> : vector<8x32xf32>
    %100 = tpu.matmul %95, %99, %cst_135 {dimension_numbers = #tpu.dot_dimension_numbers<[1], [0], [0], [1], [0, 0, 1, 1], [], []>} : vector<8x48xf32>, vector<48x32xf32>, vector<8x32xf32> -> vector<8x32xf32>
    %101 = arith.addf %97, %100 : vector<8x32xf32>
    %c0_136 = arith.constant 0 : index
    %c0_137 = arith.constant 0 : index
    %c0_138 = arith.constant 0 : index
    %c0_139 = arith.constant 0 : index
    %102 = vector.load %arg6[%c0_136, %c0_137, %c0_138, %c0_139] : memref<1x4x8x32xf32, #tpu.memory_space<vmem>>, vector<1x1x8x32xf32>
    %103 = vector.shape_cast %102 : vector<1x1x8x32xf32> to vector<8x32xf32>
    %104 = vector.shape_cast %101 : vector<8x32xf32> to vector<1x1x8x32xf32>
    tpu.vector_store %arg6[%c0_136, %c0_137, %c0_138, %c0_139], %104 {strides = array<i32>} : memref<1x4x8x32xf32, #tpu.memory_space<vmem>>, vector<1x1x8x32xf32>,
    %c0_140 = arith.constant 0 : index
    %c1_141 = arith.constant 1 : index
    %c0_142 = arith.constant 0 : index
    %c0_143 = arith.constant 0 : index
    %105 = vector.load %arg6[%c0_140, %c1_141, %c0_142, %c0_143] : memref<1x4x8x32xf32, #tpu.memory_space<vmem>>, vector<1x1x8x32xf32>
    %106 = vector.shape_cast %105 : vector<1x1x8x32xf32> to vector<8x32xf32>
    %107 = vector.shape_cast %2 : vector<8x32xf32> to vector<1x1x8x32xf32>
    tpu.vector_store %arg6[%c0_140, %c1_141, %c0_142, %c0_143], %107 {strides = array<i32>} : memref<1x4x8x32xf32, #tpu.memory_space<vmem>>, vector<1x1x8x32xf32>,
    %c0_144 = arith.constant 0 : index
    %c1_145 = arith.constant 1 : index
    %c0_146 = arith.constant 0 : index
    %c0_147 = arith.constant 0 : index
    %108 = vector.load %arg2[%c0_144, %c1_145, %c0_146, %c0_147] : memref<1x4x10x48xf32, #tpu.memory_space<vmem>>, vector<1x1x8x48xf32>
    %109 = vector.shape_cast %108 : vector<1x1x8x48xf32> to vector<8x48xf32>
    %c0_148 = arith.constant 0 : index
    %c1_149 = arith.constant 1 : index
    %c0_150 = arith.constant 0 : index
    %c0_151 = arith.constant 0 : index
    %110 = vector.load %arg6[%c0_148, %c1_149, %c0_150, %c0_151] : memref<1x4x8x32xf32, #tpu.memory_space<vmem>>, vector<1x1x8x32xf32>
    %111 = vector.shape_cast %110 : vector<1x1x8x32xf32> to vector<8x32xf32>
    %c0_152 = arith.constant 0 : index
    %c0_153 = arith.constant 0 : index
    %c0_154 = arith.constant 0 : index
    %112 = vector.load %arg4[%c0_152, %c0_153, %c0_154] : memref<9x48x32xf32, #tpu.memory_space<vmem>>, vector<1x48x32xf32>
    %113 = vector.shape_cast %112 : vector<1x48x32xf32> to vector<48x32xf32>
    %cst_155 = arith.constant dense<0.000000e+00> : vector<8x32xf32>
    %114 = tpu.matmul %109, %113, %cst_155 {dimension_numbers = #tpu.dot_dimension_numbers<[1], [0], [0], [1], [0, 0, 1, 1], [], []>} : vector<8x48xf32>, vector<48x32xf32>, vector<8x32xf32> -> vector<8x32xf32>
    %115 = arith.addf %111, %114 : vector<8x32xf32>
    %c0_156 = arith.constant 0 : index
    %c1_157 = arith.constant 1 : index
    %c0_158 = arith.constant 0 : index
    %c0_159 = arith.constant 0 : index
    %116 = vector.load %arg6[%c0_156, %c1_157, %c0_158, %c0_159] : memref<1x4x8x32xf32, #tpu.memory_space<vmem>>, vector<1x1x8x32xf32>
    %117 = vector.shape_cast %116 : vector<1x1x8x32xf32> to vector<8x32xf32>
    %118 = vector.shape_cast %115 : vector<8x32xf32> to vector<1x1x8x32xf32>
    tpu.vector_store %arg6[%c0_156, %c1_157, %c0_158, %c0_159], %118 {strides = array<i32>} : memref<1x4x8x32xf32, #tpu.memory_space<vmem>>, vector<1x1x8x32xf32>,
    %c0_160 = arith.constant 0 : index
    %c1_161 = arith.constant 1 : index
    %c1_162 = arith.constant 1 : index
    %c0_163 = arith.constant 0 : index
    %119 = vector.load %arg2[%c0_160, %c1_161, %c1_162, %c0_163] : memref<1x4x10x48xf32, #tpu.memory_space<vmem>>, vector<1x1x8x48xf32>
    %120 = vector.shape_cast %119 : vector<1x1x8x48xf32> to vector<8x48xf32>
    %c0_164 = arith.constant 0 : index
    %c1_165 = arith.constant 1 : index
    %c0_166 = arith.constant 0 : index
    %c0_167 = arith.constant 0 : index
    %121 = vector.load %arg6[%c0_164, %c1_165, %c0_166, %c0_167] : memref<1x4x8x32xf32, #tpu.memory_space<vmem>>, vector<1x1x8x32xf32>
    %122 = vector.shape_cast %121 : vector<1x1x8x32xf32> to vector<8x32xf32>
    %c1_168 = arith.constant 1 : index
    %c0_169 = arith.constant 0 : index
    %c0_170 = arith.constant 0 : index
    %123 = vector.load %arg4[%c1_168, %c0_169, %c0_170] : memref<9x48x32xf32, #tpu.memory_space<vmem>>, vector<1x48x32xf32>
    %124 = vector.shape_cast %123 : vector<1x48x32xf32> to vector<48x32xf32>
    %cst_171 = arith.constant dense<0.000000e+00> : vector<8x32xf32>
    %125 = tpu.matmul %120, %124, %cst_171 {dimension_numbers = #tpu.dot_dimension_numbers<[1], [0], [0], [1], [0, 0, 1, 1], [], []>} : vector<8x48xf32>, vector<48x32xf32>, vector<8x32xf32> -> vector<8x32xf32>
    %126 = arith.addf %122, %125 : vector<8x32xf32>
    %c0_172 = arith.constant 0 : index
    %c1_173 = arith.constant 1 : index
    %c0_174 = arith.constant 0 : index
    %c0_175 = arith.constant 0 : index
    %127 = vector.load %arg6[%c0_172, %c1_173, %c0_174, %c0_175] : memref<1x4x8x32xf32, #tpu.memory_space<vmem>>, vector<1x1x8x32xf32>
    %128 = vector.shape_cast %127 : vector<1x1x8x32xf32> to vector<8x32xf32>
    %129 = vector.shape_cast %126 : vector<8x32xf32> to vector<1x1x8x32xf32>
    tpu.vector_store %arg6[%c0_172, %c1_173, %c0_174, %c0_175], %129 {strides = array<i32>} : memref<1x4x8x32xf32, #tpu.memory_space<vmem>>, vector<1x1x8x32xf32>,
    %c0_176 = arith.constant 0 : index
    %c1_177 = arith.constant 1 : index
    %c2_178 = arith.constant 2 : index
    %c0_179 = arith.constant 0 : index
    %130 = vector.load %arg2[%c0_176, %c1_177, %c2_178, %c0_179] : memref<1x4x10x48xf32, #tpu.memory_space<vmem>>, vector<1x1x8x48xf32>
    %131 = vector.shape_cast %130 : vector<1x1x8x48xf32> to vector<8x48xf32>
    %c0_180 = arith.constant 0 : index
    %c1_181 = arith.constant 1 : index
    %c0_182 = arith.constant 0 : index
    %c0_183 = arith.constant 0 : index
    %132 = vector.load %arg6[%c0_180, %c1_181, %c0_182, %c0_183] : memref<1x4x8x32xf32, #tpu.memory_space<vmem>>, vector<1x1x8x32xf32>
    %133 = vector.shape_cast %132 : vector<1x1x8x32xf32> to vector<8x32xf32>
    %c2_184 = arith.constant 2 : index
    %c0_185 = arith.constant 0 : index
    %c0_186 = arith.constant 0 : index
    %134 = vector.load %arg4[%c2_184, %c0_185, %c0_186] : memref<9x48x32xf32, #tpu.memory_space<vmem>>, vector<1x48x32xf32>
    %135 = vector.shape_cast %134 : vector<1x48x32xf32> to vector<48x32xf32>
    %cst_187 = arith.constant dense<0.000000e+00> : vector<8x32xf32>
    %136 = tpu.matmul %131, %135, %cst_187 {dimension_numbers = #tpu.dot_dimension_numbers<[1], [0], [0], [1], [0, 0, 1, 1], [], []>} : vector<8x48xf32>, vector<48x32xf32>, vector<8x32xf32> -> vector<8x32xf32>
    %137 = arith.addf %133, %136 : vector<8x32xf32>
    %c0_188 = arith.constant 0 : index
    %c1_189 = arith.constant 1 : index
    %c0_190 = arith.constant 0 : index
    %c0_191 = arith.constant 0 : index
    %138 = vector.load %arg6[%c0_188, %c1_189, %c0_190, %c0_191] : memref<1x4x8x32xf32, #tpu.memory_space<vmem>>, vector<1x1x8x32xf32>
    %139 = vector.shape_cast %138 : vector<1x1x8x32xf32> to vector<8x32xf32>
    %140 = vector.shape_cast %137 : vector<8x32xf32> to vector<1x1x8x32xf32>
    tpu.vector_store %arg6[%c0_188, %c1_189, %c0_190, %c0_191], %140 {strides = array<i32>} : memref<1x4x8x32xf32, #tpu.memory_space<vmem>>, vector<1x1x8x32xf32>,
    %c0_192 = arith.constant 0 : index
    %c2_193 = arith.constant 2 : index
    %c0_194 = arith.constant 0 : index
    %c0_195 = arith.constant 0 : index
    %141 = vector.load %arg2[%c0_192, %c2_193, %c0_194, %c0_195] : memref<1x4x10x48xf32, #tpu.memory_space<vmem>>, vector<1x1x8x48xf32>
    %142 = vector.shape_cast %141 : vector<1x1x8x48xf32> to vector<8x48xf32>
    %c0_196 = arith.constant 0 : index
    %c1_197 = arith.constant 1 : index
    %c0_198 = arith.constant 0 : index
    %c0_199 = arith.constant 0 : index
    %143 = vector.load %arg6[%c0_196, %c1_197, %c0_198, %c0_199] : memref<1x4x8x32xf32, #tpu.memory_space<vmem>>, vector<1x1x8x32xf32>
    %144 = vector.shape_cast %143 : vector<1x1x8x32xf32> to vector<8x32xf32>
    %c3_200 = arith.constant 3 : index
    %c0_201 = arith.constant 0 : index
    %c0_202 = arith.constant 0 : index
    %145 = vector.load %arg4[%c3_200, %c0_201, %c0_202] : memref<9x48x32xf32, #tpu.memory_space<vmem>>, vector<1x48x32xf32>
    %146 = vector.shape_cast %145 : vector<1x48x32xf32> to vector<48x32xf32>
    %cst_203 = arith.constant dense<0.000000e+00> : vector<8x32xf32>
    %147 = tpu.matmul %142, %146, %cst_203 {dimension_numbers = #tpu.dot_dimension_numbers<[1], [0], [0], [1], [0, 0, 1, 1], [], []>} : vector<8x48xf32>, vector<48x32xf32>, vector<8x32xf32> -> vector<8x32xf32>
    %148 = arith.addf %144, %147 : vector<8x32xf32>
    %c0_204 = arith.constant 0 : index
    %c1_205 = arith.constant 1 : index
    %c0_206 = arith.constant 0 : index
    %c0_207 = arith.constant 0 : index
    %149 = vector.load %arg6[%c0_204, %c1_205, %c0_206, %c0_207] : memref<1x4x8x32xf32, #tpu.memory_space<vmem>>, vector<1x1x8x32xf32>
    %150 = vector.shape_cast %149 : vector<1x1x8x32xf32> to vector<8x32xf32>
    %151 = vector.shape_cast %148 : vector<8x32xf32> to vector<1x1x8x32xf32>
    tpu.vector_store %arg6[%c0_204, %c1_205, %c0_206, %c0_207], %151 {strides = array<i32>} : memref<1x4x8x32xf32, #tpu.memory_space<vmem>>, vector<1x1x8x32xf32>,
    %c0_208 = arith.constant 0 : index
    %c2_209 = arith.constant 2 : index
    %c1_210 = arith.constant 1 : index
    %c0_211 = arith.constant 0 : index
    %152 = vector.load %arg2[%c0_208, %c2_209, %c1_210, %c0_211] : memref<1x4x10x48xf32, #tpu.memory_space<vmem>>, vector<1x1x8x48xf32>
    %153 = vector.shape_cast %152 : vector<1x1x8x48xf32> to vector<8x48xf32>
    %c0_212 = arith.constant 0 : index
    %c1_213 = arith.constant 1 : index
    %c0_214 = arith.constant 0 : index
    %c0_215 = arith.constant 0 : index
    %154 = vector.load %arg6[%c0_212, %c1_213, %c0_214, %c0_215] : memref<1x4x8x32xf32, #tpu.memory_space<vmem>>, vector<1x1x8x32xf32>
    %155 = vector.shape_cast %154 : vector<1x1x8x32xf32> to vector<8x32xf32>
    %c4_216 = arith.constant 4 : index
    %c0_217 = arith.constant 0 : index
    %c0_218 = arith.constant 0 : index
    %156 = vector.load %arg4[%c4_216, %c0_217, %c0_218] : memref<9x48x32xf32, #tpu.memory_space<vmem>>, vector<1x48x32xf32>
    %157 = vector.shape_cast %156 : vector<1x48x32xf32> to vector<48x32xf32>
    %cst_219 = arith.constant dense<0.000000e+00> : vector<8x32xf32>
    %158 = tpu.matmul %153, %157, %cst_219 {dimension_numbers = #tpu.dot_dimension_numbers<[1], [0], [0], [1], [0, 0, 1, 1], [], []>} : vector<8x48xf32>, vector<48x32xf32>, vector<8x32xf32> -> vector<8x32xf32>
    %159 = arith.addf %155, %158 : vector<8x32xf32>
    %c0_220 = arith.constant 0 : index
    %c1_221 = arith.constant 1 : index
    %c0_222 = arith.constant 0 : index
    %c0_223 = arith.constant 0 : index
    %160 = vector.load %arg6[%c0_220, %c1_221, %c0_222, %c0_223] : memref<1x4x8x32xf32, #tpu.memory_space<vmem>>, vector<1x1x8x32xf32>
    %161 = vector.shape_cast %160 : vector<1x1x8x32xf32> to vector<8x32xf32>
    %162 = vector.shape_cast %159 : vector<8x32xf32> to vector<1x1x8x32xf32>
    tpu.vector_store %arg6[%c0_220, %c1_221, %c0_222, %c0_223], %162 {strides = array<i32>} : memref<1x4x8x32xf32, #tpu.memory_space<vmem>>, vector<1x1x8x32xf32>,
    %c0_224 = arith.constant 0 : index
    %c2_225 = arith.constant 2 : index
    %c2_226 = arith.constant 2 : index
    %c0_227 = arith.constant 0 : index
    %163 = vector.load %arg2[%c0_224, %c2_225, %c2_226, %c0_227] : memref<1x4x10x48xf32, #tpu.memory_space<vmem>>, vector<1x1x8x48xf32>
    %164 = vector.shape_cast %163 : vector<1x1x8x48xf32> to vector<8x48xf32>
    %c0_228 = arith.constant 0 : index
    %c1_229 = arith.constant 1 : index
    %c0_230 = arith.constant 0 : index
    %c0_231 = arith.constant 0 : index
    %165 = vector.load %arg6[%c0_228, %c1_229, %c0_230, %c0_231] : memref<1x4x8x32xf32, #tpu.memory_space<vmem>>, vector<1x1x8x32xf32>
    %166 = vector.shape_cast %165 : vector<1x1x8x32xf32> to vector<8x32xf32>
    %c5_232 = arith.constant 5 : index
    %c0_233 = arith.constant 0 : index
    %c0_234 = arith.constant 0 : index
    %167 = vector.load %arg4[%c5_232, %c0_233, %c0_234] : memref<9x48x32xf32, #tpu.memory_space<vmem>>, vector<1x48x32xf32>
    %168 = vector.shape_cast %167 : vector<1x48x32xf32> to vector<48x32xf32>
    %cst_235 = arith.constant dense<0.000000e+00> : vector<8x32xf32>
    %169 = tpu.matmul %164, %168, %cst_235 {dimension_numbers = #tpu.dot_dimension_numbers<[1], [0], [0], [1], [0, 0, 1, 1], [], []>} : vector<8x48xf32>, vector<48x32xf32>, vector<8x32xf32> -> vector<8x32xf32>
    %170 = arith.addf %166, %169 : vector<8x32xf32>
    %c0_236 = arith.constant 0 : index
    %c1_237 = arith.constant 1 : index
    %c0_238 = arith.constant 0 : index
    %c0_239 = arith.constant 0 : index
    %171 = vector.load %arg6[%c0_236, %c1_237, %c0_238, %c0_239] : memref<1x4x8x32xf32, #tpu.memory_space<vmem>>, vector<1x1x8x32xf32>
    %172 = vector.shape_cast %171 : vector<1x1x8x32xf32> to vector<8x32xf32>
    %173 = vector.shape_cast %170 : vector<8x32xf32> to vector<1x1x8x32xf32>
    tpu.vector_store %arg6[%c0_236, %c1_237, %c0_238, %c0_239], %173 {strides = array<i32>} : memref<1x4x8x32xf32, #tpu.memory_space<vmem>>, vector<1x1x8x32xf32>,
    %c0_240 = arith.constant 0 : index
    %c3_241 = arith.constant 3 : index
    %c0_242 = arith.constant 0 : index
    %c0_243 = arith.constant 0 : index
    %174 = vector.load %arg2[%c0_240, %c3_241, %c0_242, %c0_243] : memref<1x4x10x48xf32, #tpu.memory_space<vmem>>, vector<1x1x8x48xf32>
    %175 = vector.shape_cast %174 : vector<1x1x8x48xf32> to vector<8x48xf32>
    %c0_244 = arith.constant 0 : index
    %c1_245 = arith.constant 1 : index
    %c0_246 = arith.constant 0 : index
    %c0_247 = arith.constant 0 : index
    %176 = vector.load %arg6[%c0_244, %c1_245, %c0_246, %c0_247] : memref<1x4x8x32xf32, #tpu.memory_space<vmem>>, vector<1x1x8x32xf32>
    %177 = vector.shape_cast %176 : vector<1x1x8x32xf32> to vector<8x32xf32>
    %c6_248 = arith.constant 6 : index
    %c0_249 = arith.constant 0 : index
    %c0_250 = arith.constant 0 : index
    %178 = vector.load %arg4[%c6_248, %c0_249, %c0_250] : memref<9x48x32xf32, #tpu.memory_space<vmem>>, vector<1x48x32xf32>
    %179 = vector.shape_cast %178 : vector<1x48x32xf32> to vector<48x32xf32>
    %cst_251 = arith.constant dense<0.000000e+00> : vector<8x32xf32>
    %180 = tpu.matmul %175, %179, %cst_251 {dimension_numbers = #tpu.dot_dimension_numbers<[1], [0], [0], [1], [0, 0, 1, 1], [], []>} : vector<8x48xf32>, vector<48x32xf32>, vector<8x32xf32> -> vector<8x32xf32>
    %181 = arith.addf %177, %180 : vector<8x32xf32>
    %c0_252 = arith.constant 0 : index
    %c1_253 = arith.constant 1 : index
    %c0_254 = arith.constant 0 : index
    %c0_255 = arith.constant 0 : index
    %182 = vector.load %arg6[%c0_252, %c1_253, %c0_254, %c0_255] : memref<1x4x8x32xf32, #tpu.memory_space<vmem>>, vector<1x1x8x32xf32>
    %183 = vector.shape_cast %182 : vector<1x1x8x32xf32> to vector<8x32xf32>
    %184 = vector.shape_cast %181 : vector<8x32xf32> to vector<1x1x8x32xf32>
    tpu.vector_store %arg6[%c0_252, %c1_253, %c0_254, %c0_255], %184 {strides = array<i32>} : memref<1x4x8x32xf32, #tpu.memory_space<vmem>>, vector<1x1x8x32xf32>,
    %c0_256 = arith.constant 0 : index
    %c3_257 = arith.constant 3 : index
    %c1_258 = arith.constant 1 : index
    %c0_259 = arith.constant 0 : index
    %185 = vector.load %arg2[%c0_256, %c3_257, %c1_258, %c0_259] : memref<1x4x10x48xf32, #tpu.memory_space<vmem>>, vector<1x1x8x48xf32>
    %186 = vector.shape_cast %185 : vector<1x1x8x48xf32> to vector<8x48xf32>
    %c0_260 = arith.constant 0 : index
    %c1_261 = arith.constant 1 : index
    %c0_262 = arith.constant 0 : index
    %c0_263 = arith.constant 0 : index
    %187 = vector.load %arg6[%c0_260, %c1_261, %c0_262, %c0_263] : memref<1x4x8x32xf32, #tpu.memory_space<vmem>>, vector<1x1x8x32xf32>
    %188 = vector.shape_cast %187 : vector<1x1x8x32xf32> to vector<8x32xf32>
    %c7_264 = arith.constant 7 : index
    %c0_265 = arith.constant 0 : index
    %c0_266 = arith.constant 0 : index
    %189 = vector.load %arg4[%c7_264, %c0_265, %c0_266] : memref<9x48x32xf32, #tpu.memory_space<vmem>>, vector<1x48x32xf32>
    %190 = vector.shape_cast %189 : vector<1x48x32xf32> to vector<48x32xf32>
    %cst_267 = arith.constant dense<0.000000e+00> : vector<8x32xf32>
    %191 = tpu.matmul %186, %190, %cst_267 {dimension_numbers = #tpu.dot_dimension_numbers<[1], [0], [0], [1], [0, 0, 1, 1], [], []>} : vector<8x48xf32>, vector<48x32xf32>, vector<8x32xf32> -> vector<8x32xf32>
    %192 = arith.addf %188, %191 : vector<8x32xf32>
    %c0_268 = arith.constant 0 : index
    %c1_269 = arith.constant 1 : index
    %c0_270 = arith.constant 0 : index
    %c0_271 = arith.constant 0 : index
    %193 = vector.load %arg6[%c0_268, %c1_269, %c0_270, %c0_271] : memref<1x4x8x32xf32, #tpu.memory_space<vmem>>, vector<1x1x8x32xf32>
    %194 = vector.shape_cast %193 : vector<1x1x8x32xf32> to vector<8x32xf32>
    %195 = vector.shape_cast %192 : vector<8x32xf32> to vector<1x1x8x32xf32>
    tpu.vector_store %arg6[%c0_268, %c1_269, %c0_270, %c0_271], %195 {strides = array<i32>} : memref<1x4x8x32xf32, #tpu.memory_space<vmem>>, vector<1x1x8x32xf32>,
    %c0_272 = arith.constant 0 : index
    %c3_273 = arith.constant 3 : index
    %c2_274 = arith.constant 2 : index
    %c0_275 = arith.constant 0 : index
    %196 = vector.load %arg2[%c0_272, %c3_273, %c2_274, %c0_275] : memref<1x4x10x48xf32, #tpu.memory_space<vmem>>, vector<1x1x8x48xf32>
    %197 = vector.shape_cast %196 : vector<1x1x8x48xf32> to vector<8x48xf32>
    %c0_276 = arith.constant 0 : index
    %c1_277 = arith.constant 1 : index
    %c0_278 = arith.constant 0 : index
    %c0_279 = arith.constant 0 : index
    %198 = vector.load %arg6[%c0_276, %c1_277, %c0_278, %c0_279] : memref<1x4x8x32xf32, #tpu.memory_space<vmem>>, vector<1x1x8x32xf32>
    %199 = vector.shape_cast %198 : vector<1x1x8x32xf32> to vector<8x32xf32>
    %c8_280 = arith.constant 8 : index
    %c0_281 = arith.constant 0 : index
    %c0_282 = arith.constant 0 : index
    %200 = vector.load %arg4[%c8_280, %c0_281, %c0_282] : memref<9x48x32xf32, #tpu.memory_space<vmem>>, vector<1x48x32xf32>
    %201 = vector.shape_cast %200 : vector<1x48x32xf32> to vector<48x32xf32>
    %cst_283 = arith.constant dense<0.000000e+00> : vector<8x32xf32>
    %202 = tpu.matmul %197, %201, %cst_283 {dimension_numbers = #tpu.dot_dimension_numbers<[1], [0], [0], [1], [0, 0, 1, 1], [], []>} : vector<8x48xf32>, vector<48x32xf32>, vector<8x32xf32> -> vector<8x32xf32>
    %203 = arith.addf %199, %202 : vector<8x32xf32>
    %c0_284 = arith.constant 0 : index
    %c1_285 = arith.constant 1 : index
    %c0_286 = arith.constant 0 : index
    %c0_287 = arith.constant 0 : index
    %204 = vector.load %arg6[%c0_284, %c1_285, %c0_286, %c0_287] : memref<1x4x8x32xf32, #tpu.memory_space<vmem>>, vector<1x1x8x32xf32>
    %205 = vector.shape_cast %204 : vector<1x1x8x32xf32> to vector<8x32xf32>
    %206 = vector.shape_cast %203 : vector<8x32xf32> to vector<1x1x8x32xf32>
    tpu.vector_store %arg6[%c0_284, %c1_285, %c0_286, %c0_287], %206 {strides = array<i32>} : memref<1x4x8x32xf32, #tpu.memory_space<vmem>>, vector<1x1x8x32xf32>,
    %c0_288 = arith.constant 0 : index
    %c2_289 = arith.constant 2 : index
    %c0_290 = arith.constant 0 : index
    %c0_291 = arith.constant 0 : index
    %207 = vector.load %arg6[%c0_288, %c2_289, %c0_290, %c0_291] : memref<1x4x8x32xf32, #tpu.memory_space<vmem>>, vector<1x1x8x32xf32>
    %208 = vector.shape_cast %207 : vector<1x1x8x32xf32> to vector<8x32xf32>
    %209 = vector.shape_cast %2 : vector<8x32xf32> to vector<1x1x8x32xf32>
    tpu.vector_store %arg6[%c0_288, %c2_289, %c0_290, %c0_291], %209 {strides = array<i32>} : memref<1x4x8x32xf32, #tpu.memory_space<vmem>>, vector<1x1x8x32xf32>,
    %c0_292 = arith.constant 0 : index
    %c2_293 = arith.constant 2 : index
    %c0_294 = arith.constant 0 : index
    %c0_295 = arith.constant 0 : index
    %210 = vector.load %arg2[%c0_292, %c2_293, %c0_294, %c0_295] : memref<1x4x10x48xf32, #tpu.memory_space<vmem>>, vector<1x1x8x48xf32>
    %211 = vector.shape_cast %210 : vector<1x1x8x48xf32> to vector<8x48xf32>
    %c0_296 = arith.constant 0 : index
    %c2_297 = arith.constant 2 : index
    %c0_298 = arith.constant 0 : index
    %c0_299 = arith.constant 0 : index
    %212 = vector.load %arg6[%c0_296, %c2_297, %c0_298, %c0_299] : memref<1x4x8x32xf32, #tpu.memory_space<vmem>>, vector<1x1x8x32xf32>
    %213 = vector.shape_cast %212 : vector<1x1x8x32xf32> to vector<8x32xf32>
    %c0_300 = arith.constant 0 : index
    %c0_301 = arith.constant 0 : index
    %c0_302 = arith.constant 0 : index
    %214 = vector.load %arg4[%c0_300, %c0_301, %c0_302] : memref<9x48x32xf32, #tpu.memory_space<vmem>>, vector<1x48x32xf32>
    %215 = vector.shape_cast %214 : vector<1x48x32xf32> to vector<48x32xf32>
    %cst_303 = arith.constant dense<0.000000e+00> : vector<8x32xf32>
    %216 = tpu.matmul %211, %215, %cst_303 {dimension_numbers = #tpu.dot_dimension_numbers<[1], [0], [0], [1], [0, 0, 1, 1], [], []>} : vector<8x48xf32>, vector<48x32xf32>, vector<8x32xf32> -> vector<8x32xf32>
    %217 = arith.addf %213, %216 : vector<8x32xf32>
    %c0_304 = arith.constant 0 : index
    %c2_305 = arith.constant 2 : index
    %c0_306 = arith.constant 0 : index
    %c0_307 = arith.constant 0 : index
    %218 = vector.load %arg6[%c0_304, %c2_305, %c0_306, %c0_307] : memref<1x4x8x32xf32, #tpu.memory_space<vmem>>, vector<1x1x8x32xf32>
    %219 = vector.shape_cast %218 : vector<1x1x8x32xf32> to vector<8x32xf32>
    %220 = vector.shape_cast %217 : vector<8x32xf32> to vector<1x1x8x32xf32>
    tpu.vector_store %arg6[%c0_304, %c2_305, %c0_306, %c0_307], %220 {strides = array<i32>} : memref<1x4x8x32xf32, #tpu.memory_space<vmem>>, vector<1x1x8x32xf32>,
    %c0_308 = arith.constant 0 : index
    %c2_309 = arith.constant 2 : index
    %c1_310 = arith.constant 1 : index
    %c0_311 = arith.constant 0 : index
    %221 = vector.load %arg2[%c0_308, %c2_309, %c1_310, %c0_311] : memref<1x4x10x48xf32, #tpu.memory_space<vmem>>, vector<1x1x8x48xf32>
    %222 = vector.shape_cast %221 : vector<1x1x8x48xf32> to vector<8x48xf32>
    %c0_312 = arith.constant 0 : index
    %c2_313 = arith.constant 2 : index
    %c0_314 = arith.constant 0 : index
    %c0_315 = arith.constant 0 : index
    %223 = vector.load %arg6[%c0_312, %c2_313, %c0_314, %c0_315] : memref<1x4x8x32xf32, #tpu.memory_space<vmem>>, vector<1x1x8x32xf32>
    %224 = vector.shape_cast %223 : vector<1x1x8x32xf32> to vector<8x32xf32>
    %c1_316 = arith.constant 1 : index
    %c0_317 = arith.constant 0 : index
    %c0_318 = arith.constant 0 : index
    %225 = vector.load %arg4[%c1_316, %c0_317, %c0_318] : memref<9x48x32xf32, #tpu.memory_space<vmem>>, vector<1x48x32xf32>
    %226 = vector.shape_cast %225 : vector<1x48x32xf32> to vector<48x32xf32>
    %cst_319 = arith.constant dense<0.000000e+00> : vector<8x32xf32>
    %227 = tpu.matmul %222, %226, %cst_319 {dimension_numbers = #tpu.dot_dimension_numbers<[1], [0], [0], [1], [0, 0, 1, 1], [], []>} : vector<8x48xf32>, vector<48x32xf32>, vector<8x32xf32> -> vector<8x32xf32>
    %228 = arith.addf %224, %227 : vector<8x32xf32>
    %c0_320 = arith.constant 0 : index
    %c2_321 = arith.constant 2 : index
    %c0_322 = arith.constant 0 : index
    %c0_323 = arith.constant 0 : index
    %229 = vector.load %arg6[%c0_320, %c2_321, %c0_322, %c0_323] : memref<1x4x8x32xf32, #tpu.memory_space<vmem>>, vector<1x1x8x32xf32>
    %230 = vector.shape_cast %229 : vector<1x1x8x32xf32> to vector<8x32xf32>
    %231 = vector.shape_cast %228 : vector<8x32xf32> to vector<1x1x8x32xf32>
    tpu.vector_store %arg6[%c0_320, %c2_321, %c0_322, %c0_323], %231 {strides = array<i32>} : memref<1x4x8x32xf32, #tpu.memory_space<vmem>>, vector<1x1x8x32xf32>,
    %c0_324 = arith.constant 0 : index
    %c2_325 = arith.constant 2 : index
    %c2_326 = arith.constant 2 : index
    %c0_327 = arith.constant 0 : index
    %232 = vector.load %arg2[%c0_324, %c2_325, %c2_326, %c0_327] : memref<1x4x10x48xf32, #tpu.memory_space<vmem>>, vector<1x1x8x48xf32>
    %233 = vector.shape_cast %232 : vector<1x1x8x48xf32> to vector<8x48xf32>
    %c0_328 = arith.constant 0 : index
    %c2_329 = arith.constant 2 : index
    %c0_330 = arith.constant 0 : index
    %c0_331 = arith.constant 0 : index
    %234 = vector.load %arg6[%c0_328, %c2_329, %c0_330, %c0_331] : memref<1x4x8x32xf32, #tpu.memory_space<vmem>>, vector<1x1x8x32xf32>
    %235 = vector.shape_cast %234 : vector<1x1x8x32xf32> to vector<8x32xf32>
    %c2_332 = arith.constant 2 : index
    %c0_333 = arith.constant 0 : index
    %c0_334 = arith.constant 0 : index
    %236 = vector.load %arg4[%c2_332, %c0_333, %c0_334] : memref<9x48x32xf32, #tpu.memory_space<vmem>>, vector<1x48x32xf32>
    %237 = vector.shape_cast %236 : vector<1x48x32xf32> to vector<48x32xf32>
    %cst_335 = arith.constant dense<0.000000e+00> : vector<8x32xf32>
    %238 = tpu.matmul %233, %237, %cst_335 {dimension_numbers = #tpu.dot_dimension_numbers<[1], [0], [0], [1], [0, 0, 1, 1], [], []>} : vector<8x48xf32>, vector<48x32xf32>, vector<8x32xf32> -> vector<8x32xf32>
    %239 = arith.addf %235, %238 : vector<8x32xf32>
    %c0_336 = arith.constant 0 : index
    %c2_337 = arith.constant 2 : index
    %c0_338 = arith.constant 0 : index
    %c0_339 = arith.constant 0 : index
    %240 = vector.load %arg6[%c0_336, %c2_337, %c0_338, %c0_339] : memref<1x4x8x32xf32, #tpu.memory_space<vmem>>, vector<1x1x8x32xf32>
    %241 = vector.shape_cast %240 : vector<1x1x8x32xf32> to vector<8x32xf32>
    %242 = vector.shape_cast %239 : vector<8x32xf32> to vector<1x1x8x32xf32>
    tpu.vector_store %arg6[%c0_336, %c2_337, %c0_338, %c0_339], %242 {strides = array<i32>} : memref<1x4x8x32xf32, #tpu.memory_space<vmem>>, vector<1x1x8x32xf32>,
    %c0_340 = arith.constant 0 : index
    %c3_341 = arith.constant 3 : index
    %c0_342 = arith.constant 0 : index
    %c0_343 = arith.constant 0 : index
    %243 = vector.load %arg2[%c0_340, %c3_341, %c0_342, %c0_343] : memref<1x4x10x48xf32, #tpu.memory_space<vmem>>, vector<1x1x8x48xf32>
    %244 = vector.shape_cast %243 : vector<1x1x8x48xf32> to vector<8x48xf32>
    %c0_344 = arith.constant 0 : index
    %c2_345 = arith.constant 2 : index
    %c0_346 = arith.constant 0 : index
    %c0_347 = arith.constant 0 : index
    %245 = vector.load %arg6[%c0_344, %c2_345, %c0_346, %c0_347] : memref<1x4x8x32xf32, #tpu.memory_space<vmem>>, vector<1x1x8x32xf32>
    %246 = vector.shape_cast %245 : vector<1x1x8x32xf32> to vector<8x32xf32>
    %c3_348 = arith.constant 3 : index
    %c0_349 = arith.constant 0 : index
    %c0_350 = arith.constant 0 : index
    %247 = vector.load %arg4[%c3_348, %c0_349, %c0_350] : memref<9x48x32xf32, #tpu.memory_space<vmem>>, vector<1x48x32xf32>
    %248 = vector.shape_cast %247 : vector<1x48x32xf32> to vector<48x32xf32>
    %cst_351 = arith.constant dense<0.000000e+00> : vector<8x32xf32>
    %249 = tpu.matmul %244, %248, %cst_351 {dimension_numbers = #tpu.dot_dimension_numbers<[1], [0], [0], [1], [0, 0, 1, 1], [], []>} : vector<8x48xf32>, vector<48x32xf32>, vector<8x32xf32> -> vector<8x32xf32>
    %250 = arith.addf %246, %249 : vector<8x32xf32>
    %c0_352 = arith.constant 0 : index
    %c2_353 = arith.constant 2 : index
    %c0_354 = arith.constant 0 : index
    %c0_355 = arith.constant 0 : index
    %251 = vector.load %arg6[%c0_352, %c2_353, %c0_354, %c0_355] : memref<1x4x8x32xf32, #tpu.memory_space<vmem>>, vector<1x1x8x32xf32>
    %252 = vector.shape_cast %251 : vector<1x1x8x32xf32> to vector<8x32xf32>
    %253 = vector.shape_cast %250 : vector<8x32xf32> to vector<1x1x8x32xf32>
    tpu.vector_store %arg6[%c0_352, %c2_353, %c0_354, %c0_355], %253 {strides = array<i32>} : memref<1x4x8x32xf32, #tpu.memory_space<vmem>>, vector<1x1x8x32xf32>,
    %c0_356 = arith.constant 0 : index
    %c3_357 = arith.constant 3 : index
    %c1_358 = arith.constant 1 : index
    %c0_359 = arith.constant 0 : index
    %254 = vector.load %arg2[%c0_356, %c3_357, %c1_358, %c0_359] : memref<1x4x10x48xf32, #tpu.memory_space<vmem>>, vector<1x1x8x48xf32>
    %255 = vector.shape_cast %254 : vector<1x1x8x48xf32> to vector<8x48xf32>
    %c0_360 = arith.constant 0 : index
    %c2_361 = arith.constant 2 : index
    %c0_362 = arith.constant 0 : index
    %c0_363 = arith.constant 0 : index
    %256 = vector.load %arg6[%c0_360, %c2_361, %c0_362, %c0_363] : memref<1x4x8x32xf32, #tpu.memory_space<vmem>>, vector<1x1x8x32xf32>
    %257 = vector.shape_cast %256 : vector<1x1x8x32xf32> to vector<8x32xf32>
    %c4_364 = arith.constant 4 : index
    %c0_365 = arith.constant 0 : index
    %c0_366 = arith.constant 0 : index
    %258 = vector.load %arg4[%c4_364, %c0_365, %c0_366] : memref<9x48x32xf32, #tpu.memory_space<vmem>>, vector<1x48x32xf32>
    %259 = vector.shape_cast %258 : vector<1x48x32xf32> to vector<48x32xf32>
    %cst_367 = arith.constant dense<0.000000e+00> : vector<8x32xf32>
    %260 = tpu.matmul %255, %259, %cst_367 {dimension_numbers = #tpu.dot_dimension_numbers<[1], [0], [0], [1], [0, 0, 1, 1], [], []>} : vector<8x48xf32>, vector<48x32xf32>, vector<8x32xf32> -> vector<8x32xf32>
    %261 = arith.addf %257, %260 : vector<8x32xf32>
    %c0_368 = arith.constant 0 : index
    %c2_369 = arith.constant 2 : index
    %c0_370 = arith.constant 0 : index
    %c0_371 = arith.constant 0 : index
    %262 = vector.load %arg6[%c0_368, %c2_369, %c0_370, %c0_371] : memref<1x4x8x32xf32, #tpu.memory_space<vmem>>, vector<1x1x8x32xf32>
    %263 = vector.shape_cast %262 : vector<1x1x8x32xf32> to vector<8x32xf32>
    %264 = vector.shape_cast %261 : vector<8x32xf32> to vector<1x1x8x32xf32>
    tpu.vector_store %arg6[%c0_368, %c2_369, %c0_370, %c0_371], %264 {strides = array<i32>} : memref<1x4x8x32xf32, #tpu.memory_space<vmem>>, vector<1x1x8x32xf32>,
    %c0_372 = arith.constant 0 : index
    %c3_373 = arith.constant 3 : index
    %c2_374 = arith.constant 2 : index
    %c0_375 = arith.constant 0 : index
    %265 = vector.load %arg2[%c0_372, %c3_373, %c2_374, %c0_375] : memref<1x4x10x48xf32, #tpu.memory_space<vmem>>, vector<1x1x8x48xf32>
    %266 = vector.shape_cast %265 : vector<1x1x8x48xf32> to vector<8x48xf32>
    %c0_376 = arith.constant 0 : index
    %c2_377 = arith.constant 2 : index
    %c0_378 = arith.constant 0 : index
    %c0_379 = arith.constant 0 : index
    %267 = vector.load %arg6[%c0_376, %c2_377, %c0_378, %c0_379] : memref<1x4x8x32xf32, #tpu.memory_space<vmem>>, vector<1x1x8x32xf32>
    %268 = vector.shape_cast %267 : vector<1x1x8x32xf32> to vector<8x32xf32>
    %c5_380 = arith.constant 5 : index
    %c0_381 = arith.constant 0 : index
    %c0_382 = arith.constant 0 : index
    %269 = vector.load %arg4[%c5_380, %c0_381, %c0_382] : memref<9x48x32xf32, #tpu.memory_space<vmem>>, vector<1x48x32xf32>
    %270 = vector.shape_cast %269 : vector<1x48x32xf32> to vector<48x32xf32>
    %cst_383 = arith.constant dense<0.000000e+00> : vector<8x32xf32>
    %271 = tpu.matmul %266, %270, %cst_383 {dimension_numbers = #tpu.dot_dimension_numbers<[1], [0], [0], [1], [0, 0, 1, 1], [], []>} : vector<8x48xf32>, vector<48x32xf32>, vector<8x32xf32> -> vector<8x32xf32>
    %272 = arith.addf %268, %271 : vector<8x32xf32>
    %c0_384 = arith.constant 0 : index
    %c2_385 = arith.constant 2 : index
    %c0_386 = arith.constant 0 : index
    %c0_387 = arith.constant 0 : index
    %273 = vector.load %arg6[%c0_384, %c2_385, %c0_386, %c0_387] : memref<1x4x8x32xf32, #tpu.memory_space<vmem>>, vector<1x1x8x32xf32>
    %274 = vector.shape_cast %273 : vector<1x1x8x32xf32> to vector<8x32xf32>
    %275 = vector.shape_cast %272 : vector<8x32xf32> to vector<1x1x8x32xf32>
    tpu.vector_store %arg6[%c0_384, %c2_385, %c0_386, %c0_387], %275 {strides = array<i32>} : memref<1x4x8x32xf32, #tpu.memory_space<vmem>>, vector<1x1x8x32xf32>,
    %c0_388 = arith.constant 0 : index
    %c0_389 = arith.constant 0 : index
    %c0_390 = arith.constant 0 : index
    %c0_391 = arith.constant 0 : index
    %276 = vector.load %arg3[%c0_388, %c0_389, %c0_390, %c0_391] : memref<1x2x10x48xf32, #tpu.memory_space<vmem>>, vector<1x1x8x48xf32>
    %277 = vector.shape_cast %276 : vector<1x1x8x48xf32> to vector<8x48xf32>
    %c0_392 = arith.constant 0 : index
    %c2_393 = arith.constant 2 : index
    %c0_394 = arith.constant 0 : index
    %c0_395 = arith.constant 0 : index
    %278 = vector.load %arg6[%c0_392, %c2_393, %c0_394, %c0_395] : memref<1x4x8x32xf32, #tpu.memory_space<vmem>>, vector<1x1x8x32xf32>
    %279 = vector.shape_cast %278 : vector<1x1x8x32xf32> to vector<8x32xf32>
    %c6_396 = arith.constant 6 : index
    %c0_397 = arith.constant 0 : index
    %c0_398 = arith.constant 0 : index
    %280 = vector.load %arg4[%c6_396, %c0_397, %c0_398] : memref<9x48x32xf32, #tpu.memory_space<vmem>>, vector<1x48x32xf32>
    %281 = vector.shape_cast %280 : vector<1x48x32xf32> to vector<48x32xf32>
    %cst_399 = arith.constant dense<0.000000e+00> : vector<8x32xf32>
    %282 = tpu.matmul %277, %281, %cst_399 {dimension_numbers = #tpu.dot_dimension_numbers<[1], [0], [0], [1], [0, 0, 1, 1], [], []>} : vector<8x48xf32>, vector<48x32xf32>, vector<8x32xf32> -> vector<8x32xf32>
    %283 = arith.addf %279, %282 : vector<8x32xf32>
    %c0_400 = arith.constant 0 : index
    %c2_401 = arith.constant 2 : index
    %c0_402 = arith.constant 0 : index
    %c0_403 = arith.constant 0 : index
    %284 = vector.load %arg6[%c0_400, %c2_401, %c0_402, %c0_403] : memref<1x4x8x32xf32, #tpu.memory_space<vmem>>, vector<1x1x8x32xf32>
    %285 = vector.shape_cast %284 : vector<1x1x8x32xf32> to vector<8x32xf32>
    %286 = vector.shape_cast %283 : vector<8x32xf32> to vector<1x1x8x32xf32>
    tpu.vector_store %arg6[%c0_400, %c2_401, %c0_402, %c0_403], %286 {strides = array<i32>} : memref<1x4x8x32xf32, #tpu.memory_space<vmem>>, vector<1x1x8x32xf32>,
    %c0_404 = arith.constant 0 : index
    %c0_405 = arith.constant 0 : index
    %c1_406 = arith.constant 1 : index
    %c0_407 = arith.constant 0 : index
    %287 = vector.load %arg3[%c0_404, %c0_405, %c1_406, %c0_407] : memref<1x2x10x48xf32, #tpu.memory_space<vmem>>, vector<1x1x8x48xf32>
    %288 = vector.shape_cast %287 : vector<1x1x8x48xf32> to vector<8x48xf32>
    %c0_408 = arith.constant 0 : index
    %c2_409 = arith.constant 2 : index
    %c0_410 = arith.constant 0 : index
    %c0_411 = arith.constant 0 : index
    %289 = vector.load %arg6[%c0_408, %c2_409, %c0_410, %c0_411] : memref<1x4x8x32xf32, #tpu.memory_space<vmem>>, vector<1x1x8x32xf32>
    %290 = vector.shape_cast %289 : vector<1x1x8x32xf32> to vector<8x32xf32>
    %c7_412 = arith.constant 7 : index
    %c0_413 = arith.constant 0 : index
    %c0_414 = arith.constant 0 : index
    %291 = vector.load %arg4[%c7_412, %c0_413, %c0_414] : memref<9x48x32xf32, #tpu.memory_space<vmem>>, vector<1x48x32xf32>
    %292 = vector.shape_cast %291 : vector<1x48x32xf32> to vector<48x32xf32>
    %cst_415 = arith.constant dense<0.000000e+00> : vector<8x32xf32>
    %293 = tpu.matmul %288, %292, %cst_415 {dimension_numbers = #tpu.dot_dimension_numbers<[1], [0], [0], [1], [0, 0, 1, 1], [], []>} : vector<8x48xf32>, vector<48x32xf32>, vector<8x32xf32> -> vector<8x32xf32>
    %294 = arith.addf %290, %293 : vector<8x32xf32>
    %c0_416 = arith.constant 0 : index
    %c2_417 = arith.constant 2 : index
    %c0_418 = arith.constant 0 : index
    %c0_419 = arith.constant 0 : index
    %295 = vector.load %arg6[%c0_416, %c2_417, %c0_418, %c0_419] : memref<1x4x8x32xf32, #tpu.memory_space<vmem>>, vector<1x1x8x32xf32>
    %296 = vector.shape_cast %295 : vector<1x1x8x32xf32> to vector<8x32xf32>
    %297 = vector.shape_cast %294 : vector<8x32xf32> to vector<1x1x8x32xf32>
    tpu.vector_store %arg6[%c0_416, %c2_417, %c0_418, %c0_419], %297 {strides = array<i32>} : memref<1x4x8x32xf32, #tpu.memory_space<vmem>>, vector<1x1x8x32xf32>,
    %c0_420 = arith.constant 0 : index
    %c0_421 = arith.constant 0 : index
    %c2_422 = arith.constant 2 : index
    %c0_423 = arith.constant 0 : index
    %298 = vector.load %arg3[%c0_420, %c0_421, %c2_422, %c0_423] : memref<1x2x10x48xf32, #tpu.memory_space<vmem>>, vector<1x1x8x48xf32>
    %299 = vector.shape_cast %298 : vector<1x1x8x48xf32> to vector<8x48xf32>
    %c0_424 = arith.constant 0 : index
    %c2_425 = arith.constant 2 : index
    %c0_426 = arith.constant 0 : index
    %c0_427 = arith.constant 0 : index
    %300 = vector.load %arg6[%c0_424, %c2_425, %c0_426, %c0_427] : memref<1x4x8x32xf32, #tpu.memory_space<vmem>>, vector<1x1x8x32xf32>
    %301 = vector.shape_cast %300 : vector<1x1x8x32xf32> to vector<8x32xf32>
    %c8_428 = arith.constant 8 : index
    %c0_429 = arith.constant 0 : index
    %c0_430 = arith.constant 0 : index
    %302 = vector.load %arg4[%c8_428, %c0_429, %c0_430] : memref<9x48x32xf32, #tpu.memory_space<vmem>>, vector<1x48x32xf32>
    %303 = vector.shape_cast %302 : vector<1x48x32xf32> to vector<48x32xf32>
    %cst_431 = arith.constant dense<0.000000e+00> : vector<8x32xf32>
    %304 = tpu.matmul %299, %303, %cst_431 {dimension_numbers = #tpu.dot_dimension_numbers<[1], [0], [0], [1], [0, 0, 1, 1], [], []>} : vector<8x48xf32>, vector<48x32xf32>, vector<8x32xf32> -> vector<8x32xf32>
    %305 = arith.addf %301, %304 : vector<8x32xf32>
    %c0_432 = arith.constant 0 : index
    %c2_433 = arith.constant 2 : index
    %c0_434 = arith.constant 0 : index
    %c0_435 = arith.constant 0 : index
    %306 = vector.load %arg6[%c0_432, %c2_433, %c0_434, %c0_435] : memref<1x4x8x32xf32, #tpu.memory_space<vmem>>, vector<1x1x8x32xf32>
    %307 = vector.shape_cast %306 : vector<1x1x8x32xf32> to vector<8x32xf32>
    %308 = vector.shape_cast %305 : vector<8x32xf32> to vector<1x1x8x32xf32>
    tpu.vector_store %arg6[%c0_432, %c2_433, %c0_434, %c0_435], %308 {strides = array<i32>} : memref<1x4x8x32xf32, #tpu.memory_space<vmem>>, vector<1x1x8x32xf32>,
    %c0_436 = arith.constant 0 : index
    %c3_437 = arith.constant 3 : index
    %c0_438 = arith.constant 0 : index
    %c0_439 = arith.constant 0 : index
    %309 = vector.load %arg6[%c0_436, %c3_437, %c0_438, %c0_439] : memref<1x4x8x32xf32, #tpu.memory_space<vmem>>, vector<1x1x8x32xf32>
    %310 = vector.shape_cast %309 : vector<1x1x8x32xf32> to vector<8x32xf32>
    %311 = vector.shape_cast %2 : vector<8x32xf32> to vector<1x1x8x32xf32>
    tpu.vector_store %arg6[%c0_436, %c3_437, %c0_438, %c0_439], %311 {strides = array<i32>} : memref<1x4x8x32xf32, #tpu.memory_space<vmem>>, vector<1x1x8x32xf32>,
    %c0_440 = arith.constant 0 : index
    %c3_441 = arith.constant 3 : index
    %c0_442 = arith.constant 0 : index
    %c0_443 = arith.constant 0 : index
    %312 = vector.load %arg2[%c0_440, %c3_441, %c0_442, %c0_443] : memref<1x4x10x48xf32, #tpu.memory_space<vmem>>, vector<1x1x8x48xf32>
    %313 = vector.shape_cast %312 : vector<1x1x8x48xf32> to vector<8x48xf32>
    %c0_444 = arith.constant 0 : index
    %c3_445 = arith.constant 3 : index
    %c0_446 = arith.constant 0 : index
    %c0_447 = arith.constant 0 : index
    %314 = vector.load %arg6[%c0_444, %c3_445, %c0_446, %c0_447] : memref<1x4x8x32xf32, #tpu.memory_space<vmem>>, vector<1x1x8x32xf32>
    %315 = vector.shape_cast %314 : vector<1x1x8x32xf32> to vector<8x32xf32>
    %c0_448 = arith.constant 0 : index
    %c0_449 = arith.constant 0 : index
    %c0_450 = arith.constant 0 : index
    %316 = vector.load %arg4[%c0_448, %c0_449, %c0_450] : memref<9x48x32xf32, #tpu.memory_space<vmem>>, vector<1x48x32xf32>
    %317 = vector.shape_cast %316 : vector<1x48x32xf32> to vector<48x32xf32>
    %cst_451 = arith.constant dense<0.000000e+00> : vector<8x32xf32>
    %318 = tpu.matmul %313, %317, %cst_451 {dimension_numbers = #tpu.dot_dimension_numbers<[1], [0], [0], [1], [0, 0, 1, 1], [], []>} : vector<8x48xf32>, vector<48x32xf32>, vector<8x32xf32> -> vector<8x32xf32>
    %319 = arith.addf %315, %318 : vector<8x32xf32>
    %c0_452 = arith.constant 0 : index
    %c3_453 = arith.constant 3 : index
    %c0_454 = arith.constant 0 : index
    %c0_455 = arith.constant 0 : index
    %320 = vector.load %arg6[%c0_452, %c3_453, %c0_454, %c0_455] : memref<1x4x8x32xf32, #tpu.memory_space<vmem>>, vector<1x1x8x32xf32>
    %321 = vector.shape_cast %320 : vector<1x1x8x32xf32> to vector<8x32xf32>
    %322 = vector.shape_cast %319 : vector<8x32xf32> to vector<1x1x8x32xf32>
    tpu.vector_store %arg6[%c0_452, %c3_453, %c0_454, %c0_455], %322 {strides = array<i32>} : memref<1x4x8x32xf32, #tpu.memory_space<vmem>>, vector<1x1x8x32xf32>,
    %c0_456 = arith.constant 0 : index
    %c3_457 = arith.constant 3 : index
    %c1_458 = arith.constant 1 : index
    %c0_459 = arith.constant 0 : index
    %323 = vector.load %arg2[%c0_456, %c3_457, %c1_458, %c0_459] : memref<1x4x10x48xf32, #tpu.memory_space<vmem>>, vector<1x1x8x48xf32>
    %324 = vector.shape_cast %323 : vector<1x1x8x48xf32> to vector<8x48xf32>
    %c0_460 = arith.constant 0 : index
    %c3_461 = arith.constant 3 : index
    %c0_462 = arith.constant 0 : index
    %c0_463 = arith.constant 0 : index
    %325 = vector.load %arg6[%c0_460, %c3_461, %c0_462, %c0_463] : memref<1x4x8x32xf32, #tpu.memory_space<vmem>>, vector<1x1x8x32xf32>
    %326 = vector.shape_cast %325 : vector<1x1x8x32xf32> to vector<8x32xf32>
    %c1_464 = arith.constant 1 : index
    %c0_465 = arith.constant 0 : index
    %c0_466 = arith.constant 0 : index
    %327 = vector.load %arg4[%c1_464, %c0_465, %c0_466] : memref<9x48x32xf32, #tpu.memory_space<vmem>>, vector<1x48x32xf32>
    %328 = vector.shape_cast %327 : vector<1x48x32xf32> to vector<48x32xf32>
    %cst_467 = arith.constant dense<0.000000e+00> : vector<8x32xf32>
    %329 = tpu.matmul %324, %328, %cst_467 {dimension_numbers = #tpu.dot_dimension_numbers<[1], [0], [0], [1], [0, 0, 1, 1], [], []>} : vector<8x48xf32>, vector<48x32xf32>, vector<8x32xf32> -> vector<8x32xf32>
    %330 = arith.addf %326, %329 : vector<8x32xf32>
    %c0_468 = arith.constant 0 : index
    %c3_469 = arith.constant 3 : index
    %c0_470 = arith.constant 0 : index
    %c0_471 = arith.constant 0 : index
    %331 = vector.load %arg6[%c0_468, %c3_469, %c0_470, %c0_471] : memref<1x4x8x32xf32, #tpu.memory_space<vmem>>, vector<1x1x8x32xf32>
    %332 = vector.shape_cast %331 : vector<1x1x8x32xf32> to vector<8x32xf32>
    %333 = vector.shape_cast %330 : vector<8x32xf32> to vector<1x1x8x32xf32>
    tpu.vector_store %arg6[%c0_468, %c3_469, %c0_470, %c0_471], %333 {strides = array<i32>} : memref<1x4x8x32xf32, #tpu.memory_space<vmem>>, vector<1x1x8x32xf32>,
    %c0_472 = arith.constant 0 : index
    %c3_473 = arith.constant 3 : index
    %c2_474 = arith.constant 2 : index
    %c0_475 = arith.constant 0 : index
    %334 = vector.load %arg2[%c0_472, %c3_473, %c2_474, %c0_475] : memref<1x4x10x48xf32, #tpu.memory_space<vmem>>, vector<1x1x8x48xf32>
    %335 = vector.shape_cast %334 : vector<1x1x8x48xf32> to vector<8x48xf32>
    %c0_476 = arith.constant 0 : index
    %c3_477 = arith.constant 3 : index
    %c0_478 = arith.constant 0 : index
    %c0_479 = arith.constant 0 : index
    %336 = vector.load %arg6[%c0_476, %c3_477, %c0_478, %c0_479] : memref<1x4x8x32xf32, #tpu.memory_space<vmem>>, vector<1x1x8x32xf32>
    %337 = vector.shape_cast %336 : vector<1x1x8x32xf32> to vector<8x32xf32>
    %c2_480 = arith.constant 2 : index
    %c0_481 = arith.constant 0 : index
    %c0_482 = arith.constant 0 : index
    %338 = vector.load %arg4[%c2_480, %c0_481, %c0_482] : memref<9x48x32xf32, #tpu.memory_space<vmem>>, vector<1x48x32xf32>
    %339 = vector.shape_cast %338 : vector<1x48x32xf32> to vector<48x32xf32>
    %cst_483 = arith.constant dense<0.000000e+00> : vector<8x32xf32>
    %340 = tpu.matmul %335, %339, %cst_483 {dimension_numbers = #tpu.dot_dimension_numbers<[1], [0], [0], [1], [0, 0, 1, 1], [], []>} : vector<8x48xf32>, vector<48x32xf32>, vector<8x32xf32> -> vector<8x32xf32>
    %341 = arith.addf %337, %340 : vector<8x32xf32>
    %c0_484 = arith.constant 0 : index
    %c3_485 = arith.constant 3 : index
    %c0_486 = arith.constant 0 : index
    %c0_487 = arith.constant 0 : index
    %342 = vector.load %arg6[%c0_484, %c3_485, %c0_486, %c0_487] : memref<1x4x8x32xf32, #tpu.memory_space<vmem>>, vector<1x1x8x32xf32>
    %343 = vector.shape_cast %342 : vector<1x1x8x32xf32> to vector<8x32xf32>
    %344 = vector.shape_cast %341 : vector<8x32xf32> to vector<1x1x8x32xf32>
    tpu.vector_store %arg6[%c0_484, %c3_485, %c0_486, %c0_487], %344 {strides = array<i32>} : memref<1x4x8x32xf32, #tpu.memory_space<vmem>>, vector<1x1x8x32xf32>,
    %c0_488 = arith.constant 0 : index
    %c0_489 = arith.constant 0 : index
    %c0_490 = arith.constant 0 : index
    %c0_491 = arith.constant 0 : index
    %345 = vector.load %arg3[%c0_488, %c0_489, %c0_490, %c0_491] : memref<1x2x10x48xf32, #tpu.memory_space<vmem>>, vector<1x1x8x48xf32>
    %346 = vector.shape_cast %345 : vector<1x1x8x48xf32> to vector<8x48xf32>
    %c0_492 = arith.constant 0 : index
    %c3_493 = arith.constant 3 : index
    %c0_494 = arith.constant 0 : index
    %c0_495 = arith.constant 0 : index
    %347 = vector.load %arg6[%c0_492, %c3_493, %c0_494, %c0_495] : memref<1x4x8x32xf32, #tpu.memory_space<vmem>>, vector<1x1x8x32xf32>
    %348 = vector.shape_cast %347 : vector<1x1x8x32xf32> to vector<8x32xf32>
    %c3_496 = arith.constant 3 : index
    %c0_497 = arith.constant 0 : index
    %c0_498 = arith.constant 0 : index
    %349 = vector.load %arg4[%c3_496, %c0_497, %c0_498] : memref<9x48x32xf32, #tpu.memory_space<vmem>>, vector<1x48x32xf32>
    %350 = vector.shape_cast %349 : vector<1x48x32xf32> to vector<48x32xf32>
    %cst_499 = arith.constant dense<0.000000e+00> : vector<8x32xf32>
    %351 = tpu.matmul %346, %350, %cst_499 {dimension_numbers = #tpu.dot_dimension_numbers<[1], [0], [0], [1], [0, 0, 1, 1], [], []>} : vector<8x48xf32>, vector<48x32xf32>, vector<8x32xf32> -> vector<8x32xf32>
    %352 = arith.addf %348, %351 : vector<8x32xf32>
    %c0_500 = arith.constant 0 : index
    %c3_501 = arith.constant 3 : index
    %c0_502 = arith.constant 0 : index
    %c0_503 = arith.constant 0 : index
    %353 = vector.load %arg6[%c0_500, %c3_501, %c0_502, %c0_503] : memref<1x4x8x32xf32, #tpu.memory_space<vmem>>, vector<1x1x8x32xf32>
    %354 = vector.shape_cast %353 : vector<1x1x8x32xf32> to vector<8x32xf32>
    %355 = vector.shape_cast %352 : vector<8x32xf32> to vector<1x1x8x32xf32>
    tpu.vector_store %arg6[%c0_500, %c3_501, %c0_502, %c0_503], %355 {strides = array<i32>} : memref<1x4x8x32xf32, #tpu.memory_space<vmem>>, vector<1x1x8x32xf32>,
    %c0_504 = arith.constant 0 : index
    %c0_505 = arith.constant 0 : index
    %c1_506 = arith.constant 1 : index
    %c0_507 = arith.constant 0 : index
    %356 = vector.load %arg3[%c0_504, %c0_505, %c1_506, %c0_507] : memref<1x2x10x48xf32, #tpu.memory_space<vmem>>, vector<1x1x8x48xf32>
    %357 = vector.shape_cast %356 : vector<1x1x8x48xf32> to vector<8x48xf32>
    %c0_508 = arith.constant 0 : index
    %c3_509 = arith.constant 3 : index
    %c0_510 = arith.constant 0 : index
    %c0_511 = arith.constant 0 : index
    %358 = vector.load %arg6[%c0_508, %c3_509, %c0_510, %c0_511] : memref<1x4x8x32xf32, #tpu.memory_space<vmem>>, vector<1x1x8x32xf32>
    %359 = vector.shape_cast %358 : vector<1x1x8x32xf32> to vector<8x32xf32>
    %c4_512 = arith.constant 4 : index
    %c0_513 = arith.constant 0 : index
    %c0_514 = arith.constant 0 : index
    %360 = vector.load %arg4[%c4_512, %c0_513, %c0_514] : memref<9x48x32xf32, #tpu.memory_space<vmem>>, vector<1x48x32xf32>
    %361 = vector.shape_cast %360 : vector<1x48x32xf32> to vector<48x32xf32>
    %cst_515 = arith.constant dense<0.000000e+00> : vector<8x32xf32>
    %362 = tpu.matmul %357, %361, %cst_515 {dimension_numbers = #tpu.dot_dimension_numbers<[1], [0], [0], [1], [0, 0, 1, 1], [], []>} : vector<8x48xf32>, vector<48x32xf32>, vector<8x32xf32> -> vector<8x32xf32>
    %363 = arith.addf %359, %362 : vector<8x32xf32>
    %c0_516 = arith.constant 0 : index
    %c3_517 = arith.constant 3 : index
    %c0_518 = arith.constant 0 : index
    %c0_519 = arith.constant 0 : index
    %364 = vector.load %arg6[%c0_516, %c3_517, %c0_518, %c0_519] : memref<1x4x8x32xf32, #tpu.memory_space<vmem>>, vector<1x1x8x32xf32>
    %365 = vector.shape_cast %364 : vector<1x1x8x32xf32> to vector<8x32xf32>
    %366 = vector.shape_cast %363 : vector<8x32xf32> to vector<1x1x8x32xf32>
    tpu.vector_store %arg6[%c0_516, %c3_517, %c0_518, %c0_519], %366 {strides = array<i32>} : memref<1x4x8x32xf32, #tpu.memory_space<vmem>>, vector<1x1x8x32xf32>,
    %c0_520 = arith.constant 0 : index
    %c0_521 = arith.constant 0 : index
    %c2_522 = arith.constant 2 : index
    %c0_523 = arith.constant 0 : index
    %367 = vector.load %arg3[%c0_520, %c0_521, %c2_522, %c0_523] : memref<1x2x10x48xf32, #tpu.memory_space<vmem>>, vector<1x1x8x48xf32>
    %368 = vector.shape_cast %367 : vector<1x1x8x48xf32> to vector<8x48xf32>
    %c0_524 = arith.constant 0 : index
    %c3_525 = arith.constant 3 : index
    %c0_526 = arith.constant 0 : index
    %c0_527 = arith.constant 0 : index
    %369 = vector.load %arg6[%c0_524, %c3_525, %c0_526, %c0_527] : memref<1x4x8x32xf32, #tpu.memory_space<vmem>>, vector<1x1x8x32xf32>
    %370 = vector.shape_cast %369 : vector<1x1x8x32xf32> to vector<8x32xf32>
    %c5_528 = arith.constant 5 : index
    %c0_529 = arith.constant 0 : index
    %c0_530 = arith.constant 0 : index
    %371 = vector.load %arg4[%c5_528, %c0_529, %c0_530] : memref<9x48x32xf32, #tpu.memory_space<vmem>>, vector<1x48x32xf32>
    %372 = vector.shape_cast %371 : vector<1x48x32xf32> to vector<48x32xf32>
    %cst_531 = arith.constant dense<0.000000e+00> : vector<8x32xf32>
    %373 = tpu.matmul %368, %372, %cst_531 {dimension_numbers = #tpu.dot_dimension_numbers<[1], [0], [0], [1], [0, 0, 1, 1], [], []>} : vector<8x48xf32>, vector<48x32xf32>, vector<8x32xf32> -> vector<8x32xf32>
    %374 = arith.addf %370, %373 : vector<8x32xf32>
    %c0_532 = arith.constant 0 : index
    %c3_533 = arith.constant 3 : index
    %c0_534 = arith.constant 0 : index
    %c0_535 = arith.constant 0 : index
    %375 = vector.load %arg6[%c0_532, %c3_533, %c0_534, %c0_535] : memref<1x4x8x32xf32, #tpu.memory_space<vmem>>, vector<1x1x8x32xf32>
    %376 = vector.shape_cast %375 : vector<1x1x8x32xf32> to vector<8x32xf32>
    %377 = vector.shape_cast %374 : vector<8x32xf32> to vector<1x1x8x32xf32>
    tpu.vector_store %arg6[%c0_532, %c3_533, %c0_534, %c0_535], %377 {strides = array<i32>} : memref<1x4x8x32xf32, #tpu.memory_space<vmem>>, vector<1x1x8x32xf32>,
    %c0_536 = arith.constant 0 : index
    %c1_537 = arith.constant 1 : index
    %c0_538 = arith.constant 0 : index
    %c0_539 = arith.constant 0 : index
    %378 = vector.load %arg3[%c0_536, %c1_537, %c0_538, %c0_539] : memref<1x2x10x48xf32, #tpu.memory_space<vmem>>, vector<1x1x8x48xf32>
    %379 = vector.shape_cast %378 : vector<1x1x8x48xf32> to vector<8x48xf32>
    %c0_540 = arith.constant 0 : index
    %c3_541 = arith.constant 3 : index
    %c0_542 = arith.constant 0 : index
    %c0_543 = arith.constant 0 : index
    %380 = vector.load %arg6[%c0_540, %c3_541, %c0_542, %c0_543] : memref<1x4x8x32xf32, #tpu.memory_space<vmem>>, vector<1x1x8x32xf32>
    %381 = vector.shape_cast %380 : vector<1x1x8x32xf32> to vector<8x32xf32>
    %c6_544 = arith.constant 6 : index
    %c0_545 = arith.constant 0 : index
    %c0_546 = arith.constant 0 : index
    %382 = vector.load %arg4[%c6_544, %c0_545, %c0_546] : memref<9x48x32xf32, #tpu.memory_space<vmem>>, vector<1x48x32xf32>
    %383 = vector.shape_cast %382 : vector<1x48x32xf32> to vector<48x32xf32>
    %cst_547 = arith.constant dense<0.000000e+00> : vector<8x32xf32>
    %384 = tpu.matmul %379, %383, %cst_547 {dimension_numbers = #tpu.dot_dimension_numbers<[1], [0], [0], [1], [0, 0, 1, 1], [], []>} : vector<8x48xf32>, vector<48x32xf32>, vector<8x32xf32> -> vector<8x32xf32>
    %385 = arith.addf %381, %384 : vector<8x32xf32>
    %c0_548 = arith.constant 0 : index
    %c3_549 = arith.constant 3 : index
    %c0_550 = arith.constant 0 : index
    %c0_551 = arith.constant 0 : index
    %386 = vector.load %arg6[%c0_548, %c3_549, %c0_550, %c0_551] : memref<1x4x8x32xf32, #tpu.memory_space<vmem>>, vector<1x1x8x32xf32>
    %387 = vector.shape_cast %386 : vector<1x1x8x32xf32> to vector<8x32xf32>
    %388 = vector.shape_cast %385 : vector<8x32xf32> to vector<1x1x8x32xf32>
    tpu.vector_store %arg6[%c0_548, %c3_549, %c0_550, %c0_551], %388 {strides = array<i32>} : memref<1x4x8x32xf32, #tpu.memory_space<vmem>>, vector<1x1x8x32xf32>,
    %c0_552 = arith.constant 0 : index
    %c1_553 = arith.constant 1 : index
    %c1_554 = arith.constant 1 : index
    %c0_555 = arith.constant 0 : index
    %389 = vector.load %arg3[%c0_552, %c1_553, %c1_554, %c0_555] : memref<1x2x10x48xf32, #tpu.memory_space<vmem>>, vector<1x1x8x48xf32>
    %390 = vector.shape_cast %389 : vector<1x1x8x48xf32> to vector<8x48xf32>
    %c0_556 = arith.constant 0 : index
    %c3_557 = arith.constant 3 : index
    %c0_558 = arith.constant 0 : index
    %c0_559 = arith.constant 0 : index
    %391 = vector.load %arg6[%c0_556, %c3_557, %c0_558, %c0_559] : memref<1x4x8x32xf32, #tpu.memory_space<vmem>>, vector<1x1x8x32xf32>
    %392 = vector.shape_cast %391 : vector<1x1x8x32xf32> to vector<8x32xf32>
    %c7_560 = arith.constant 7 : index
    %c0_561 = arith.constant 0 : index
    %c0_562 = arith.constant 0 : index
    %393 = vector.load %arg4[%c7_560, %c0_561, %c0_562] : memref<9x48x32xf32, #tpu.memory_space<vmem>>, vector<1x48x32xf32>
    %394 = vector.shape_cast %393 : vector<1x48x32xf32> to vector<48x32xf32>
    %cst_563 = arith.constant dense<0.000000e+00> : vector<8x32xf32>
    %395 = tpu.matmul %390, %394, %cst_563 {dimension_numbers = #tpu.dot_dimension_numbers<[1], [0], [0], [1], [0, 0, 1, 1], [], []>} : vector<8x48xf32>, vector<48x32xf32>, vector<8x32xf32> -> vector<8x32xf32>
    %396 = arith.addf %392, %395 : vector<8x32xf32>
    %c0_564 = arith.constant 0 : index
    %c3_565 = arith.constant 3 : index
    %c0_566 = arith.constant 0 : index
    %c0_567 = arith.constant 0 : index
    %397 = vector.load %arg6[%c0_564, %c3_565, %c0_566, %c0_567] : memref<1x4x8x32xf32, #tpu.memory_space<vmem>>, vector<1x1x8x32xf32>
    %398 = vector.shape_cast %397 : vector<1x1x8x32xf32> to vector<8x32xf32>
    %399 = vector.shape_cast %396 : vector<8x32xf32> to vector<1x1x8x32xf32>
    tpu.vector_store %arg6[%c0_564, %c3_565, %c0_566, %c0_567], %399 {strides = array<i32>} : memref<1x4x8x32xf32, #tpu.memory_space<vmem>>, vector<1x1x8x32xf32>,
    %c0_568 = arith.constant 0 : index
    %c1_569 = arith.constant 1 : index
    %c2_570 = arith.constant 2 : index
    %c0_571 = arith.constant 0 : index
    %400 = vector.load %arg3[%c0_568, %c1_569, %c2_570, %c0_571] : memref<1x2x10x48xf32, #tpu.memory_space<vmem>>, vector<1x1x8x48xf32>
    %401 = vector.shape_cast %400 : vector<1x1x8x48xf32> to vector<8x48xf32>
    %c0_572 = arith.constant 0 : index
    %c3_573 = arith.constant 3 : index
    %c0_574 = arith.constant 0 : index
    %c0_575 = arith.constant 0 : index
    %402 = vector.load %arg6[%c0_572, %c3_573, %c0_574, %c0_575] : memref<1x4x8x32xf32, #tpu.memory_space<vmem>>, vector<1x1x8x32xf32>
    %403 = vector.shape_cast %402 : vector<1x1x8x32xf32> to vector<8x32xf32>
    %c8_576 = arith.constant 8 : index
    %c0_577 = arith.constant 0 : index
    %c0_578 = arith.constant 0 : index
    %404 = vector.load %arg4[%c8_576, %c0_577, %c0_578] : memref<9x48x32xf32, #tpu.memory_space<vmem>>, vector<1x48x32xf32>
    %405 = vector.shape_cast %404 : vector<1x48x32xf32> to vector<48x32xf32>
    %cst_579 = arith.constant dense<0.000000e+00> : vector<8x32xf32>
    %406 = tpu.matmul %401, %405, %cst_579 {dimension_numbers = #tpu.dot_dimension_numbers<[1], [0], [0], [1], [0, 0, 1, 1], [], []>} : vector<8x48xf32>, vector<48x32xf32>, vector<8x32xf32> -> vector<8x32xf32>
    %407 = arith.addf %403, %406 : vector<8x32xf32>
    %c0_580 = arith.constant 0 : index
    %c3_581 = arith.constant 3 : index
    %c0_582 = arith.constant 0 : index
    %c0_583 = arith.constant 0 : index
    %408 = vector.load %arg6[%c0_580, %c3_581, %c0_582, %c0_583] : memref<1x4x8x32xf32, #tpu.memory_space<vmem>>, vector<1x1x8x32xf32>
    %409 = vector.shape_cast %408 : vector<1x1x8x32xf32> to vector<8x32xf32>
    %410 = vector.shape_cast %407 : vector<8x32xf32> to vector<1x1x8x32xf32>
    tpu.vector_store %arg6[%c0_580, %c3_581, %c0_582, %c0_583], %410 {strides = array<i32>} : memref<1x4x8x32xf32, #tpu.memory_space<vmem>>, vector<1x1x8x32xf32>,
    return
  }
  func.func @transform_0(%arg0: i32, %arg1: i32) -> (i32, i32, i32, i32) {
    %c0_i32 = arith.constant 0 : i32
    %c0_i32_0 = arith.constant 0 : i32
    %c0_i32_1 = arith.constant 0 : i32
    return %arg0, %arg1, %c0_i32, %c0_i32_0 : i32, i32, i32, i32
  }
  func.func @transform_1(%arg0: i32, %arg1: i32) -> (i32, i32, i32, i32) {
    %c1_i32 = arith.constant 1 : i32
    %0 = arith.addi %arg1, %c1_i32 : i32
    %c2_i32 = arith.constant 2 : i32
    %1 = arith.muli %0, %c2_i32 : i32
    %c0_i32 = arith.constant 0 : i32
    %c0_i32_0 = arith.constant 0 : i32
    %c0_i32_1 = arith.constant 0 : i32
    return %arg0, %1, %c0_i32, %c0_i32_0 : i32, i32, i32, i32
  }
  func.func @transform_2(%arg0: i32, %arg1: i32) -> (i32, i32, i32) {
    %c0_i32 = arith.constant 0 : i32
    %c0_i32_0 = arith.constant 0 : i32
    %c0_i32_1 = arith.constant 0 : i32
    %c0_i32_2 = arith.constant 0 : i32
    return %c0_i32, %c0_i32_0, %c0_i32_1 : i32, i32, i32
  }
  func.func @transform_3(%arg0: i32, %arg1: i32) -> (i32, i32) {
    %c0_i32 = arith.constant 0 : i32
    %c0_i32_0 = arith.constant 0 : i32
    %c0_i32_1 = arith.constant 0 : i32
    return %c0_i32, %c0_i32_0 : i32, i32
  }
  func.func @transform_4(%arg0: i32, %arg1: i32) -> (i32, i32, i32, i32) {
    %c0_i32 = arith.constant 0 : i32
    %c0_i32_0 = arith.constant 0 : i32
    %c0_i32_1 = arith.constant 0 : i32
    return %arg0, %arg1, %c0_i32, %c0_i32_0 : i32, i32, i32, i32
  }
}

</mosaic_0001>

<llo_original>
// kernel: tpu_custom_call.1
$region0: #{tpu_custom_call.1}
  #allocation0 [shape = 'u32[]', space=smem, size = 0x4, offset = 0x4, fixed_abs, tag = 'smem constant byte address 0x4 - core index']
  #allocation1 [shape = 'u32[144,128]{1,0:T(1,128)}', space=vmem, size = 0x12000, scoped, tag = 'internal scratch']
  %s0 = inlined_call_operand.vmem [shape: f32[2,10,10,48], index: 0, kind: input, shape index: {}]
  %s1 = inlined_call_operand.vmem [shape: f32[2,10,10,48], index: 1, kind: input, shape index: {}]
  %s2 = inlined_call_operand.vmem [shape: f32[9,48,32], index: 2, kind: input, shape index: {}]
  %s3 = inlined_call_operand.vmem [shape: f32[1,32], index: 3, kind: input, shape index: {}]
  %s4 = inlined_call_operand.hbm [shape: f32[2,8,8,32], index: 4, kind: output, shape index: {}]
  %s5 = sld [smem:[#allocation0]]
  $region49: #{tpu_custom_call.1} parent=0
    _
  %s7 = ssub.s32 1, %s5
  %s8 = scalar_select 0, %s7, %s5
  $region1: #{tpu_custom_call.1} parent=0
    #allocation2 [shape = 'u8[32768]{0}', space=vmem, size = 0x8000, scoped, tag = 'output window, operand 0']
    #allocation3 [shape = 's32[2]{0}', space=sflag, size = 0x8, scoped, tag = 'scoped memory for tpu_custom_call.1']
    %9 = vsyncpa [#allocation3], 0
    %s10 = scalar_lea.sflag [#allocation3], 1
    %11 = vsyncpa %s10, 0
    loop: start=0, step=1, limit=6
    $region2: #{tpu_custom_call.1} parent=1 // loop_pre_header
      _
    $region3: #{tpu_custom_call.1} parent=1 // loop_header
      %s13 = sphi 0, %s17
      %p14 = scmp.ge.s32.totalorder %s13, 6
      %s20 = sphi 0, %s32
      %s21 = sphi 0, %s28
      %s22 = sphi 0, %s20
      %s23 = sphi 0, %s21
      %s24 = sphi 0, %s22
      %s25 = sphi 0, %s23
      %s37 = sphi 0, %s39
      %s40 = sphi 0, %s37
      %s41 = sphi 0, %s40
      %s57 = sphi 0, %s41
      %s69 = sphi 0, %s71
      %s72 = sphi 0, %s69
      %s73 = sphi 0, %s72
      %s89 = sphi 0, %s73
      %s93 = sphi 0, %s93
      %s95 = sphi 0, %s93
      %s96 = sphi 0, %s95
      %s110 = sphi 0, %s96
      %s114 = sphi 0, %s114
      %s116 = sphi 0, %s114
      %s117 = sphi 0, %s116
      %s131 = sphi 0, %s117
      %s139 = sphi 0, %s141
      %s142 = sphi 0, %s139
      %s143 = sphi 0, %s142
      %s159 = sphi 0, %s143
    $region4: #{tpu_custom_call.1} parent=1 // loop_header_branch
      %16 = sbr.rel (%p14) target = $region8
    $region5: #{tpu_custom_call.1} parent=1 // loop_body
      %s18 = ssub.s32 %s13, 1
      %s19 = ssub.s32 %s13, 2
      %s26 = sadd.s32 1, %s21
      %p27 = scmp.ge.s32.totalorder %s26, 2
      %s28 = scalar_select %p27, 0, %s26
      %s29 = sadd.s32 1, %s20
      %s30 = scalar_select %p27, %s29, %s20
      %p31 = scmp.ge.s32.totalorder %s30, 2
      %s32 = scalar_select %p31, 0, %s30
      %s33 = ssub.s32 %s20, %s32
      %s34 = ssub.s32 %s21, %s28
      %s35 = sor.u32 %s33, %s34
      %p36 = scmp.eq.s32.totalorder %s35, 0
      %s38 = sadd.s32 %s37, 1
      %s39 = scalar_select %p36, %s37, %s38
      %p42 = pneg %p36
      %p43 = scmp.eq.s32.totalorder %s13, 3
      %p44 = por %p42, %p43
      %p45 = scmp.ne.s32.totalorder %s37, %s40
      %p46 = scmp.eq.s32.totalorder %s13, 0
      %p47 = por %p45, %p46
      %p48 = scmp.ne.s32.totalorder %s37, %s40
      %p49 = scmp.eq.s32.totalorder %s18, 3
      %p50 = por %p48, %p49
      %p51 = scmp.ne.s32.totalorder %s40, %s41
      %p52 = scmp.eq.s32.totalorder %s18, 0
      %p53 = por %p51, %p52
      %p54 = scmp.ne.s32.totalorder %s40, %s41
      %p55 = scmp.eq.s32.totalorder %s19, 3
      %p56 = por %p54, %p55
      %p58 = scmp.ne.s32.totalorder %s41, %s57
      %p59 = scmp.eq.s32.totalorder %s19, 0
      %p60 = por %p58, %p59
      %s61 = sadd.s32 %s21, 1
      %s62 = smul.u32 %s61, 2
      %s63 = sadd.s32 %s28, 1
      %s64 = smul.u32 %s63, 2
      %s65 = ssub.s32 %s20, %s32
      %s66 = ssub.s32 %s62, %s64
      %s67 = sor.u32 %s65, %s66
      %p68 = scmp.eq.s32.totalorder %s67, 0
      %s70 = sadd.s32 %s69, 1
      %s71 = scalar_select %p68, %s69, %s70
      %p74 = pneg %p68
      %p75 = scmp.eq.s32.totalorder %s13, 3
      %p76 = por %p74, %p75
      %p77 = scmp.ne.s32.totalorder %s69, %s72
      %p78 = scmp.eq.s32.totalorder %s13, 0
      %p79 = por %p77, %p78
      %p80 = scmp.ne.s32.totalorder %s69, %s72
      %p81 = scmp.eq.s32.totalorder %s18, 3
      %p82 = por %p80, %p81
      %p83 = scmp.ne.s32.totalorder %s72, %s73
      %p84 = scmp.eq.s32.totalorder %s18, 0
      %p85 = por %p83, %p84
      %p86 = scmp.ne.s32.totalorder %s72, %s73
      %p87 = scmp.eq.s32.totalorder %s19, 3
      %p88 = por %p86, %p87
      %p90 = scmp.ne.s32.totalorder %s73, %s89
      %p91 = scmp.eq.s32.totalorder %s19, 0
      %p92 = por %p90, %p91
      %s94 = sadd.s32 %s93, 1
      %p97 = scmp.eq.s32.totalorder %s13, 3
      %p98 = scmp.ne.s32.totalorder %s93, %s95
      %p99 = scmp.eq.s32.totalorder %s13, 0
      %p100 = por %p98, %p99
      %p101 = scmp.ne.s32.totalorder %s93, %s95
      %p102 = scmp.eq.s32.totalorder %s18, 3
      %p103 = por %p101, %p102
      %p104 = scmp.ne.s32.totalorder %s95, %s96
      %p105 = scmp.eq.s32.totalorder %s18, 0
      %p106 = por %p104, %p105
      %p107 = scmp.ne.s32.totalorder %s95, %s96
      %p108 = scmp.eq.s32.totalorder %s19, 3
      %p109 = por %p107, %p108
      %p111 = scmp.ne.s32.totalorder %s96, %s110
      %p112 = scmp.eq.s32.totalorder %s19, 0
      %p113 = por %p111, %p112
      %s115 = sadd.s32 %s114, 1
      %p118 = scmp.eq.s32.totalorder %s13, 3
      %p119 = scmp.ne.s32.totalorder %s114, %s116
      %p120 = scmp.eq.s32.totalorder %s13, 0
      %p121 = por %p119, %p120
      %p122 = scmp.ne.s32.totalorder %s114, %s116
      %p123 = scmp.eq.s32.totalorder %s18, 3
      %p124 = por %p122, %p123
      %p125 = scmp.ne.s32.totalorder %s116, %s117
      %p126 = scmp.eq.s32.totalorder %s18, 0
      %p127 = por %p125, %p126
      %p128 = scmp.ne.s32.totalorder %s116, %s117
      %p129 = scmp.eq.s32.totalorder %s19, 3
      %p130 = por %p128, %p129
      %p132 = scmp.ne.s32.totalorder %s117, %s131
      %p133 = scmp.eq.s32.totalorder %s19, 0
      %p134 = por %p132, %p133
      %s135 = ssub.s32 %s20, %s32
      %s136 = ssub.s32 %s21, %s28
      %s137 = sor.u32 %s135, %s136
      %p138 = scmp.eq.s32.totalorder %s137, 0
      %s140 = sadd.s32 %s139, 1
      %s141 = scalar_select %p138, %s139, %s140
      %p144 = pneg %p138
      %p145 = scmp.eq.s32.totalorder %s13, 3
      %p146 = por %p144, %p145
      %p147 = scmp.ne.s32.totalorder %s139, %s142
      %p148 = scmp.eq.s32.totalorder %s13, 0
      %p149 = por %p147, %p148
      %p150 = scmp.ne.s32.totalorder %s139, %s142
      %p151 = scmp.eq.s32.totalorder %s18, 3
      %p152 = por %p150, %p151
      %p153 = scmp.ne.s32.totalorder %s142, %s143
      %p154 = scmp.eq.s32.totalorder %s18, 0
      %p155 = por %p153, %p154
      %p156 = scmp.ne.s32.totalorder %s142, %s143
      %p157 = scmp.eq.s32.totalorder %s19, 3
      %p158 = por %p156, %p157
      %p160 = scmp.ne.s32.totalorder %s143, %s159
      %p161 = scmp.eq.s32.totalorder %s19, 0
      %p162 = por %p160, %p161
      %p163 = scmp.le.s32.totalorder 1, %s13
      %p164 = scmp.lt.s32.totalorder %s13, 5
      %p165 = pnand %p163, %p164
      %p166 = pneg %p165
      // Predicated region
      $region9: #{tpu_custom_call.1} parent=5 // pred_check
        _
      $region10: #{tpu_custom_call.1} parent=5 // pred_check_branch
        %168 = sbr.rel (%p165) target = $region12
      $region11: #{tpu_custom_call.1} parent=5 // pred_region
        %s169 = ssub.s32 %s13, 1
        // Predicated region
        $region13: #{tpu_custom_call.1} parent=11 // pred_check
          %p170 = pneg %p106
        $region14: #{tpu_custom_call.1} parent=11 // pred_check_branch
          %172 = sbr.rel (%p170) target = $region16
        $region15: #{tpu_custom_call.1} parent=11 // pred_region
          _
        $region16: #{tpu_custom_call.1} parent=11 // pred_fallthru
          _
        // Predicated region
        $region17: #{tpu_custom_call.1} parent=11 // pred_check
          %p173 = pneg %p127
        $region18: #{tpu_custom_call.1} parent=11 // pred_check_branch
          %175 = sbr.rel (%p173) target = $region20
        $region19: #{tpu_custom_call.1} parent=11 // pred_region
          _
        $region20: #{tpu_custom_call.1} parent=11 // pred_fallthru
          _
      $region12: #{tpu_custom_call.1} parent=5 // pred_fallthru
        _
      %p176 = scmp.lt.s32.totalorder %s13, 4
      // Predicated region
      $region21: #{tpu_custom_call.1} parent=5 // pred_check
        %p177 = pneg %p176
      $region22: #{tpu_custom_call.1} parent=5 // pred_check_branch
        %179 = sbr.rel (%p177) target = $region24
      $region23: #{tpu_custom_call.1} parent=5 // pred_region
        // Predicated region
        $region25: #{tpu_custom_call.1} parent=23 // pred_check
          %p180 = pneg %p47
        $region26: #{tpu_custom_call.1} parent=23 // pred_check_branch
          %182 = sbr.rel (%p180) target = $region28
        $region27: #{tpu_custom_call.1} parent=23 // pred_region
          %s183 = smul.u32 4, %s21
          %s184 = ssub.s32 10, %s183
          %p185 = scmp.lt.s32.totalorder %s184, 4
          %s186 = scalar_select %p185, %s184, 4
          %s187 = smul.u32 128, %s186
          %s188 = smul.u32 %s187, 2
          %p189 = scmp.lt.s32.totalorder %s20, 1
          %s190 = scalar_select %p189, %s20, 1
          %p191 = scmp.lt.s32.totalorder %s183, 9
          %s192 = scalar_select %p191, %s183, 9
          %s193 = smul.addr %s192, 2
          %s194 = smul.addr %s190, 20
          %s195 = sadd.s32 %s193, %s194
          %s196 = smul.addr %s195, 8
          %s197 = scalar_lea.vmem %s0, %s196
          %s198 = smul.u32 4, %s21
          %s199 = ssub.s32 10, %s198
          %p200 = scmp.lt.s32.totalorder %s199, 4
          %s201 = scalar_select %p200, %s199, 4
          %s202 = smul.u32 128, %s201
          %s203 = smul.u32 %s202, 2
        $region28: #{tpu_custom_call.1} parent=23 // pred_fallthru
          _
        // Predicated region
        $region29: #{tpu_custom_call.1} parent=23 // pred_check
          %p204 = pneg %p79
        $region30: #{tpu_custom_call.1} parent=23 // pred_check_branch
          %206 = sbr.rel (%p204) target = $region32
        $region31: #{tpu_custom_call.1} parent=23 // pred_region
          %s207 = sadd.s32 %s21, 1
          %s208 = smul.u32 %s207, 2
          %s209 = smul.u32 2, %s208
          %p210 = scmp.lt.s32.totalorder %s20, 1
          %s211 = scalar_select %p210, %s20, 1
          %p212 = scmp.lt.s32.totalorder %s209, 9
          %s213 = scalar_select %p212, %s209, 9
          %s214 = smul.addr %s213, 2
          %s215 = smul.addr %s211, 20
          %s216 = sadd.s32 %s214, %s215
          %s217 = smul.addr %s216, 8
          %s218 = scalar_lea.vmem %s1, %s217
          %s219 = sadd.s32 %s21, 1
          %s220 = smul.u32 %s219, 2
          %s221 = smul.u32 2, %s220
        $region32: #{tpu_custom_call.1} parent=23 // pred_fallthru
          _
      $region24: #{tpu_custom_call.1} parent=5 // pred_fallthru
        _
      %p222 = scmp.le.s32.totalorder 1, %s13
      %p223 = scmp.lt.s32.totalorder %s13, 5
      %p224 = pnand %p222, %p223
      %p225 = pneg %p224
      // Predicated region
      $region33: #{tpu_custom_call.1} parent=5 // pred_check
        _
      $region34: #{tpu_custom_call.1} parent=5 // pred_check_branch
        %227 = sbr.rel (%p224) target = $region36
      $region35: #{tpu_custom_call.1} parent=5 // pred_region
        %s228 = ssub.s32 %s13, 1
        %s229 = smul.u32 4, %s23
        %s230 = ssub.s32 10, %s229
        %p231 = scmp.lt.s32.totalorder %s230, 4
        %s232 = scalar_select %p231, %s230, 4
        %s233 = smul.u32 128, %s232
        %s234 = smul.u32 %s233, 2
        %p235 = scmp.lt.s32.totalorder %s22, 1
        %s236 = scalar_select %p235, %s22, 1
        %p237 = scmp.lt.s32.totalorder %s229, 9
        %s238 = scalar_select %p237, %s229, 9
        %s239 = smul.addr %s238, 2
        %s240 = smul.addr %s236, 20
        %s241 = sadd.s32 %s239, %s240
        %s242 = smul.addr %s241, 8
        %s243 = scalar_lea.vmem %s0, %s242
        %p244 = pneg %p53
        %p245 = pneg %p50
        %s246 = sadd.s32 %s23, 1
        %s247 = smul.u32 %s246, 2
        %s248 = smul.u32 2, %s247
        %p249 = scmp.lt.s32.totalorder %s22, 1
        %s250 = scalar_select %p249, %s22, 1
        %p251 = scmp.lt.s32.totalorder %s248, 9
        %s252 = scalar_select %p251, %s248, 9
        %s253 = smul.addr %s252, 2
        %s254 = smul.addr %s250, 20
        %s255 = sadd.s32 %s253, %s254
        %s256 = smul.addr %s255, 8
        %s257 = scalar_lea.vmem %s1, %s256
        %p258 = pneg %p85
        %p259 = pneg %p82
        %p260 = pneg %p106
        %p261 = pneg %p103
        %p262 = pneg %p127
        %p263 = pneg %p124
        %p264 = pneg %p155
        %p265 = pneg %p152
        %s266 = sand.u32 %s142, 1
        %s267 = scalar_lea.sflag [#allocation3], %s266
        %s268 = sand.u32 %s142, 1
        %s269 = smul.addr %s268, 32
        %s270 = scalar_lea.vmem [#allocation2], %s269
        %s271 = smul.u32 4, %s23
        %s272 = ssub.s32 10, %s271
        %p273 = scmp.lt.s32.totalorder %s272, 4
        %s274 = scalar_select %p273, %s272, 4
        %s275 = smul.u32 128, %s274
        %s276 = smul.u32 %s275, 2
        %p277 = scmp.lt.s32.totalorder %s22, 1
        %s278 = scalar_select %p277, %s22, 1
        %p279 = scmp.lt.s32.totalorder %s271, 9
        %s280 = scalar_select %p279, %s271, 9
        %s281 = smul.addr %s280, 2
        %s282 = smul.addr %s278, 20
        %s283 = sadd.s32 %s281, %s282
        %s284 = smul.addr %s283, 8
        %s285 = scalar_lea.vmem %s0, %s284
        %s286 = smul.u32 4, %s23
        %s287 = ssub.s32 10, %s286
        %p288 = scmp.lt.s32.totalorder %s287, 4
        %s289 = scalar_select %p288, %s287, 4
        %s290 = smul.u32 128, %s289
        %s291 = smul.u32 %s290, 2
        %s292 = sadd.s32 %s23, 1
        %s293 = smul.u32 %s292, 2
        %s294 = smul.u32 2, %s293
        %p295 = scmp.lt.s32.totalorder %s22, 1
        %s296 = scalar_select %p295, %s22, 1
        %p297 = scmp.lt.s32.totalorder %s294, 9
        %s298 = scalar_select %p297, %s294, 9
        %s299 = smul.addr %s298, 2
        %s300 = smul.addr %s296, 20
        %s301 = sadd.s32 %s299, %s300
        %s302 = smul.addr %s301, 8
        %s303 = scalar_lea.vmem %s1, %s302
        %s304 = sadd.s32 %s23, 1
        %s305 = smul.u32 %s304, 2
        %s306 = smul.u32 2, %s305
        %s307 = smul.u32 4, %s23
        %v308 = vld [vmem:[%s3] sm:$0x1]
        %v310 = vlaneseq
        %v311 = vshrl.u32 %v310, 7
        %v312 = vsub.s32 0, %v311
        %v313 = vrot.slane %v308, %v312
        %vm315 = vcmask 261120
        %316 = vst.msk [vmem:[%s270] sm:$0xff] %vm315, %v313
        %v317 = vld [vmem:[%s285] sm:$0xff]
        %v318 = vld [vmem:[%s270] sm:$0xff]
        %v319 = vld [vmem:[%s2] sm:$0xff]
        %v320 = vld [vmem:[%s2 + $0x8] sm:$0xff]
        %v321 = vld [vmem:[%s2 + $0x10] sm:$0xff]
        %v322 = vld [vmem:[%s2 + $0x18] sm:$0xff]
        %v323 = vld [vmem:[%s2 + $0x20] sm:$0xff]
        %v324 = vld [vmem:[%s2 + $0x28] sm:$0xff]
        %vm325 = vcmask 392192
        %v327 = vsel %vm325, %v317, 0
        %329 = vmatprep.subr.mxu0 0.0
        %330 = vmatpush1.msra.mxu0 %v319
        %331 = vmatprep.subr.mxu0 0.0
        %332 = vmatpush1.msra.mxu0 %v320
        %333 = vmatprep.subr.mxu0 0.0
        %334 = vmatpush1.msra.mxu0 %v321
        %335 = vmatprep.subr.mxu0 0.0
        %336 = vmatpush1.msra.mxu0 %v322
        %337 = vmatprep.subr.mxu0 0.0
        %338 = vmatpush1.msra.mxu0 %v323
        %339 = vmatprep.subr.mxu0 0.0
        %340 = vmatpush1.msra.mxu0 %v324
        %341 = vmatprep.subr.mxu0 0.0
        %342 = vmatpush1.msra.mxu0 0.0
        %343 = vmatprep.subr.mxu0 0.0
        %344 = vmatpush1.msra.mxu0 0.0
        %345 = vmatprep.subr.mxu0 0.0
        %346 = vmatpush1.msra.mxu0 0.0
        %347 = vmatprep.subr.mxu0 0.0
        %348 = vmatpush1.msra.mxu0 0.0
        %349 = vmatprep.subr.mxu0 0.0
        %350 = vmatpush1.msra.mxu0 0.0
        %351 = vmatprep.subr.mxu0 0.0
        %352 = vmatpush1.msra.mxu0 0.0
        %353 = vmatprep.subr.mxu0 0.0
        %354 = vmatpush1.msra.mxu0 0.0
        %355 = vmatprep.subr.mxu0 0.0
        %356 = vmatpush1.msra.mxu0 0.0
        %357 = vmatprep.subr.mxu0 0.0
        %358 = vmatpush1.msra.mxu0 0.0
        %359 = vmatprep.subr.mxu0 0.0
        %360 = vmatpush1.msra.mxu0 0.0
        %361 = vmatprep.subr.mxu0 0.0
        %362 = vmatpush1.msra.mxu0 0.0
        %363 = vmatprep.subr.mxu0 0.0
        %364 = vmatpush1.msra.mxu0 0.0
        %365 = vmatprep.subr.mxu0 0.0
        %366 = vmatpush1.msra.mxu0 0.0
        %367 = vmatprep.subr.mxu0 0.0
        %368 = vmatpush1.msra.mxu0 0.0
        %369 = vmatprep.subr.mxu0 0.0
        %370 = vmatpush1.msra.mxu0 0.0
        %371 = vmatprep.subr.mxu0 0.0
        %372 = vmatpush1.msra.mxu0 0.0
        %373 = vmatprep.subr.mxu0 0.0
        %374 = vmatpush1.msra.mxu0 0.0
        %375 = vmatprep.subr.mxu0 0.0
        %376 = vmatpush1.msra.mxu0 0.0
        %377 = vmatprep.subr.mxu0 0.0
        %378 = vmatpush1.msra.mxu0 0.0
        %379 = vmatprep.subr.mxu0 0.0
        %380 = vmatpush1.msra.mxu0 0.0
        %381 = vmatprep.subr.mxu0 0.0
        %382 = vmatpush1.msra.mxu0 0.0
        %383 = vmatprep.subr.mxu0 0.0
        %384 = vmatpush1.msra.mxu0 0.0
        %385 = vmatprep.subr.mxu0 0.0
        %386 = vmatpush1.msra.mxu0 0.0
        %387 = vmatprep.subr.mxu0 0.0
        %388 = vmatpush1.msra.mxu0 0.0
        %389 = vmatprep.subr.mxu0 0.0
        %390 = vmatpush1.msra.mxu0 0.0
        %391 = vmatprep.subr.mxu0 0.0
        %392 = vmatpush1.msra.mxu0 0.0
        %393 = vmatprep.mubr.f32.mxu0 0.0
        %394 = vmatmul.mubr.f32.gmra.mrb[0].mxu0 %v327
        %v395 = vpop.f32.mrb[0].mxu0
        %v396 = vadd.f32 0.0, %v395
        %v397 = vpop.f32.mrb[0].mxu0
        %398 = vdwg.mxu0
        %v399 = vadd.f32 %v318, %v396
        %400 = vst.msk [vmem:[%s270] sm:$0xff] %vm315, %v399
        %v401 = vld [vmem:[%s285 + $0x1] sm:$0xff]
        %v402 = vld [vmem:[%s270] sm:$0xff]
        %s403 = scalar_lea.vmem %s2, 48
        %v404 = vld [vmem:[%s403] sm:$0xff]
        %v405 = vld [vmem:[%s403 + $0x8] sm:$0xff]
        %v406 = vld [vmem:[%s403 + $0x10] sm:$0xff]
        %v407 = vld [vmem:[%s403 + $0x18] sm:$0xff]
        %v408 = vld [vmem:[%s403 + $0x20] sm:$0xff]
        %v409 = vld [vmem:[%s403 + $0x28] sm:$0xff]
        %v411 = vsel %vm325, %v401, 0
        %413 = vmatprep.subr.mxu0 0.0
        %414 = vmatpush1.msra.mxu0 %v404
        %415 = vmatprep.subr.mxu0 0.0
        %416 = vmatpush1.msra.mxu0 %v405
        %417 = vmatprep.subr.mxu0 0.0
        %418 = vmatpush1.msra.mxu0 %v406
        %419 = vmatprep.subr.mxu0 0.0
        %420 = vmatpush1.msra.mxu0 %v407
        %421 = vmatprep.subr.mxu0 0.0
        %422 = vmatpush1.msra.mxu0 %v408
        %423 = vmatprep.subr.mxu0 0.0
        %424 = vmatpush1.msra.mxu0 %v409
        %425 = vmatprep.subr.mxu0 0.0
        %426 = vmatpush1.msra.mxu0 0.0
        %427 = vmatprep.subr.mxu0 0.0
        %428 = vmatpush1.msra.mxu0 0.0
        %429 = vmatprep.subr.mxu0 0.0
        %430 = vmatpush1.msra.mxu0 0.0
        %431 = vmatprep.subr.mxu0 0.0
        %432 = vmatpush1.msra.mxu0 0.0
        %433 = vmatprep.subr.mxu0 0.0
        %434 = vmatpush1.msra.mxu0 0.0
        %435 = vmatprep.subr.mxu0 0.0
        %436 = vmatpush1.msra.mxu0 0.0
        %437 = vmatprep.subr.mxu0 0.0
        %438 = vmatpush1.msra.mxu0 0.0
        %439 = vmatprep.subr.mxu0 0.0
        %440 = vmatpush1.msra.mxu0 0.0
        %441 = vmatprep.subr.mxu0 0.0
        %442 = vmatpush1.msra.mxu0 0.0
        %443 = vmatprep.subr.mxu0 0.0
        %444 = vmatpush1.msra.mxu0 0.0
        %445 = vmatprep.subr.mxu0 0.0
        %446 = vmatpush1.msra.mxu0 0.0
        %447 = vmatprep.subr.mxu0 0.0
        %448 = vmatpush1.msra.mxu0 0.0
        %449 = vmatprep.subr.mxu0 0.0
        %450 = vmatpush1.msra.mxu0 0.0
        %451 = vmatprep.subr.mxu0 0.0
        %452 = vmatpush1.msra.mxu0 0.0
        %453 = vmatprep.subr.mxu0 0.0
        %454 = vmatpush1.msra.mxu0 0.0
        %455 = vmatprep.subr.mxu0 0.0
        %456 = vmatpush1.msra.mxu0 0.0
        %457 = vmatprep.subr.mxu0 0.0
        %458 = vmatpush1.msra.mxu0 0.0
        %459 = vmatprep.subr.mxu0 0.0
        %460 = vmatpush1.msra.mxu0 0.0
        %461 = vmatprep.subr.mxu0 0.0
        %462 = vmatpush1.msra.mxu0 0.0
        %463 = vmatprep.subr.mxu0 0.0
        %464 = vmatpush1.msra.mxu0 0.0
        %465 = vmatprep.subr.mxu0 0.0
        %466 = vmatpush1.msra.mxu0 0.0
        %467 = vmatprep.subr.mxu0 0.0
        %468 = vmatpush1.msra.mxu0 0.0
        %469 = vmatprep.subr.mxu0 0.0
        %470 = vmatpush1.msra.mxu0 0.0
        %471 = vmatprep.subr.mxu0 0.0
        %472 = vmatpush1.msra.mxu0 0.0
        %473 = vmatprep.subr.mxu0 0.0
        %474 = vmatpush1.msra.mxu0 0.0
        %475 = vmatprep.subr.mxu0 0.0
        %476 = vmatpush1.msra.mxu0 0.0
        %477 = vmatprep.mubr.f32.mxu0 0.0
        %478 = vmatmul.mubr.f32.gmra.mrb[0].mxu0 %v411
        %v479 = vpop.f32.mrb[0].mxu0
        %v480 = vadd.f32 0.0, %v479
        %v481 = vpop.f32.mrb[0].mxu0
        %482 = vdwg.mxu0
        %v483 = vadd.f32 %v402, %v480
        %484 = vst.msk [vmem:[%s270] sm:$0xff] %vm315, %v483
        %v485 = vld [vmem:[%s285 + $0x2] sm:$0xff]
        %v486 = vld [vmem:[%s270] sm:$0xff]
        %s487 = scalar_lea.vmem %s2, 96
        %v488 = vld [vmem:[%s487] sm:$0xff]
        %v489 = vld [vmem:[%s487 + $0x8] sm:$0xff]
        %v490 = vld [vmem:[%s487 + $0x10] sm:$0xff]
        %v491 = vld [vmem:[%s487 + $0x18] sm:$0xff]
        %v492 = vld [vmem:[%s487 + $0x20] sm:$0xff]
        %v493 = vld [vmem:[%s487 + $0x28] sm:$0xff]
        %v495 = vsel %vm325, %v485, 0
        %497 = vmatprep.subr.mxu0 0.0
        %498 = vmatpush1.msra.mxu0 %v488
        %499 = vmatprep.subr.mxu0 0.0
        %500 = vmatpush1.msra.mxu0 %v489
        %501 = vmatprep.subr.mxu0 0.0
        %502 = vmatpush1.msra.mxu0 %v490
        %503 = vmatprep.subr.mxu0 0.0
        %504 = vmatpush1.msra.mxu0 %v491
        %505 = vmatprep.subr.mxu0 0.0
        %506 = vmatpush1.msra.mxu0 %v492
        %507 = vmatprep.subr.mxu0 0.0
        %508 = vmatpush1.msra.mxu0 %v493
        %509 = vmatprep.subr.mxu0 0.0
        %510 = vmatpush1.msra.mxu0 0.0
        %511 = vmatprep.subr.mxu0 0.0
        %512 = vmatpush1.msra.mxu0 0.0
        %513 = vmatprep.subr.mxu0 0.0
        %514 = vmatpush1.msra.mxu0 0.0
        %515 = vmatprep.subr.mxu0 0.0
        %516 = vmatpush1.msra.mxu0 0.0
        %517 = vmatprep.subr.mxu0 0.0
        %518 = vmatpush1.msra.mxu0 0.0
        %519 = vmatprep.subr.mxu0 0.0
        %520 = vmatpush1.msra.mxu0 0.0
        %521 = vmatprep.subr.mxu0 0.0
        %522 = vmatpush1.msra.mxu0 0.0
        %523 = vmatprep.subr.mxu0 0.0
        %524 = vmatpush1.msra.mxu0 0.0
        %525 = vmatprep.subr.mxu0 0.0
        %526 = vmatpush1.msra.mxu0 0.0
        %527 = vmatprep.subr.mxu0 0.0
        %528 = vmatpush1.msra.mxu0 0.0
        %529 = vmatprep.subr.mxu0 0.0
        %530 = vmatpush1.msra.mxu0 0.0
        %531 = vmatprep.subr.mxu0 0.0
        %532 = vmatpush1.msra.mxu0 0.0
        %533 = vmatprep.subr.mxu0 0.0
        %534 = vmatpush1.msra.mxu0 0.0
        %535 = vmatprep.subr.mxu0 0.0
        %536 = vmatpush1.msra.mxu0 0.0
        %537 = vmatprep.subr.mxu0 0.0
        %538 = vmatpush1.msra.mxu0 0.0
        %539 = vmatprep.subr.mxu0 0.0
        %540 = vmatpush1.msra.mxu0 0.0
        %541 = vmatprep.subr.mxu0 0.0
        %542 = vmatpush1.msra.mxu0 0.0
        %543 = vmatprep.subr.mxu0 0.0
        %544 = vmatpush1.msra.mxu0 0.0
        %545 = vmatprep.subr.mxu0 0.0
        %546 = vmatpush1.msra.mxu0 0.0
        %547 = vmatprep.subr.mxu0 0.0
        %548 = vmatpush1.msra.mxu0 0.0
        %549 = vmatprep.subr.mxu0 0.0
        %550 = vmatpush1.msra.mxu0 0.0
        %551 = vmatprep.subr.mxu0 0.0
        %552 = vmatpush1.msra.mxu0 0.0
        %553 = vmatprep.subr.mxu0 0.0
        %554 = vmatpush1.msra.mxu0 0.0
        %555 = vmatprep.subr.mxu0 0.0
        %556 = vmatpush1.msra.mxu0 0.0
        %557 = vmatprep.subr.mxu0 0.0
        %558 = vmatpush1.msra.mxu0 0.0
        %559 = vmatprep.subr.mxu0 0.0
        %560 = vmatpush1.msra.mxu0 0.0
        %561 = vmatprep.mubr.f32.mxu0 0.0
        %562 = vmatmul.mubr.f32.gmra.mrb[0].mxu0 %v495
        %v563 = vpop.f32.mrb[0].mxu0
        %v564 = vadd.f32 0.0, %v563
        %v565 = vpop.f32.mrb[0].mxu0
        %566 = vdwg.mxu0
        %v567 = vadd.f32 %v486, %v564
        %568 = vst.msk [vmem:[%s270] sm:$0xff] %vm315, %v567
        %s569 = scalar_lea.vmem %s285, 16
        %v570 = vld [vmem:[%s569] sm:$0xff]
        %v571 = vld [vmem:[%s270] sm:$0xff]
        %s572 = scalar_lea.vmem %s2, 144
        %v573 = vld [vmem:[%s572] sm:$0xff]
        %v574 = vld [vmem:[%s572 + $0x8] sm:$0xff]
        %v575 = vld [vmem:[%s572 + $0x10] sm:$0xff]
        %v576 = vld [vmem:[%s572 + $0x18] sm:$0xff]
        %v577 = vld [vmem:[%s572 + $0x20] sm:$0xff]
        %v578 = vld [vmem:[%s572 + $0x28] sm:$0xff]
        %v580 = vsel %vm325, %v570, 0
        %582 = vmatprep.subr.mxu0 0.0
        %583 = vmatpush1.msra.mxu0 %v573
        %584 = vmatprep.subr.mxu0 0.0
        %585 = vmatpush1.msra.mxu0 %v574
        %586 = vmatprep.subr.mxu0 0.0
        %587 = vmatpush1.msra.mxu0 %v575
        %588 = vmatprep.subr.mxu0 0.0
        %589 = vmatpush1.msra.mxu0 %v576
        %590 = vmatprep.subr.mxu0 0.0
        %591 = vmatpush1.msra.mxu0 %v577
        %592 = vmatprep.subr.mxu0 0.0
        %593 = vmatpush1.msra.mxu0 %v578
        %594 = vmatprep.subr.mxu0 0.0
        %595 = vmatpush1.msra.mxu0 0.0
        %596 = vmatprep.subr.mxu0 0.0
        %597 = vmatpush1.msra.mxu0 0.0
        %598 = vmatprep.subr.mxu0 0.0
        %599 = vmatpush1.msra.mxu0 0.0
        %600 = vmatprep.subr.mxu0 0.0
        %601 = vmatpush1.msra.mxu0 0.0
        %602 = vmatprep.subr.mxu0 0.0
        %603 = vmatpush1.msra.mxu0 0.0
        %604 = vmatprep.subr.mxu0 0.0
        %605 = vmatpush1.msra.mxu0 0.0
        %606 = vmatprep.subr.mxu0 0.0
        %607 = vmatpush1.msra.mxu0 0.0
        %608 = vmatprep.subr.mxu0 0.0
        %609 = vmatpush1.msra.mxu0 0.0
        %610 = vmatprep.subr.mxu0 0.0
        %611 = vmatpush1.msra.mxu0 0.0
        %612 = vmatprep.subr.mxu0 0.0
        %613 = vmatpush1.msra.mxu0 0.0
        %614 = vmatprep.subr.mxu0 0.0
        %615 = vmatpush1.msra.mxu0 0.0
        %616 = vmatprep.subr.mxu0 0.0
        %617 = vmatpush1.msra.mxu0 0.0
        %618 = vmatprep.subr.mxu0 0.0
        %619 = vmatpush1.msra.mxu0 0.0
        %620 = vmatprep.subr.mxu0 0.0
        %621 = vmatpush1.msra.mxu0 0.0
        %622 = vmatprep.subr.mxu0 0.0
        %623 = vmatpush1.msra.mxu0 0.0
        %624 = vmatprep.subr.mxu0 0.0
        %625 = vmatpush1.msra.mxu0 0.0
        %626 = vmatprep.subr.mxu0 0.0
        %627 = vmatpush1.msra.mxu0 0.0
        %628 = vmatprep.subr.mxu0 0.0
        %629 = vmatpush1.msra.mxu0 0.0
        %630 = vmatprep.subr.mxu0 0.0
        %631 = vmatpush1.msra.mxu0 0.0
        %632 = vmatprep.subr.mxu0 0.0
        %633 = vmatpush1.msra.mxu0 0.0
        %634 = vmatprep.subr.mxu0 0.0
        %635 = vmatpush1.msra.mxu0 0.0
        %636 = vmatprep.subr.mxu0 0.0
        %637 = vmatpush1.msra.mxu0 0.0
        %638 = vmatprep.subr.mxu0 0.0
        %639 = vmatpush1.msra.mxu0 0.0
        %640 = vmatprep.subr.mxu0 0.0
        %641 = vmatpush1.msra.mxu0 0.0
        %642 = vmatprep.subr.mxu0 0.0
        %643 = vmatpush1.msra.mxu0 0.0
        %644 = vmatprep.subr.mxu0 0.0
        %645 = vmatpush1.msra.mxu0 0.0
        %646 = vmatprep.mubr.f32.mxu0 0.0
        %647 = vmatmul.mubr.f32.gmra.mrb[0].mxu0 %v580
        %v648 = vpop.f32.mrb[0].mxu0
        %v649 = vadd.f32 0.0, %v648
        %v650 = vpop.f32.mrb[0].mxu0
        %651 = vdwg.mxu0
        %v652 = vadd.f32 %v571, %v649
        %653 = vst.msk [vmem:[%s270] sm:$0xff] %vm315, %v652
        %v654 = vld [vmem:[%s569 + $0x1] sm:$0xff]
        %v655 = vld [vmem:[%s270] sm:$0xff]
        %s656 = scalar_lea.vmem %s2, 192
        %v657 = vld [vmem:[%s656] sm:$0xff]
        %v658 = vld [vmem:[%s656 + $0x8] sm:$0xff]
        %v659 = vld [vmem:[%s656 + $0x10] sm:$0xff]
        %v660 = vld [vmem:[%s656 + $0x18] sm:$0xff]
        %v661 = vld [vmem:[%s656 + $0x20] sm:$0xff]
        %v662 = vld [vmem:[%s656 + $0x28] sm:$0xff]
        %v664 = vsel %vm325, %v654, 0
        %666 = vmatprep.subr.mxu0 0.0
        %667 = vmatpush1.msra.mxu0 %v657
        %668 = vmatprep.subr.mxu0 0.0
        %669 = vmatpush1.msra.mxu0 %v658
        %670 = vmatprep.subr.mxu0 0.0
        %671 = vmatpush1.msra.mxu0 %v659
        %672 = vmatprep.subr.mxu0 0.0
        %673 = vmatpush1.msra.mxu0 %v660
        %674 = vmatprep.subr.mxu0 0.0
        %675 = vmatpush1.msra.mxu0 %v661
        %676 = vmatprep.subr.mxu0 0.0
        %677 = vmatpush1.msra.mxu0 %v662
        %678 = vmatprep.subr.mxu0 0.0
        %679 = vmatpush1.msra.mxu0 0.0
        %680 = vmatprep.subr.mxu0 0.0
        %681 = vmatpush1.msra.mxu0 0.0
        %682 = vmatprep.subr.mxu0 0.0
        %683 = vmatpush1.msra.mxu0 0.0
        %684 = vmatprep.subr.mxu0 0.0
        %685 = vmatpush1.msra.mxu0 0.0
        %686 = vmatprep.subr.mxu0 0.0
        %687 = vmatpush1.msra.mxu0 0.0
        %688 = vmatprep.subr.mxu0 0.0
        %689 = vmatpush1.msra.mxu0 0.0
        %690 = vmatprep.subr.mxu0 0.0
        %691 = vmatpush1.msra.mxu0 0.0
        %692 = vmatprep.subr.mxu0 0.0
        %693 = vmatpush1.msra.mxu0 0.0
        %694 = vmatprep.subr.mxu0 0.0
        %695 = vmatpush1.msra.mxu0 0.0
        %696 = vmatprep.subr.mxu0 0.0
        %697 = vmatpush1.msra.mxu0 0.0
        %698 = vmatprep.subr.mxu0 0.0
        %699 = vmatpush1.msra.mxu0 0.0
        %700 = vmatprep.subr.mxu0 0.0
        %701 = vmatpush1.msra.mxu0 0.0
        %702 = vmatprep.subr.mxu0 0.0
        %703 = vmatpush1.msra.mxu0 0.0
        %704 = vmatprep.subr.mxu0 0.0
        %705 = vmatpush1.msra.mxu0 0.0
        %706 = vmatprep.subr.mxu0 0.0
        %707 = vmatpush1.msra.mxu0 0.0
        %708 = vmatprep.subr.mxu0 0.0
        %709 = vmatpush1.msra.mxu0 0.0
        %710 = vmatprep.subr.mxu0 0.0
        %711 = vmatpush1.msra.mxu0 0.0
        %712 = vmatprep.subr.mxu0 0.0
        %713 = vmatpush1.msra.mxu0 0.0
        %714 = vmatprep.subr.mxu0 0.0
        %715 = vmatpush1.msra.mxu0 0.0
        %716 = vmatprep.subr.mxu0 0.0
        %717 = vmatpush1.msra.mxu0 0.0
        %718 = vmatprep.subr.mxu0 0.0
        %719 = vmatpush1.msra.mxu0 0.0
        %720 = vmatprep.subr.mxu0 0.0
        %721 = vmatpush1.msra.mxu0 0.0
        %722 = vmatprep.subr.mxu0 0.0
        %723 = vmatpush1.msra.mxu0 0.0
        %724 = vmatprep.subr.mxu0 0.0
        %725 = vmatpush1.msra.mxu0 0.0
        %726 = vmatprep.subr.mxu0 0.0
        %727 = vmatpush1.msra.mxu0 0.0
        %728 = vmatprep.subr.mxu0 0.0
        %729 = vmatpush1.msra.mxu0 0.0
        %730 = vmatprep.mubr.f32.mxu0 0.0
        %731 = vmatmul.mubr.f32.gmra.mrb[0].mxu0 %v664
        %v732 = vpop.f32.mrb[0].mxu0
        %v733 = vadd.f32 0.0, %v732
        %v734 = vpop.f32.mrb[0].mxu0
        %735 = vdwg.mxu0
        %v736 = vadd.f32 %v655, %v733
        %737 = vst.msk [vmem:[%s270] sm:$0xff] %vm315, %v736
        %v738 = vld [vmem:[%s569 + $0x2] sm:$0xff]
        %v739 = vld [vmem:[%s270] sm:$0xff]
        %s740 = scalar_lea.vmem %s2, 240
        %v741 = vld [vmem:[%s740] sm:$0xff]
        %v742 = vld [vmem:[%s740 + $0x8] sm:$0xff]
        %v743 = vld [vmem:[%s740 + $0x10] sm:$0xff]
        %v744 = vld [vmem:[%s740 + $0x18] sm:$0xff]
        %v745 = vld [vmem:[%s740 + $0x20] sm:$0xff]
        %v746 = vld [vmem:[%s740 + $0x28] sm:$0xff]
        %v748 = vsel %vm325, %v738, 0
        %750 = vmatprep.subr.mxu0 0.0
        %751 = vmatpush1.msra.mxu0 %v741
        %752 = vmatprep.subr.mxu0 0.0
        %753 = vmatpush1.msra.mxu0 %v742
        %754 = vmatprep.subr.mxu0 0.0
        %755 = vmatpush1.msra.mxu0 %v743
        %756 = vmatprep.subr.mxu0 0.0
        %757 = vmatpush1.msra.mxu0 %v744
        %758 = vmatprep.subr.mxu0 0.0
        %759 = vmatpush1.msra.mxu0 %v745
        %760 = vmatprep.subr.mxu0 0.0
        %761 = vmatpush1.msra.mxu0 %v746
        %762 = vmatprep.subr.mxu0 0.0
        %763 = vmatpush1.msra.mxu0 0.0
        %764 = vmatprep.subr.mxu0 0.0
        %765 = vmatpush1.msra.mxu0 0.0
        %766 = vmatprep.subr.mxu0 0.0
        %767 = vmatpush1.msra.mxu0 0.0
        %768 = vmatprep.subr.mxu0 0.0
        %769 = vmatpush1.msra.mxu0 0.0
        %770 = vmatprep.subr.mxu0 0.0
        %771 = vmatpush1.msra.mxu0 0.0
        %772 = vmatprep.subr.mxu0 0.0
        %773 = vmatpush1.msra.mxu0 0.0
        %774 = vmatprep.subr.mxu0 0.0
        %775 = vmatpush1.msra.mxu0 0.0
        %776 = vmatprep.subr.mxu0 0.0
        %777 = vmatpush1.msra.mxu0 0.0
        %778 = vmatprep.subr.mxu0 0.0
        %779 = vmatpush1.msra.mxu0 0.0
        %780 = vmatprep.subr.mxu0 0.0
        %781 = vmatpush1.msra.mxu0 0.0
        %782 = vmatprep.subr.mxu0 0.0
        %783 = vmatpush1.msra.mxu0 0.0
        %784 = vmatprep.subr.mxu0 0.0
        %785 = vmatpush1.msra.mxu0 0.0
        %786 = vmatprep.subr.mxu0 0.0
        %787 = vmatpush1.msra.mxu0 0.0
        %788 = vmatprep.subr.mxu0 0.0
        %789 = vmatpush1.msra.mxu0 0.0
        %790 = vmatprep.subr.mxu0 0.0
        %791 = vmatpush1.msra.mxu0 0.0
        %792 = vmatprep.subr.mxu0 0.0
        %793 = vmatpush1.msra.mxu0 0.0
        %794 = vmatprep.subr.mxu0 0.0
        %795 = vmatpush1.msra.mxu0 0.0
        %796 = vmatprep.subr.mxu0 0.0
        %797 = vmatpush1.msra.mxu0 0.0
        %798 = vmatprep.subr.mxu0 0.0
        %799 = vmatpush1.msra.mxu0 0.0
        %800 = vmatprep.subr.mxu0 0.0
        %801 = vmatpush1.msra.mxu0 0.0
        %802 = vmatprep.subr.mxu0 0.0
        %803 = vmatpush1.msra.mxu0 0.0
        %804 = vmatprep.subr.mxu0 0.0
        %805 = vmatpush1.msra.mxu0 0.0
        %806 = vmatprep.subr.mxu0 0.0
        %807 = vmatpush1.msra.mxu0 0.0
        %808 = vmatprep.subr.mxu0 0.0
        %809 = vmatpush1.msra.mxu0 0.0
        %810 = vmatprep.subr.mxu0 0.0
        %811 = vmatpush1.msra.mxu0 0.0
        %812 = vmatprep.subr.mxu0 0.0
        %813 = vmatpush1.msra.mxu0 0.0
        %814 = vmatprep.mubr.f32.mxu0 0.0
        %815 = vmatmul.mubr.f32.gmra.mrb[0].mxu0 %v748
        %v816 = vpop.f32.mrb[0].mxu0
        %v817 = vadd.f32 0.0, %v816
        %v818 = vpop.f32.mrb[0].mxu0
        %819 = vdwg.mxu0
        %v820 = vadd.f32 %v739, %v817
        %821 = vst.msk [vmem:[%s270] sm:$0xff] %vm315, %v820
        %s822 = scalar_lea.vmem %s285, 32
        %v823 = vld [vmem:[%s822] sm:$0xff]
        %v824 = vld [vmem:[%s270] sm:$0xff]
        %s825 = scalar_lea.vmem %s2, 288
        %v826 = vld [vmem:[%s825] sm:$0xff]
        %v827 = vld [vmem:[%s825 + $0x8] sm:$0xff]
        %v828 = vld [vmem:[%s825 + $0x10] sm:$0xff]
        %v829 = vld [vmem:[%s825 + $0x18] sm:$0xff]
        %v830 = vld [vmem:[%s825 + $0x20] sm:$0xff]
        %v831 = vld [vmem:[%s825 + $0x28] sm:$0xff]
        %v833 = vsel %vm325, %v823, 0
        %835 = vmatprep.subr.mxu0 0.0
        %836 = vmatpush1.msra.mxu0 %v826
        %837 = vmatprep.subr.mxu0 0.0
        %838 = vmatpush1.msra.mxu0 %v827
        %839 = vmatprep.subr.mxu0 0.0
        %840 = vmatpush1.msra.mxu0 %v828
        %841 = vmatprep.subr.mxu0 0.0
        %842 = vmatpush1.msra.mxu0 %v829
        %843 = vmatprep.subr.mxu0 0.0
        %844 = vmatpush1.msra.mxu0 %v830
        %845 = vmatprep.subr.mxu0 0.0
        %846 = vmatpush1.msra.mxu0 %v831
        %847 = vmatprep.subr.mxu0 0.0
        %848 = vmatpush1.msra.mxu0 0.0
        %849 = vmatprep.subr.mxu0 0.0
        %850 = vmatpush1.msra.mxu0 0.0
        %851 = vmatprep.subr.mxu0 0.0
        %852 = vmatpush1.msra.mxu0 0.0
        %853 = vmatprep.subr.mxu0 0.0
        %854 = vmatpush1.msra.mxu0 0.0
        %855 = vmatprep.subr.mxu0 0.0
        %856 = vmatpush1.msra.mxu0 0.0
        %857 = vmatprep.subr.mxu0 0.0
        %858 = vmatpush1.msra.mxu0 0.0
        %859 = vmatprep.subr.mxu0 0.0
        %860 = vmatpush1.msra.mxu0 0.0
        %861 = vmatprep.subr.mxu0 0.0
        %862 = vmatpush1.msra.mxu0 0.0
        %863 = vmatprep.subr.mxu0 0.0
        %864 = vmatpush1.msra.mxu0 0.0
        %865 = vmatprep.subr.mxu0 0.0
        %866 = vmatpush1.msra.mxu0 0.0
        %867 = vmatprep.subr.mxu0 0.0
        %868 = vmatpush1.msra.mxu0 0.0
        %869 = vmatprep.subr.mxu0 0.0
        %870 = vmatpush1.msra.mxu0 0.0
        %871 = vmatprep.subr.mxu0 0.0
        %872 = vmatpush1.msra.mxu0 0.0
        %873 = vmatprep.subr.mxu0 0.0
        %874 = vmatpush1.msra.mxu0 0.0
        %875 = vmatprep.subr.mxu0 0.0
        %876 = vmatpush1.msra.mxu0 0.0
        %877 = vmatprep.subr.mxu0 0.0
        %878 = vmatpush1.msra.mxu0 0.0
        %879 = vmatprep.subr.mxu0 0.0
        %880 = vmatpush1.msra.mxu0 0.0
        %881 = vmatprep.subr.mxu0 0.0
        %882 = vmatpush1.msra.mxu0 0.0
        %883 = vmatprep.subr.mxu0 0.0
        %884 = vmatpush1.msra.mxu0 0.0
        %885 = vmatprep.subr.mxu0 0.0
        %886 = vmatpush1.msra.mxu0 0.0
        %887 = vmatprep.subr.mxu0 0.0
        %888 = vmatpush1.msra.mxu0 0.0
        %889 = vmatprep.subr.mxu0 0.0
        %890 = vmatpush1.msra.mxu0 0.0
        %891 = vmatprep.subr.mxu0 0.0
        %892 = vmatpush1.msra.mxu0 0.0
        %893 = vmatprep.subr.mxu0 0.0
        %894 = vmatpush1.msra.mxu0 0.0
        %895 = vmatprep.subr.mxu0 0.0
        %896 = vmatpush1.msra.mxu0 0.0
        %897 = vmatprep.subr.mxu0 0.0
        %898 = vmatpush1.msra.mxu0 0.0
        %899 = vmatprep.mubr.f32.mxu0 0.0
        %900 = vmatmul.mubr.f32.gmra.mrb[0].mxu0 %v833
        %v901 = vpop.f32.mrb[0].mxu0
        %v902 = vadd.f32 0.0, %v901
        %v903 = vpop.f32.mrb[0].mxu0
        %904 = vdwg.mxu0
        %v905 = vadd.f32 %v824, %v902
        %906 = vst.msk [vmem:[%s270] sm:$0xff] %vm315, %v905
        %v907 = vld [vmem:[%s822 + $0x1] sm:$0xff]
        %v908 = vld [vmem:[%s270] sm:$0xff]
        %s909 = scalar_lea.vmem %s2, 336
        %v910 = vld [vmem:[%s909] sm:$0xff]
        %v911 = vld [vmem:[%s909 + $0x8] sm:$0xff]
        %v912 = vld [vmem:[%s909 + $0x10] sm:$0xff]
        %v913 = vld [vmem:[%s909 + $0x18] sm:$0xff]
        %v914 = vld [vmem:[%s909 + $0x20] sm:$0xff]
        %v915 = vld [vmem:[%s909 + $0x28] sm:$0xff]
        %v917 = vsel %vm325, %v907, 0
        %919 = vmatprep.subr.mxu0 0.0
        %920 = vmatpush1.msra.mxu0 %v910
        %921 = vmatprep.subr.mxu0 0.0
        %922 = vmatpush1.msra.mxu0 %v911
        %923 = vmatprep.subr.mxu0 0.0
        %924 = vmatpush1.msra.mxu0 %v912
        %925 = vmatprep.subr.mxu0 0.0
        %926 = vmatpush1.msra.mxu0 %v913
        %927 = vmatprep.subr.mxu0 0.0
        %928 = vmatpush1.msra.mxu0 %v914
        %929 = vmatprep.subr.mxu0 0.0
        %930 = vmatpush1.msra.mxu0 %v915
        %931 = vmatprep.subr.mxu0 0.0
        %932 = vmatpush1.msra.mxu0 0.0
        %933 = vmatprep.subr.mxu0 0.0
        %934 = vmatpush1.msra.mxu0 0.0
        %935 = vmatprep.subr.mxu0 0.0
        %936 = vmatpush1.msra.mxu0 0.0
        %937 = vmatprep.subr.mxu0 0.0
        %938 = vmatpush1.msra.mxu0 0.0
        %939 = vmatprep.subr.mxu0 0.0
        %940 = vmatpush1.msra.mxu0 0.0
        %941 = vmatprep.subr.mxu0 0.0
        %942 = vmatpush1.msra.mxu0 0.0
        %943 = vmatprep.subr.mxu0 0.0
        %944 = vmatpush1.msra.mxu0 0.0
        %945 = vmatprep.subr.mxu0 0.0
        %946 = vmatpush1.msra.mxu0 0.0
        %947 = vmatprep.subr.mxu0 0.0
        %948 = vmatpush1.msra.mxu0 0.0
        %949 = vmatprep.subr.mxu0 0.0
        %950 = vmatpush1.msra.mxu0 0.0
        %951 = vmatprep.subr.mxu0 0.0
        %952 = vmatpush1.msra.mxu0 0.0
        %953 = vmatprep.subr.mxu0 0.0
        %954 = vmatpush1.msra.mxu0 0.0
        %955 = vmatprep.subr.mxu0 0.0
        %956 = vmatpush1.msra.mxu0 0.0
        %957 = vmatprep.subr.mxu0 0.0
        %958 = vmatpush1.msra.mxu0 0.0
        %959 = vmatprep.subr.mxu0 0.0
        %960 = vmatpush1.msra.mxu0 0.0
        %961 = vmatprep.subr.mxu0 0.0
        %962 = vmatpush1.msra.mxu0 0.0
        %963 = vmatprep.subr.mxu0 0.0
        %964 = vmatpush1.msra.mxu0 0.0
        %965 = vmatprep.subr.mxu0 0.0
        %966 = vmatpush1.msra.mxu0 0.0
        %967 = vmatprep.subr.mxu0 0.0
        %968 = vmatpush1.msra.mxu0 0.0
        %969 = vmatprep.subr.mxu0 0.0
        %970 = vmatpush1.msra.mxu0 0.0
        %971 = vmatprep.subr.mxu0 0.0
        %972 = vmatpush1.msra.mxu0 0.0
        %973 = vmatprep.subr.mxu0 0.0
        %974 = vmatpush1.msra.mxu0 0.0
        %975 = vmatprep.subr.mxu0 0.0
        %976 = vmatpush1.msra.mxu0 0.0
        %977 = vmatprep.subr.mxu0 0.0
        %978 = vmatpush1.msra.mxu0 0.0
        %979 = vmatprep.subr.mxu0 0.0
        %980 = vmatpush1.msra.mxu0 0.0
        %981 = vmatprep.subr.mxu0 0.0
        %982 = vmatpush1.msra.mxu0 0.0
        %983 = vmatprep.mubr.f32.mxu0 0.0
        %984 = vmatmul.mubr.f32.gmra.mrb[0].mxu0 %v917
        %v985 = vpop.f32.mrb[0].mxu0
        %v986 = vadd.f32 0.0, %v985
        %v987 = vpop.f32.mrb[0].mxu0
        %988 = vdwg.mxu0
        %v989 = vadd.f32 %v908, %v986
        %990 = vst.msk [vmem:[%s270] sm:$0xff] %vm315, %v989
        %v991 = vld [vmem:[%s822 + $0x2] sm:$0xff]
        %v992 = vld [vmem:[%s270] sm:$0xff]
        %s993 = scalar_lea.vmem %s2, 384
        %v994 = vld [vmem:[%s993] sm:$0xff]
        %v995 = vld [vmem:[%s993 + $0x8] sm:$0xff]
        %v996 = vld [vmem:[%s993 + $0x10] sm:$0xff]
        %v997 = vld [vmem:[%s993 + $0x18] sm:$0xff]
        %v998 = vld [vmem:[%s993 + $0x20] sm:$0xff]
        %v999 = vld [vmem:[%s993 + $0x28] sm:$0xff]
        %v1001 = vsel %vm325, %v991, 0
        %1003 = vmatprep.subr.mxu0 0.0
        %1004 = vmatpush1.msra.mxu0 %v994
        %1005 = vmatprep.subr.mxu0 0.0
        %1006 = vmatpush1.msra.mxu0 %v995
        %1007 = vmatprep.subr.mxu0 0.0
        %1008 = vmatpush1.msra.mxu0 %v996
        %1009 = vmatprep.subr.mxu0 0.0
        %1010 = vmatpush1.msra.mxu0 %v997
        %1011 = vmatprep.subr.mxu0 0.0
        %1012 = vmatpush1.msra.mxu0 %v998
        %1013 = vmatprep.subr.mxu0 0.0
        %1014 = vmatpush1.msra.mxu0 %v999
        %1015 = vmatprep.subr.mxu0 0.0
        %1016 = vmatpush1.msra.mxu0 0.0
        %1017 = vmatprep.subr.mxu0 0.0
        %1018 = vmatpush1.msra.mxu0 0.0
        %1019 = vmatprep.subr.mxu0 0.0
        %1020 = vmatpush1.msra.mxu0 0.0
        %1021 = vmatprep.subr.mxu0 0.0
        %1022 = vmatpush1.msra.mxu0 0.0
        %1023 = vmatprep.subr.mxu0 0.0
        %1024 = vmatpush1.msra.mxu0 0.0
        %1025 = vmatprep.subr.mxu0 0.0
        %1026 = vmatpush1.msra.mxu0 0.0
        %1027 = vmatprep.subr.mxu0 0.0
        %1028 = vmatpush1.msra.mxu0 0.0
        %1029 = vmatprep.subr.mxu0 0.0
        %1030 = vmatpush1.msra.mxu0 0.0
        %1031 = vmatprep.subr.mxu0 0.0
        %1032 = vmatpush1.msra.mxu0 0.0
        %1033 = vmatprep.subr.mxu0 0.0
        %1034 = vmatpush1.msra.mxu0 0.0
        %1035 = vmatprep.subr.mxu0 0.0
        %1036 = vmatpush1.msra.mxu0 0.0
        %1037 = vmatprep.subr.mxu0 0.0
        %1038 = vmatpush1.msra.mxu0 0.0
        %1039 = vmatprep.subr.mxu0 0.0
        %1040 = vmatpush1.msra.mxu0 0.0
        %1041 = vmatprep.subr.mxu0 0.0
        %1042 = vmatpush1.msra.mxu0 0.0
        %1043 = vmatprep.subr.mxu0 0.0
        %1044 = vmatpush1.msra.mxu0 0.0
        %1045 = vmatprep.subr.mxu0 0.0
        %1046 = vmatpush1.msra.mxu0 0.0
        %1047 = vmatprep.subr.mxu0 0.0
        %1048 = vmatpush1.msra.mxu0 0.0
        %1049 = vmatprep.subr.mxu0 0.0
        %1050 = vmatpush1.msra.mxu0 0.0
        %1051 = vmatprep.subr.mxu0 0.0
        %1052 = vmatpush1.msra.mxu0 0.0
        %1053 = vmatprep.subr.mxu0 0.0
        %1054 = vmatpush1.msra.mxu0 0.0
        %1055 = vmatprep.subr.mxu0 0.0
        %1056 = vmatpush1.msra.mxu0 0.0
        %1057 = vmatprep.subr.mxu0 0.0
        %1058 = vmatpush1.msra.mxu0 0.0
        %1059 = vmatprep.subr.mxu0 0.0
        %1060 = vmatpush1.msra.mxu0 0.0
        %1061 = vmatprep.subr.mxu0 0.0
        %1062 = vmatpush1.msra.mxu0 0.0
        %1063 = vmatprep.subr.mxu0 0.0
        %1064 = vmatpush1.msra.mxu0 0.0
        %1065 = vmatprep.subr.mxu0 0.0
        %1066 = vmatpush1.msra.mxu0 0.0
        %1067 = vmatprep.mubr.f32.mxu0 0.0
        %1068 = vmatmul.mubr.f32.gmra.mrb[0].mxu0 %v1001
        %v1069 = vpop.f32.mrb[0].mxu0
        %v1070 = vadd.f32 0.0, %v1069
        %v1071 = vpop.f32.mrb[0].mxu0
        %1072 = vdwg.mxu0
        %v1073 = vadd.f32 %v992, %v1070
        %1074 = vst.msk [vmem:[%s270] sm:$0xff] %vm315, %v1073
        %s1075 = scalar_lea.vmem %s270, 8 [#allocation2]
        %1076 = vst.msk [vmem:[%s1075] sm:$0xff] %vm315, %v313
        %v1077 = vld [vmem:[%s569] sm:$0xff]
        %v1078 = vld [vmem:[%s1075] sm:$0xff]
        %v1079 = vld [vmem:[%s2] sm:$0xff]
        %v1080 = vld [vmem:[%s2 + $0x8] sm:$0xff]
        %v1081 = vld [vmem:[%s2 + $0x10] sm:$0xff]
        %v1082 = vld [vmem:[%s2 + $0x18] sm:$0xff]
        %v1083 = vld [vmem:[%s2 + $0x20] sm:$0xff]
        %v1084 = vld [vmem:[%s2 + $0x28] sm:$0xff]
        %v1086 = vsel %vm325, %v1077, 0
        %1088 = vmatprep.subr.mxu0 0.0
        %1089 = vmatpush1.msra.mxu0 %v1079
        %1090 = vmatprep.subr.mxu0 0.0
        %1091 = vmatpush1.msra.mxu0 %v1080
        %1092 = vmatprep.subr.mxu0 0.0
        %1093 = vmatpush1.msra.mxu0 %v1081
        %1094 = vmatprep.subr.mxu0 0.0
        %1095 = vmatpush1.msra.mxu0 %v1082
        %1096 = vmatprep.subr.mxu0 0.0
        %1097 = vmatpush1.msra.mxu0 %v1083
        %1098 = vmatprep.subr.mxu0 0.0
        %1099 = vmatpush1.msra.mxu0 %v1084
        %1100 = vmatprep.subr.mxu0 0.0
        %1101 = vmatpush1.msra.mxu0 0.0
        %1102 = vmatprep.subr.mxu0 0.0
        %1103 = vmatpush1.msra.mxu0 0.0
        %1104 = vmatprep.subr.mxu0 0.0
        %1105 = vmatpush1.msra.mxu0 0.0
        %1106 = vmatprep.subr.mxu0 0.0
        %1107 = vmatpush1.msra.mxu0 0.0
        %1108 = vmatprep.subr.mxu0 0.0
        %1109 = vmatpush1.msra.mxu0 0.0
        %1110 = vmatprep.subr.mxu0 0.0
        %1111 = vmatpush1.msra.mxu0 0.0
        %1112 = vmatprep.subr.mxu0 0.0
        %1113 = vmatpush1.msra.mxu0 0.0
        %1114 = vmatprep.subr.mxu0 0.0
        %1115 = vmatpush1.msra.mxu0 0.0
        %1116 = vmatprep.subr.mxu0 0.0
        %1117 = vmatpush1.msra.mxu0 0.0
        %1118 = vmatprep.subr.mxu0 0.0
        %1119 = vmatpush1.msra.mxu0 0.0
        %1120 = vmatprep.subr.mxu0 0.0
        %1121 = vmatpush1.msra.mxu0 0.0
        %1122 = vmatprep.subr.mxu0 0.0
        %1123 = vmatpush1.msra.mxu0 0.0
        %1124 = vmatprep.subr.mxu0 0.0
        %1125 = vmatpush1.msra.mxu0 0.0
        %1126 = vmatprep.subr.mxu0 0.0
        %1127 = vmatpush1.msra.mxu0 0.0
        %1128 = vmatprep.subr.mxu0 0.0
        %1129 = vmatpush1.msra.mxu0 0.0
        %1130 = vmatprep.subr.mxu0 0.0
        %1131 = vmatpush1.msra.mxu0 0.0
        %1132 = vmatprep.subr.mxu0 0.0
        %1133 = vmatpush1.msra.mxu0 0.0
        %1134 = vmatprep.subr.mxu0 0.0
        %1135 = vmatpush1.msra.mxu0 0.0
        %1136 = vmatprep.subr.mxu0 0.0
        %1137 = vmatpush1.msra.mxu0 0.0
        %1138 = vmatprep.subr.mxu0 0.0
        %1139 = vmatpush1.msra.mxu0 0.0
        %1140 = vmatprep.subr.mxu0 0.0
        %1141 = vmatpush1.msra.mxu0 0.0
        %1142 = vmatprep.subr.mxu0 0.0
        %1143 = vmatpush1.msra.mxu0 0.0
        %1144 = vmatprep.subr.mxu0 0.0
        %1145 = vmatpush1.msra.mxu0 0.0
        %1146 = vmatprep.subr.mxu0 0.0
        %1147 = vmatpush1.msra.mxu0 0.0
        %1148 = vmatprep.subr.mxu0 0.0
        %1149 = vmatpush1.msra.mxu0 0.0
        %1150 = vmatprep.subr.mxu0 0.0
        %1151 = vmatpush1.msra.mxu0 0.0
        %1152 = vmatprep.mubr.f32.mxu0 0.0
        %1153 = vmatmul.mubr.f32.gmra.mrb[0].mxu0 %v1086
        %v1154 = vpop.f32.mrb[0].mxu0
        %v1155 = vadd.f32 0.0, %v1154
        %v1156 = vpop.f32.mrb[0].mxu0
        %1157 = vdwg.mxu0
        %v1158 = vadd.f32 %v1078, %v1155
        %1159 = vst.msk [vmem:[%s1075] sm:$0xff] %vm315, %v1158
        %v1160 = vld [vmem:[%s569 + $0x1] sm:$0xff]
        %v1161 = vld [vmem:[%s1075] sm:$0xff]
        %v1162 = vld [vmem:[%s403] sm:$0xff]
        %v1163 = vld [vmem:[%s403 + $0x8] sm:$0xff]
        %v1164 = vld [vmem:[%s403 + $0x10] sm:$0xff]
        %v1165 = vld [vmem:[%s403 + $0x18] sm:$0xff]
        %v1166 = vld [vmem:[%s403 + $0x20] sm:$0xff]
        %v1167 = vld [vmem:[%s403 + $0x28] sm:$0xff]
        %v1169 = vsel %vm325, %v1160, 0
        %1171 = vmatprep.subr.mxu0 0.0
        %1172 = vmatpush1.msra.mxu0 %v1162
        %1173 = vmatprep.subr.mxu0 0.0
        %1174 = vmatpush1.msra.mxu0 %v1163
        %1175 = vmatprep.subr.mxu0 0.0
        %1176 = vmatpush1.msra.mxu0 %v1164
        %1177 = vmatprep.subr.mxu0 0.0
        %1178 = vmatpush1.msra.mxu0 %v1165
        %1179 = vmatprep.subr.mxu0 0.0
        %1180 = vmatpush1.msra.mxu0 %v1166
        %1181 = vmatprep.subr.mxu0 0.0
        %1182 = vmatpush1.msra.mxu0 %v1167
        %1183 = vmatprep.subr.mxu0 0.0
        %1184 = vmatpush1.msra.mxu0 0.0
        %1185 = vmatprep.subr.mxu0 0.0
        %1186 = vmatpush1.msra.mxu0 0.0
        %1187 = vmatprep.subr.mxu0 0.0
        %1188 = vmatpush1.msra.mxu0 0.0
        %1189 = vmatprep.subr.mxu0 0.0
        %1190 = vmatpush1.msra.mxu0 0.0
        %1191 = vmatprep.subr.mxu0 0.0
        %1192 = vmatpush1.msra.mxu0 0.0
        %1193 = vmatprep.subr.mxu0 0.0
        %1194 = vmatpush1.msra.mxu0 0.0
        %1195 = vmatprep.subr.mxu0 0.0
        %1196 = vmatpush1.msra.mxu0 0.0
        %1197 = vmatprep.subr.mxu0 0.0
        %1198 = vmatpush1.msra.mxu0 0.0
        %1199 = vmatprep.subr.mxu0 0.0
        %1200 = vmatpush1.msra.mxu0 0.0
        %1201 = vmatprep.subr.mxu0 0.0
        %1202 = vmatpush1.msra.mxu0 0.0
        %1203 = vmatprep.subr.mxu0 0.0
        %1204 = vmatpush1.msra.mxu0 0.0
        %1205 = vmatprep.subr.mxu0 0.0
        %1206 = vmatpush1.msra.mxu0 0.0
        %1207 = vmatprep.subr.mxu0 0.0
        %1208 = vmatpush1.msra.mxu0 0.0
        %1209 = vmatprep.subr.mxu0 0.0
        %1210 = vmatpush1.msra.mxu0 0.0
        %1211 = vmatprep.subr.mxu0 0.0
        %1212 = vmatpush1.msra.mxu0 0.0
        %1213 = vmatprep.subr.mxu0 0.0
        %1214 = vmatpush1.msra.mxu0 0.0
        %1215 = vmatprep.subr.mxu0 0.0
        %1216 = vmatpush1.msra.mxu0 0.0
        %1217 = vmatprep.subr.mxu0 0.0
        %1218 = vmatpush1.msra.mxu0 0.0
        %1219 = vmatprep.subr.mxu0 0.0
        %1220 = vmatpush1.msra.mxu0 0.0
        %1221 = vmatprep.subr.mxu0 0.0
        %1222 = vmatpush1.msra.mxu0 0.0
        %1223 = vmatprep.subr.mxu0 0.0
        %1224 = vmatpush1.msra.mxu0 0.0
        %1225 = vmatprep.subr.mxu0 0.0
        %1226 = vmatpush1.msra.mxu0 0.0
        %1227 = vmatprep.subr.mxu0 0.0
        %1228 = vmatpush1.msra.mxu0 0.0
        %1229 = vmatprep.subr.mxu0 0.0
        %1230 = vmatpush1.msra.mxu0 0.0
        %1231 = vmatprep.subr.mxu0 0.0
        %1232 = vmatpush1.msra.mxu0 0.0
        %1233 = vmatprep.subr.mxu0 0.0
        %1234 = vmatpush1.msra.mxu0 0.0
        %1235 = vmatprep.mubr.f32.mxu0 0.0
        %1236 = vmatmul.mubr.f32.gmra.mrb[0].mxu0 %v1169
        %v1237 = vpop.f32.mrb[0].mxu0
        %v1238 = vadd.f32 0.0, %v1237
        %v1239 = vpop.f32.mrb[0].mxu0
        %1240 = vdwg.mxu0
        %v1241 = vadd.f32 %v1161, %v1238
        %1242 = vst.msk [vmem:[%s1075] sm:$0xff] %vm315, %v1241
        %v1243 = vld [vmem:[%s569 + $0x2] sm:$0xff]
        %v1244 = vld [vmem:[%s1075] sm:$0xff]
        %v1245 = vld [vmem:[%s487] sm:$0xff]
        %v1246 = vld [vmem:[%s487 + $0x8] sm:$0xff]
        %v1247 = vld [vmem:[%s487 + $0x10] sm:$0xff]
        %v1248 = vld [vmem:[%s487 + $0x18] sm:$0xff]
        %v1249 = vld [vmem:[%s487 + $0x20] sm:$0xff]
        %v1250 = vld [vmem:[%s487 + $0x28] sm:$0xff]
        %v1252 = vsel %vm325, %v1243, 0
        %1254 = vmatprep.subr.mxu0 0.0
        %1255 = vmatpush1.msra.mxu0 %v1245
        %1256 = vmatprep.subr.mxu0 0.0
        %1257 = vmatpush1.msra.mxu0 %v1246
        %1258 = vmatprep.subr.mxu0 0.0
        %1259 = vmatpush1.msra.mxu0 %v1247
        %1260 = vmatprep.subr.mxu0 0.0
        %1261 = vmatpush1.msra.mxu0 %v1248
        %1262 = vmatprep.subr.mxu0 0.0
        %1263 = vmatpush1.msra.mxu0 %v1249
        %1264 = vmatprep.subr.mxu0 0.0
        %1265 = vmatpush1.msra.mxu0 %v1250
        %1266 = vmatprep.subr.mxu0 0.0
        %1267 = vmatpush1.msra.mxu0 0.0
        %1268 = vmatprep.subr.mxu0 0.0
        %1269 = vmatpush1.msra.mxu0 0.0
        %1270 = vmatprep.subr.mxu0 0.0
        %1271 = vmatpush1.msra.mxu0 0.0
        %1272 = vmatprep.subr.mxu0 0.0
        %1273 = vmatpush1.msra.mxu0 0.0
        %1274 = vmatprep.subr.mxu0 0.0
        %1275 = vmatpush1.msra.mxu0 0.0
        %1276 = vmatprep.subr.mxu0 0.0
        %1277 = vmatpush1.msra.mxu0 0.0
        %1278 = vmatprep.subr.mxu0 0.0
        %1279 = vmatpush1.msra.mxu0 0.0
        %1280 = vmatprep.subr.mxu0 0.0
        %1281 = vmatpush1.msra.mxu0 0.0
        %1282 = vmatprep.subr.mxu0 0.0
        %1283 = vmatpush1.msra.mxu0 0.0
        %1284 = vmatprep.subr.mxu0 0.0
        %1285 = vmatpush1.msra.mxu0 0.0
        %1286 = vmatprep.subr.mxu0 0.0
        %1287 = vmatpush1.msra.mxu0 0.0
        %1288 = vmatprep.subr.mxu0 0.0
        %1289 = vmatpush1.msra.mxu0 0.0
        %1290 = vmatprep.subr.mxu0 0.0
        %1291 = vmatpush1.msra.mxu0 0.0
        %1292 = vmatprep.subr.mxu0 0.0
        %1293 = vmatpush1.msra.mxu0 0.0
        %1294 = vmatprep.subr.mxu0 0.0
        %1295 = vmatpush1.msra.mxu0 0.0
        %1296 = vmatprep.subr.mxu0 0.0
        %1297 = vmatpush1.msra.mxu0 0.0
        %1298 = vmatprep.subr.mxu0 0.0
        %1299 = vmatpush1.msra.mxu0 0.0
        %1300 = vmatprep.subr.mxu0 0.0
        %1301 = vmatpush1.msra.mxu0 0.0
        %1302 = vmatprep.subr.mxu0 0.0
        %1303 = vmatpush1.msra.mxu0 0.0
        %1304 = vmatprep.subr.mxu0 0.0
        %1305 = vmatpush1.msra.mxu0 0.0
        %1306 = vmatprep.subr.mxu0 0.0
        %1307 = vmatpush1.msra.mxu0 0.0
        %1308 = vmatprep.subr.mxu0 0.0
        %1309 = vmatpush1.msra.mxu0 0.0
        %1310 = vmatprep.subr.mxu0 0.0
        %1311 = vmatpush1.msra.mxu0 0.0
        %1312 = vmatprep.subr.mxu0 0.0
        %1313 = vmatpush1.msra.mxu0 0.0
        %1314 = vmatprep.subr.mxu0 0.0
        %1315 = vmatpush1.msra.mxu0 0.0
        %1316 = vmatprep.subr.mxu0 0.0
        %1317 = vmatpush1.msra.mxu0 0.0
        %1318 = vmatprep.mubr.f32.mxu0 0.0
        %1319 = vmatmul.mubr.f32.gmra.mrb[0].mxu0 %v1252
        %v1320 = vpop.f32.mrb[0].mxu0
        %v1321 = vadd.f32 0.0, %v1320
        %v1322 = vpop.f32.mrb[0].mxu0
        %1323 = vdwg.mxu0
        %v1324 = vadd.f32 %v1244, %v1321
        %1325 = vst.msk [vmem:[%s1075] sm:$0xff] %vm315, %v1324
        %v1326 = vld [vmem:[%s822] sm:$0xff]
        %v1327 = vld [vmem:[%s1075] sm:$0xff]
        %v1328 = vld [vmem:[%s572] sm:$0xff]
        %v1329 = vld [vmem:[%s572 + $0x8] sm:$0xff]
        %v1330 = vld [vmem:[%s572 + $0x10] sm:$0xff]
        %v1331 = vld [vmem:[%s572 + $0x18] sm:$0xff]
        %v1332 = vld [vmem:[%s572 + $0x20] sm:$0xff]
        %v1333 = vld [vmem:[%s572 + $0x28] sm:$0xff]
        %v1335 = vsel %vm325, %v1326, 0
        %1337 = vmatprep.subr.mxu0 0.0
        %1338 = vmatpush1.msra.mxu0 %v1328
        %1339 = vmatprep.subr.mxu0 0.0
        %1340 = vmatpush1.msra.mxu0 %v1329
        %1341 = vmatprep.subr.mxu0 0.0
        %1342 = vmatpush1.msra.mxu0 %v1330
        %1343 = vmatprep.subr.mxu0 0.0
        %1344 = vmatpush1.msra.mxu0 %v1331
        %1345 = vmatprep.subr.mxu0 0.0
        %1346 = vmatpush1.msra.mxu0 %v1332
        %1347 = vmatprep.subr.mxu0 0.0
        %1348 = vmatpush1.msra.mxu0 %v1333
        %1349 = vmatprep.subr.mxu0 0.0
        %1350 = vmatpush1.msra.mxu0 0.0
        %1351 = vmatprep.subr.mxu0 0.0
        %1352 = vmatpush1.msra.mxu0 0.0
        %1353 = vmatprep.subr.mxu0 0.0
        %1354 = vmatpush1.msra.mxu0 0.0
        %1355 = vmatprep.subr.mxu0 0.0
        %1356 = vmatpush1.msra.mxu0 0.0
        %1357 = vmatprep.subr.mxu0 0.0
        %1358 = vmatpush1.msra.mxu0 0.0
        %1359 = vmatprep.subr.mxu0 0.0
        %1360 = vmatpush1.msra.mxu0 0.0
        %1361 = vmatprep.subr.mxu0 0.0
        %1362 = vmatpush1.msra.mxu0 0.0
        %1363 = vmatprep.subr.mxu0 0.0
        %1364 = vmatpush1.msra.mxu0 0.0
        %1365 = vmatprep.subr.mxu0 0.0
        %1366 = vmatpush1.msra.mxu0 0.0
        %1367 = vmatprep.subr.mxu0 0.0
        %1368 = vmatpush1.msra.mxu0 0.0
        %1369 = vmatprep.subr.mxu0 0.0
        %1370 = vmatpush1.msra.mxu0 0.0
        %1371 = vmatprep.subr.mxu0 0.0
        %1372 = vmatpush1.msra.mxu0 0.0
        %1373 = vmatprep.subr.mxu0 0.0
        %1374 = vmatpush1.msra.mxu0 0.0
        %1375 = vmatprep.subr.mxu0 0.0
        %1376 = vmatpush1.msra.mxu0 0.0
        %1377 = vmatprep.subr.mxu0 0.0
        %1378 = vmatpush1.msra.mxu0 0.0
        %1379 = vmatprep.subr.mxu0 0.0
        %1380 = vmatpush1.msra.mxu0 0.0
        %1381 = vmatprep.subr.mxu0 0.0
        %1382 = vmatpush1.msra.mxu0 0.0
        %1383 = vmatprep.subr.mxu0 0.0
        %1384 = vmatpush1.msra.mxu0 0.0
        %1385 = vmatprep.subr.mxu0 0.0
        %1386 = vmatpush1.msra.mxu0 0.0
        %1387 = vmatprep.subr.mxu0 0.0
        %1388 = vmatpush1.msra.mxu0 0.0
        %1389 = vmatprep.subr.mxu0 0.0
        %1390 = vmatpush1.msra.mxu0 0.0
        %1391 = vmatprep.subr.mxu0 0.0
        %1392 = vmatpush1.msra.mxu0 0.0
        %1393 = vmatprep.subr.mxu0 0.0
        %1394 = vmatpush1.msra.mxu0 0.0
        %1395 = vmatprep.subr.mxu0 0.0
        %1396 = vmatpush1.msra.mxu0 0.0
        %1397 = vmatprep.subr.mxu0 0.0
        %1398 = vmatpush1.msra.mxu0 0.0
        %1399 = vmatprep.subr.mxu0 0.0
        %1400 = vmatpush1.msra.mxu0 0.0
        %1401 = vmatprep.mubr.f32.mxu0 0.0
        %1402 = vmatmul.mubr.f32.gmra.mrb[0].mxu0 %v1335
        %v1403 = vpop.f32.mrb[0].mxu0
        %v1404 = vadd.f32 0.0, %v1403
        %v1405 = vpop.f32.mrb[0].mxu0
        %1406 = vdwg.mxu0
        %v1407 = vadd.f32 %v1327, %v1404
        %1408 = vst.msk [vmem:[%s1075] sm:$0xff] %vm315, %v1407
        %v1409 = vld [vmem:[%s822 + $0x1] sm:$0xff]
        %v1410 = vld [vmem:[%s1075] sm:$0xff]
        %v1411 = vld [vmem:[%s656] sm:$0xff]
        %v1412 = vld [vmem:[%s656 + $0x8] sm:$0xff]
        %v1413 = vld [vmem:[%s656 + $0x10] sm:$0xff]
        %v1414 = vld [vmem:[%s656 + $0x18] sm:$0xff]
        %v1415 = vld [vmem:[%s656 + $0x20] sm:$0xff]
        %v1416 = vld [vmem:[%s656 + $0x28] sm:$0xff]
        %v1418 = vsel %vm325, %v1409, 0
        %1420 = vmatprep.subr.mxu0 0.0
        %1421 = vmatpush1.msra.mxu0 %v1411
        %1422 = vmatprep.subr.mxu0 0.0
        %1423 = vmatpush1.msra.mxu0 %v1412
        %1424 = vmatprep.subr.mxu0 0.0
        %1425 = vmatpush1.msra.mxu0 %v1413
        %1426 = vmatprep.subr.mxu0 0.0
        %1427 = vmatpush1.msra.mxu0 %v1414
        %1428 = vmatprep.subr.mxu0 0.0
        %1429 = vmatpush1.msra.mxu0 %v1415
        %1430 = vmatprep.subr.mxu0 0.0
        %1431 = vmatpush1.msra.mxu0 %v1416
        %1432 = vmatprep.subr.mxu0 0.0
        %1433 = vmatpush1.msra.mxu0 0.0
        %1434 = vmatprep.subr.mxu0 0.0
        %1435 = vmatpush1.msra.mxu0 0.0
        %1436 = vmatprep.subr.mxu0 0.0
        %1437 = vmatpush1.msra.mxu0 0.0
        %1438 = vmatprep.subr.mxu0 0.0
        %1439 = vmatpush1.msra.mxu0 0.0
        %1440 = vmatprep.subr.mxu0 0.0
        %1441 = vmatpush1.msra.mxu0 0.0
        %1442 = vmatprep.subr.mxu0 0.0
        %1443 = vmatpush1.msra.mxu0 0.0
        %1444 = vmatprep.subr.mxu0 0.0
        %1445 = vmatpush1.msra.mxu0 0.0
        %1446 = vmatprep.subr.mxu0 0.0
        %1447 = vmatpush1.msra.mxu0 0.0
        %1448 = vmatprep.subr.mxu0 0.0
        %1449 = vmatpush1.msra.mxu0 0.0
        %1450 = vmatprep.subr.mxu0 0.0
        %1451 = vmatpush1.msra.mxu0 0.0
        %1452 = vmatprep.subr.mxu0 0.0
        %1453 = vmatpush1.msra.mxu0 0.0
        %1454 = vmatprep.subr.mxu0 0.0
        %1455 = vmatpush1.msra.mxu0 0.0
        %1456 = vmatprep.subr.mxu0 0.0
        %1457 = vmatpush1.msra.mxu0 0.0
        %1458 = vmatprep.subr.mxu0 0.0
        %1459 = vmatpush1.msra.mxu0 0.0
        %1460 = vmatprep.subr.mxu0 0.0
        %1461 = vmatpush1.msra.mxu0 0.0
        %1462 = vmatprep.subr.mxu0 0.0
        %1463 = vmatpush1.msra.mxu0 0.0
        %1464 = vmatprep.subr.mxu0 0.0
        %1465 = vmatpush1.msra.mxu0 0.0
        %1466 = vmatprep.subr.mxu0 0.0
        %1467 = vmatpush1.msra.mxu0 0.0
        %1468 = vmatprep.subr.mxu0 0.0
        %1469 = vmatpush1.msra.mxu0 0.0
        %1470 = vmatprep.subr.mxu0 0.0
        %1471 = vmatpush1.msra.mxu0 0.0
        %1472 = vmatprep.subr.mxu0 0.0
        %1473 = vmatpush1.msra.mxu0 0.0
        %1474 = vmatprep.subr.mxu0 0.0
        %1475 = vmatpush1.msra.mxu0 0.0
        %1476 = vmatprep.subr.mxu0 0.0
        %1477 = vmatpush1.msra.mxu0 0.0
        %1478 = vmatprep.subr.mxu0 0.0
        %1479 = vmatpush1.msra.mxu0 0.0
        %1480 = vmatprep.subr.mxu0 0.0
        %1481 = vmatpush1.msra.mxu0 0.0
        %1482 = vmatprep.subr.mxu0 0.0
        %1483 = vmatpush1.msra.mxu0 0.0
        %1484 = vmatprep.mubr.f32.mxu0 0.0
        %1485 = vmatmul.mubr.f32.gmra.mrb[0].mxu0 %v1418
        %v1486 = vpop.f32.mrb[0].mxu0
        %v1487 = vadd.f32 0.0, %v1486
        %v1488 = vpop.f32.mrb[0].mxu0
        %1489 = vdwg.mxu0
        %v1490 = vadd.f32 %v1410, %v1487
        %1491 = vst.msk [vmem:[%s1075] sm:$0xff] %vm315, %v1490
        %v1492 = vld [vmem:[%s822 + $0x2] sm:$0xff]
        %v1493 = vld [vmem:[%s1075] sm:$0xff]
        %v1494 = vld [vmem:[%s740] sm:$0xff]
        %v1495 = vld [vmem:[%s740 + $0x8] sm:$0xff]
        %v1496 = vld [vmem:[%s740 + $0x10] sm:$0xff]
        %v1497 = vld [vmem:[%s740 + $0x18] sm:$0xff]
        %v1498 = vld [vmem:[%s740 + $0x20] sm:$0xff]
        %v1499 = vld [vmem:[%s740 + $0x28] sm:$0xff]
        %v1501 = vsel %vm325, %v1492, 0
        %1503 = vmatprep.subr.mxu0 0.0
        %1504 = vmatpush1.msra.mxu0 %v1494
        %1505 = vmatprep.subr.mxu0 0.0
        %1506 = vmatpush1.msra.mxu0 %v1495
        %1507 = vmatprep.subr.mxu0 0.0
        %1508 = vmatpush1.msra.mxu0 %v1496
        %1509 = vmatprep.subr.mxu0 0.0
        %1510 = vmatpush1.msra.mxu0 %v1497
        %1511 = vmatprep.subr.mxu0 0.0
        %1512 = vmatpush1.msra.mxu0 %v1498
        %1513 = vmatprep.subr.mxu0 0.0
        %1514 = vmatpush1.msra.mxu0 %v1499
        %1515 = vmatprep.subr.mxu0 0.0
        %1516 = vmatpush1.msra.mxu0 0.0
        %1517 = vmatprep.subr.mxu0 0.0
        %1518 = vmatpush1.msra.mxu0 0.0
        %1519 = vmatprep.subr.mxu0 0.0
        %1520 = vmatpush1.msra.mxu0 0.0
        %1521 = vmatprep.subr.mxu0 0.0
        %1522 = vmatpush1.msra.mxu0 0.0
        %1523 = vmatprep.subr.mxu0 0.0
        %1524 = vmatpush1.msra.mxu0 0.0
        %1525 = vmatprep.subr.mxu0 0.0
        %1526 = vmatpush1.msra.mxu0 0.0
        %1527 = vmatprep.subr.mxu0 0.0
        %1528 = vmatpush1.msra.mxu0 0.0
        %1529 = vmatprep.subr.mxu0 0.0
        %1530 = vmatpush1.msra.mxu0 0.0
        %1531 = vmatprep.subr.mxu0 0.0
        %1532 = vmatpush1.msra.mxu0 0.0
        %1533 = vmatprep.subr.mxu0 0.0
        %1534 = vmatpush1.msra.mxu0 0.0
        %1535 = vmatprep.subr.mxu0 0.0
        %1536 = vmatpush1.msra.mxu0 0.0
        %1537 = vmatprep.subr.mxu0 0.0
        %1538 = vmatpush1.msra.mxu0 0.0
        %1539 = vmatprep.subr.mxu0 0.0
        %1540 = vmatpush1.msra.mxu0 0.0
        %1541 = vmatprep.subr.mxu0 0.0
        %1542 = vmatpush1.msra.mxu0 0.0
        %1543 = vmatprep.subr.mxu0 0.0
        %1544 = vmatpush1.msra.mxu0 0.0
        %1545 = vmatprep.subr.mxu0 0.0
        %1546 = vmatpush1.msra.mxu0 0.0
        %1547 = vmatprep.subr.mxu0 0.0
        %1548 = vmatpush1.msra.mxu0 0.0
        %1549 = vmatprep.subr.mxu0 0.0
        %1550 = vmatpush1.msra.mxu0 0.0
        %1551 = vmatprep.subr.mxu0 0.0
        %1552 = vmatpush1.msra.mxu0 0.0
        %1553 = vmatprep.subr.mxu0 0.0
        %1554 = vmatpush1.msra.mxu0 0.0
        %1555 = vmatprep.subr.mxu0 0.0
        %1556 = vmatpush1.msra.mxu0 0.0
        %1557 = vmatprep.subr.mxu0 0.0
        %1558 = vmatpush1.msra.mxu0 0.0
        %1559 = vmatprep.subr.mxu0 0.0
        %1560 = vmatpush1.msra.mxu0 0.0
        %1561 = vmatprep.subr.mxu0 0.0
        %1562 = vmatpush1.msra.mxu0 0.0
        %1563 = vmatprep.subr.mxu0 0.0
        %1564 = vmatpush1.msra.mxu0 0.0
        %1565 = vmatprep.subr.mxu0 0.0
        %1566 = vmatpush1.msra.mxu0 0.0
        %1567 = vmatprep.mubr.f32.mxu0 0.0
        %1568 = vmatmul.mubr.f32.gmra.mrb[0].mxu0 %v1501
        %v1569 = vpop.f32.mrb[0].mxu0
        %v1570 = vadd.f32 0.0, %v1569
        %v1571 = vpop.f32.mrb[0].mxu0
        %1572 = vdwg.mxu0
        %v1573 = vadd.f32 %v1493, %v1570
        %1574 = vst.msk [vmem:[%s1075] sm:$0xff] %vm315, %v1573
        %s1575 = scalar_lea.vmem %s285, 48
        %v1576 = vld [vmem:[%s1575] sm:$0xff]
        %v1577 = vld [vmem:[%s1075] sm:$0xff]
        %v1578 = vld [vmem:[%s825] sm:$0xff]
        %v1579 = vld [vmem:[%s825 + $0x8] sm:$0xff]
        %v1580 = vld [vmem:[%s825 + $0x10] sm:$0xff]
        %v1581 = vld [vmem:[%s825 + $0x18] sm:$0xff]
        %v1582 = vld [vmem:[%s825 + $0x20] sm:$0xff]
        %v1583 = vld [vmem:[%s825 + $0x28] sm:$0xff]
        %v1585 = vsel %vm325, %v1576, 0
        %1587 = vmatprep.subr.mxu0 0.0
        %1588 = vmatpush1.msra.mxu0 %v1578
        %1589 = vmatprep.subr.mxu0 0.0
        %1590 = vmatpush1.msra.mxu0 %v1579
        %1591 = vmatprep.subr.mxu0 0.0
        %1592 = vmatpush1.msra.mxu0 %v1580
        %1593 = vmatprep.subr.mxu0 0.0
        %1594 = vmatpush1.msra.mxu0 %v1581
        %1595 = vmatprep.subr.mxu0 0.0
        %1596 = vmatpush1.msra.mxu0 %v1582
        %1597 = vmatprep.subr.mxu0 0.0
        %1598 = vmatpush1.msra.mxu0 %v1583
        %1599 = vmatprep.subr.mxu0 0.0
        %1600 = vmatpush1.msra.mxu0 0.0
        %1601 = vmatprep.subr.mxu0 0.0
        %1602 = vmatpush1.msra.mxu0 0.0
        %1603 = vmatprep.subr.mxu0 0.0
        %1604 = vmatpush1.msra.mxu0 0.0
        %1605 = vmatprep.subr.mxu0 0.0
        %1606 = vmatpush1.msra.mxu0 0.0
        %1607 = vmatprep.subr.mxu0 0.0
        %1608 = vmatpush1.msra.mxu0 0.0
        %1609 = vmatprep.subr.mxu0 0.0
        %1610 = vmatpush1.msra.mxu0 0.0
        %1611 = vmatprep.subr.mxu0 0.0
        %1612 = vmatpush1.msra.mxu0 0.0
        %1613 = vmatprep.subr.mxu0 0.0
        %1614 = vmatpush1.msra.mxu0 0.0
        %1615 = vmatprep.subr.mxu0 0.0
        %1616 = vmatpush1.msra.mxu0 0.0
        %1617 = vmatprep.subr.mxu0 0.0
        %1618 = vmatpush1.msra.mxu0 0.0
        %1619 = vmatprep.subr.mxu0 0.0
        %1620 = vmatpush1.msra.mxu0 0.0
        %1621 = vmatprep.subr.mxu0 0.0
        %1622 = vmatpush1.msra.mxu0 0.0
        %1623 = vmatprep.subr.mxu0 0.0
        %1624 = vmatpush1.msra.mxu0 0.0
        %1625 = vmatprep.subr.mxu0 0.0
        %1626 = vmatpush1.msra.mxu0 0.0
        %1627 = vmatprep.subr.mxu0 0.0
        %1628 = vmatpush1.msra.mxu0 0.0
        %1629 = vmatprep.subr.mxu0 0.0
        %1630 = vmatpush1.msra.mxu0 0.0
        %1631 = vmatprep.subr.mxu0 0.0
        %1632 = vmatpush1.msra.mxu0 0.0
        %1633 = vmatprep.subr.mxu0 0.0
        %1634 = vmatpush1.msra.mxu0 0.0
        %1635 = vmatprep.subr.mxu0 0.0
        %1636 = vmatpush1.msra.mxu0 0.0
        %1637 = vmatprep.subr.mxu0 0.0
        %1638 = vmatpush1.msra.mxu0 0.0
        %1639 = vmatprep.subr.mxu0 0.0
        %1640 = vmatpush1.msra.mxu0 0.0
        %1641 = vmatprep.subr.mxu0 0.0
        %1642 = vmatpush1.msra.mxu0 0.0
        %1643 = vmatprep.subr.mxu0 0.0
        %1644 = vmatpush1.msra.mxu0 0.0
        %1645 = vmatprep.subr.mxu0 0.0
        %1646 = vmatpush1.msra.mxu0 0.0
        %1647 = vmatprep.subr.mxu0 0.0
        %1648 = vmatpush1.msra.mxu0 0.0
        %1649 = vmatprep.subr.mxu0 0.0
        %1650 = vmatpush1.msra.mxu0 0.0
        %1651 = vmatprep.mubr.f32.mxu0 0.0
        %1652 = vmatmul.mubr.f32.gmra.mrb[0].mxu0 %v1585
        %v1653 = vpop.f32.mrb[0].mxu0
        %v1654 = vadd.f32 0.0, %v1653
        %v1655 = vpop.f32.mrb[0].mxu0
        %1656 = vdwg.mxu0
        %v1657 = vadd.f32 %v1577, %v1654
        %1658 = vst.msk [vmem:[%s1075] sm:$0xff] %vm315, %v1657
        %v1659 = vld [vmem:[%s1575 + $0x1] sm:$0xff]
        %v1660 = vld [vmem:[%s1075] sm:$0xff]
        %v1661 = vld [vmem:[%s909] sm:$0xff]
        %v1662 = vld [vmem:[%s909 + $0x8] sm:$0xff]
        %v1663 = vld [vmem:[%s909 + $0x10] sm:$0xff]
        %v1664 = vld [vmem:[%s909 + $0x18] sm:$0xff]
        %v1665 = vld [vmem:[%s909 + $0x20] sm:$0xff]
        %v1666 = vld [vmem:[%s909 + $0x28] sm:$0xff]
        %v1668 = vsel %vm325, %v1659, 0
        %1670 = vmatprep.subr.mxu0 0.0
        %1671 = vmatpush1.msra.mxu0 %v1661
        %1672 = vmatprep.subr.mxu0 0.0
        %1673 = vmatpush1.msra.mxu0 %v1662
        %1674 = vmatprep.subr.mxu0 0.0
        %1675 = vmatpush1.msra.mxu0 %v1663
        %1676 = vmatprep.subr.mxu0 0.0
        %1677 = vmatpush1.msra.mxu0 %v1664
        %1678 = vmatprep.subr.mxu0 0.0
        %1679 = vmatpush1.msra.mxu0 %v1665
        %1680 = vmatprep.subr.mxu0 0.0
        %1681 = vmatpush1.msra.mxu0 %v1666
        %1682 = vmatprep.subr.mxu0 0.0
        %1683 = vmatpush1.msra.mxu0 0.0
        %1684 = vmatprep.subr.mxu0 0.0
        %1685 = vmatpush1.msra.mxu0 0.0
        %1686 = vmatprep.subr.mxu0 0.0
        %1687 = vmatpush1.msra.mxu0 0.0
        %1688 = vmatprep.subr.mxu0 0.0
        %1689 = vmatpush1.msra.mxu0 0.0
        %1690 = vmatprep.subr.mxu0 0.0
        %1691 = vmatpush1.msra.mxu0 0.0
        %1692 = vmatprep.subr.mxu0 0.0
        %1693 = vmatpush1.msra.mxu0 0.0
        %1694 = vmatprep.subr.mxu0 0.0
        %1695 = vmatpush1.msra.mxu0 0.0
        %1696 = vmatprep.subr.mxu0 0.0
        %1697 = vmatpush1.msra.mxu0 0.0
        %1698 = vmatprep.subr.mxu0 0.0
        %1699 = vmatpush1.msra.mxu0 0.0
        %1700 = vmatprep.subr.mxu0 0.0
        %1701 = vmatpush1.msra.mxu0 0.0
        %1702 = vmatprep.subr.mxu0 0.0
        %1703 = vmatpush1.msra.mxu0 0.0
        %1704 = vmatprep.subr.mxu0 0.0
        %1705 = vmatpush1.msra.mxu0 0.0
        %1706 = vmatprep.subr.mxu0 0.0
        %1707 = vmatpush1.msra.mxu0 0.0
        %1708 = vmatprep.subr.mxu0 0.0
        %1709 = vmatpush1.msra.mxu0 0.0
        %1710 = vmatprep.subr.mxu0 0.0
        %1711 = vmatpush1.msra.mxu0 0.0
        %1712 = vmatprep.subr.mxu0 0.0
        %1713 = vmatpush1.msra.mxu0 0.0
        %1714 = vmatprep.subr.mxu0 0.0
        %1715 = vmatpush1.msra.mxu0 0.0
        %1716 = vmatprep.subr.mxu0 0.0
        %1717 = vmatpush1.msra.mxu0 0.0
        %1718 = vmatprep.subr.mxu0 0.0
        %1719 = vmatpush1.msra.mxu0 0.0
        %1720 = vmatprep.subr.mxu0 0.0
        %1721 = vmatpush1.msra.mxu0 0.0
        %1722 = vmatprep.subr.mxu0 0.0
        %1723 = vmatpush1.msra.mxu0 0.0
        %1724 = vmatprep.subr.mxu0 0.0
        %1725 = vmatpush1.msra.mxu0 0.0
        %1726 = vmatprep.subr.mxu0 0.0
        %1727 = vmatpush1.msra.mxu0 0.0
        %1728 = vmatprep.subr.mxu0 0.0
        %1729 = vmatpush1.msra.mxu0 0.0
        %1730 = vmatprep.subr.mxu0 0.0
        %1731 = vmatpush1.msra.mxu0 0.0
        %1732 = vmatprep.subr.mxu0 0.0
        %1733 = vmatpush1.msra.mxu0 0.0
        %1734 = vmatprep.mubr.f32.mxu0 0.0
        %1735 = vmatmul.mubr.f32.gmra.mrb[0].mxu0 %v1668
        %v1736 = vpop.f32.mrb[0].mxu0
        %v1737 = vadd.f32 0.0, %v1736
        %v1738 = vpop.f32.mrb[0].mxu0
        %1739 = vdwg.mxu0
        %v1740 = vadd.f32 %v1660, %v1737
        %1741 = vst.msk [vmem:[%s1075] sm:$0xff] %vm315, %v1740
        %v1742 = vld [vmem:[%s1575 + $0x2] sm:$0xff]
        %v1743 = vld [vmem:[%s1075] sm:$0xff]
        %v1744 = vld [vmem:[%s993] sm:$0xff]
        %v1745 = vld [vmem:[%s993 + $0x8] sm:$0xff]
        %v1746 = vld [vmem:[%s993 + $0x10] sm:$0xff]
        %v1747 = vld [vmem:[%s993 + $0x18] sm:$0xff]
        %v1748 = vld [vmem:[%s993 + $0x20] sm:$0xff]
        %v1749 = vld [vmem:[%s993 + $0x28] sm:$0xff]
        %v1751 = vsel %vm325, %v1742, 0
        %1753 = vmatprep.subr.mxu0 0.0
        %1754 = vmatpush1.msra.mxu0 %v1744
        %1755 = vmatprep.subr.mxu0 0.0
        %1756 = vmatpush1.msra.mxu0 %v1745
        %1757 = vmatprep.subr.mxu0 0.0
        %1758 = vmatpush1.msra.mxu0 %v1746
        %1759 = vmatprep.subr.mxu0 0.0
        %1760 = vmatpush1.msra.mxu0 %v1747
        %1761 = vmatprep.subr.mxu0 0.0
        %1762 = vmatpush1.msra.mxu0 %v1748
        %1763 = vmatprep.subr.mxu0 0.0
        %1764 = vmatpush1.msra.mxu0 %v1749
        %1765 = vmatprep.subr.mxu0 0.0
        %1766 = vmatpush1.msra.mxu0 0.0
        %1767 = vmatprep.subr.mxu0 0.0
        %1768 = vmatpush1.msra.mxu0 0.0
        %1769 = vmatprep.subr.mxu0 0.0
        %1770 = vmatpush1.msra.mxu0 0.0
        %1771 = vmatprep.subr.mxu0 0.0
        %1772 = vmatpush1.msra.mxu0 0.0
        %1773 = vmatprep.subr.mxu0 0.0
        %1774 = vmatpush1.msra.mxu0 0.0
        %1775 = vmatprep.subr.mxu0 0.0
        %1776 = vmatpush1.msra.mxu0 0.0
        %1777 = vmatprep.subr.mxu0 0.0
        %1778 = vmatpush1.msra.mxu0 0.0
        %1779 = vmatprep.subr.mxu0 0.0
        %1780 = vmatpush1.msra.mxu0 0.0
        %1781 = vmatprep.subr.mxu0 0.0
        %1782 = vmatpush1.msra.mxu0 0.0
        %1783 = vmatprep.subr.mxu0 0.0
        %1784 = vmatpush1.msra.mxu0 0.0
        %1785 = vmatprep.subr.mxu0 0.0
        %1786 = vmatpush1.msra.mxu0 0.0
        %1787 = vmatprep.subr.mxu0 0.0
        %1788 = vmatpush1.msra.mxu0 0.0
        %1789 = vmatprep.subr.mxu0 0.0
        %1790 = vmatpush1.msra.mxu0 0.0
        %1791 = vmatprep.subr.mxu0 0.0
        %1792 = vmatpush1.msra.mxu0 0.0
        %1793 = vmatprep.subr.mxu0 0.0
        %1794 = vmatpush1.msra.mxu0 0.0
        %1795 = vmatprep.subr.mxu0 0.0
        %1796 = vmatpush1.msra.mxu0 0.0
        %1797 = vmatprep.subr.mxu0 0.0
        %1798 = vmatpush1.msra.mxu0 0.0
        %1799 = vmatprep.subr.mxu0 0.0
        %1800 = vmatpush1.msra.mxu0 0.0
        %1801 = vmatprep.subr.mxu0 0.0
        %1802 = vmatpush1.msra.mxu0 0.0
        %1803 = vmatprep.subr.mxu0 0.0
        %1804 = vmatpush1.msra.mxu0 0.0
        %1805 = vmatprep.subr.mxu0 0.0
        %1806 = vmatpush1.msra.mxu0 0.0
        %1807 = vmatprep.subr.mxu0 0.0
        %1808 = vmatpush1.msra.mxu0 0.0
        %1809 = vmatprep.subr.mxu0 0.0
        %1810 = vmatpush1.msra.mxu0 0.0
        %1811 = vmatprep.subr.mxu0 0.0
        %1812 = vmatpush1.msra.mxu0 0.0
        %1813 = vmatprep.subr.mxu0 0.0
        %1814 = vmatpush1.msra.mxu0 0.0
        %1815 = vmatprep.subr.mxu0 0.0
        %1816 = vmatpush1.msra.mxu0 0.0
        %1817 = vmatprep.mubr.f32.mxu0 0.0
        %1818 = vmatmul.mubr.f32.gmra.mrb[0].mxu0 %v1751
        %v1819 = vpop.f32.mrb[0].mxu0
        %v1820 = vadd.f32 0.0, %v1819
        %v1821 = vpop.f32.mrb[0].mxu0
        %1822 = vdwg.mxu0
        %v1823 = vadd.f32 %v1743, %v1820
        %1824 = vst.msk [vmem:[%s1075] sm:$0xff] %vm315, %v1823
        %s1825 = scalar_lea.vmem %s270, 16 [#allocation2]
        %1826 = vst.msk [vmem:[%s1825] sm:$0xff] %vm315, %v313
        %v1827 = vld [vmem:[%s822] sm:$0xff]
        %v1828 = vld [vmem:[%s1825] sm:$0xff]
        %v1829 = vld [vmem:[%s2] sm:$0xff]
        %v1830 = vld [vmem:[%s2 + $0x8] sm:$0xff]
        %v1831 = vld [vmem:[%s2 + $0x10] sm:$0xff]
        %v1832 = vld [vmem:[%s2 + $0x18] sm:$0xff]
        %v1833 = vld [vmem:[%s2 + $0x20] sm:$0xff]
        %v1834 = vld [vmem:[%s2 + $0x28] sm:$0xff]
        %v1836 = vsel %vm325, %v1827, 0
        %1838 = vmatprep.subr.mxu0 0.0
        %1839 = vmatpush1.msra.mxu0 %v1829
        %1840 = vmatprep.subr.mxu0 0.0
        %1841 = vmatpush1.msra.mxu0 %v1830
        %1842 = vmatprep.subr.mxu0 0.0
        %1843 = vmatpush1.msra.mxu0 %v1831
        %1844 = vmatprep.subr.mxu0 0.0
        %1845 = vmatpush1.msra.mxu0 %v1832
        %1846 = vmatprep.subr.mxu0 0.0
        %1847 = vmatpush1.msra.mxu0 %v1833
        %1848 = vmatprep.subr.mxu0 0.0
        %1849 = vmatpush1.msra.mxu0 %v1834
        %1850 = vmatprep.subr.mxu0 0.0
        %1851 = vmatpush1.msra.mxu0 0.0
        %1852 = vmatprep.subr.mxu0 0.0
        %1853 = vmatpush1.msra.mxu0 0.0
        %1854 = vmatprep.subr.mxu0 0.0
        %1855 = vmatpush1.msra.mxu0 0.0
        %1856 = vmatprep.subr.mxu0 0.0
        %1857 = vmatpush1.msra.mxu0 0.0
        %1858 = vmatprep.subr.mxu0 0.0
        %1859 = vmatpush1.msra.mxu0 0.0
        %1860 = vmatprep.subr.mxu0 0.0
        %1861 = vmatpush1.msra.mxu0 0.0
        %1862 = vmatprep.subr.mxu0 0.0
        %1863 = vmatpush1.msra.mxu0 0.0
        %1864 = vmatprep.subr.mxu0 0.0
        %1865 = vmatpush1.msra.mxu0 0.0
        %1866 = vmatprep.subr.mxu0 0.0
        %1867 = vmatpush1.msra.mxu0 0.0
        %1868 = vmatprep.subr.mxu0 0.0
        %1869 = vmatpush1.msra.mxu0 0.0
        %1870 = vmatprep.subr.mxu0 0.0
        %1871 = vmatpush1.msra.mxu0 0.0
        %1872 = vmatprep.subr.mxu0 0.0
        %1873 = vmatpush1.msra.mxu0 0.0
        %1874 = vmatprep.subr.mxu0 0.0
        %1875 = vmatpush1.msra.mxu0 0.0
        %1876 = vmatprep.subr.mxu0 0.0
        %1877 = vmatpush1.msra.mxu0 0.0
        %1878 = vmatprep.subr.mxu0 0.0
        %1879 = vmatpush1.msra.mxu0 0.0
        %1880 = vmatprep.subr.mxu0 0.0
        %1881 = vmatpush1.msra.mxu0 0.0
        %1882 = vmatprep.subr.mxu0 0.0
        %1883 = vmatpush1.msra.mxu0 0.0
        %1884 = vmatprep.subr.mxu0 0.0
        %1885 = vmatpush1.msra.mxu0 0.0
        %1886 = vmatprep.subr.mxu0 0.0
        %1887 = vmatpush1.msra.mxu0 0.0
        %1888 = vmatprep.subr.mxu0 0.0
        %1889 = vmatpush1.msra.mxu0 0.0
        %1890 = vmatprep.subr.mxu0 0.0
        %1891 = vmatpush1.msra.mxu0 0.0
        %1892 = vmatprep.subr.mxu0 0.0
        %1893 = vmatpush1.msra.mxu0 0.0
        %1894 = vmatprep.subr.mxu0 0.0
        %1895 = vmatpush1.msra.mxu0 0.0
        %1896 = vmatprep.subr.mxu0 0.0
        %1897 = vmatpush1.msra.mxu0 0.0
        %1898 = vmatprep.subr.mxu0 0.0
        %1899 = vmatpush1.msra.mxu0 0.0
        %1900 = vmatprep.subr.mxu0 0.0
        %1901 = vmatpush1.msra.mxu0 0.0
        %1902 = vmatprep.mubr.f32.mxu0 0.0
        %1903 = vmatmul.mubr.f32.gmra.mrb[0].mxu0 %v1836
        %v1904 = vpop.f32.mrb[0].mxu0
        %v1905 = vadd.f32 0.0, %v1904
        %v1906 = vpop.f32.mrb[0].mxu0
        %1907 = vdwg.mxu0
        %v1908 = vadd.f32 %v1828, %v1905
        %1909 = vst.msk [vmem:[%s1825] sm:$0xff] %vm315, %v1908
        %v1910 = vld [vmem:[%s822 + $0x1] sm:$0xff]
        %v1911 = vld [vmem:[%s1825] sm:$0xff]
        %v1912 = vld [vmem:[%s403] sm:$0xff]
        %v1913 = vld [vmem:[%s403 + $0x8] sm:$0xff]
        %v1914 = vld [vmem:[%s403 + $0x10] sm:$0xff]
        %v1915 = vld [vmem:[%s403 + $0x18] sm:$0xff]
        %v1916 = vld [vmem:[%s403 + $0x20] sm:$0xff]
        %v1917 = vld [vmem:[%s403 + $0x28] sm:$0xff]
        %v1919 = vsel %vm325, %v1910, 0
        %1921 = vmatprep.subr.mxu0 0.0
        %1922 = vmatpush1.msra.mxu0 %v1912
        %1923 = vmatprep.subr.mxu0 0.0
        %1924 = vmatpush1.msra.mxu0 %v1913
        %1925 = vmatprep.subr.mxu0 0.0
        %1926 = vmatpush1.msra.mxu0 %v1914
        %1927 = vmatprep.subr.mxu0 0.0
        %1928 = vmatpush1.msra.mxu0 %v1915
        %1929 = vmatprep.subr.mxu0 0.0
        %1930 = vmatpush1.msra.mxu0 %v1916
        %1931 = vmatprep.subr.mxu0 0.0
        %1932 = vmatpush1.msra.mxu0 %v1917
        %1933 = vmatprep.subr.mxu0 0.0
        %1934 = vmatpush1.msra.mxu0 0.0
        %1935 = vmatprep.subr.mxu0 0.0
        %1936 = vmatpush1.msra.mxu0 0.0
        %1937 = vmatprep.subr.mxu0 0.0
        %1938 = vmatpush1.msra.mxu0 0.0
        %1939 = vmatprep.subr.mxu0 0.0
        %1940 = vmatpush1.msra.mxu0 0.0
        %1941 = vmatprep.subr.mxu0 0.0
        %1942 = vmatpush1.msra.mxu0 0.0
        %1943 = vmatprep.subr.mxu0 0.0
        %1944 = vmatpush1.msra.mxu0 0.0
        %1945 = vmatprep.subr.mxu0 0.0
        %1946 = vmatpush1.msra.mxu0 0.0
        %1947 = vmatprep.subr.mxu0 0.0
        %1948 = vmatpush1.msra.mxu0 0.0
        %1949 = vmatprep.subr.mxu0 0.0
        %1950 = vmatpush1.msra.mxu0 0.0
        %1951 = vmatprep.subr.mxu0 0.0
        %1952 = vmatpush1.msra.mxu0 0.0
        %1953 = vmatprep.subr.mxu0 0.0
        %1954 = vmatpush1.msra.mxu0 0.0
        %1955 = vmatprep.subr.mxu0 0.0
        %1956 = vmatpush1.msra.mxu0 0.0
        %1957 = vmatprep.subr.mxu0 0.0
        %1958 = vmatpush1.msra.mxu0 0.0
        %1959 = vmatprep.subr.mxu0 0.0
        %1960 = vmatpush1.msra.mxu0 0.0
        %1961 = vmatprep.subr.mxu0 0.0
        %1962 = vmatpush1.msra.mxu0 0.0
        %1963 = vmatprep.subr.mxu0 0.0
        %1964 = vmatpush1.msra.mxu0 0.0
        %1965 = vmatprep.subr.mxu0 0.0
        %1966 = vmatpush1.msra.mxu0 0.0
        %1967 = vmatprep.subr.mxu0 0.0
        %1968 = vmatpush1.msra.mxu0 0.0
        %1969 = vmatprep.subr.mxu0 0.0
        %1970 = vmatpush1.msra.mxu0 0.0
        %1971 = vmatprep.subr.mxu0 0.0
        %1972 = vmatpush1.msra.mxu0 0.0
        %1973 = vmatprep.subr.mxu0 0.0
        %1974 = vmatpush1.msra.mxu0 0.0
        %1975 = vmatprep.subr.mxu0 0.0
        %1976 = vmatpush1.msra.mxu0 0.0
        %1977 = vmatprep.subr.mxu0 0.0
        %1978 = vmatpush1.msra.mxu0 0.0
        %1979 = vmatprep.subr.mxu0 0.0
        %1980 = vmatpush1.msra.mxu0 0.0
        %1981 = vmatprep.subr.mxu0 0.0
        %1982 = vmatpush1.msra.mxu0 0.0
        %1983 = vmatprep.subr.mxu0 0.0
        %1984 = vmatpush1.msra.mxu0 0.0
        %1985 = vmatprep.mubr.f32.mxu0 0.0
        %1986 = vmatmul.mubr.f32.gmra.mrb[0].mxu0 %v1919
        %v1987 = vpop.f32.mrb[0].mxu0
        %v1988 = vadd.f32 0.0, %v1987
        %v1989 = vpop.f32.mrb[0].mxu0
        %1990 = vdwg.mxu0
        %v1991 = vadd.f32 %v1911, %v1988
        %1992 = vst.msk [vmem:[%s1825] sm:$0xff] %vm315, %v1991
        %v1993 = vld [vmem:[%s822 + $0x2] sm:$0xff]
        %v1994 = vld [vmem:[%s1825] sm:$0xff]
        %v1995 = vld [vmem:[%s487] sm:$0xff]
        %v1996 = vld [vmem:[%s487 + $0x8] sm:$0xff]
        %v1997 = vld [vmem:[%s487 + $0x10] sm:$0xff]
        %v1998 = vld [vmem:[%s487 + $0x18] sm:$0xff]
        %v1999 = vld [vmem:[%s487 + $0x20] sm:$0xff]
        %v2000 = vld [vmem:[%s487 + $0x28] sm:$0xff]
        %v2002 = vsel %vm325, %v1993, 0
        %2004 = vmatprep.subr.mxu0 0.0
        %2005 = vmatpush1.msra.mxu0 %v1995
        %2006 = vmatprep.subr.mxu0 0.0
        %2007 = vmatpush1.msra.mxu0 %v1996
        %2008 = vmatprep.subr.mxu0 0.0
        %2009 = vmatpush1.msra.mxu0 %v1997
        %2010 = vmatprep.subr.mxu0 0.0
        %2011 = vmatpush1.msra.mxu0 %v1998
        %2012 = vmatprep.subr.mxu0 0.0
        %2013 = vmatpush1.msra.mxu0 %v1999
        %2014 = vmatprep.subr.mxu0 0.0
        %2015 = vmatpush1.msra.mxu0 %v2000
        %2016 = vmatprep.subr.mxu0 0.0
        %2017 = vmatpush1.msra.mxu0 0.0
        %2018 = vmatprep.subr.mxu0 0.0
        %2019 = vmatpush1.msra.mxu0 0.0
        %2020 = vmatprep.subr.mxu0 0.0
        %2021 = vmatpush1.msra.mxu0 0.0
        %2022 = vmatprep.subr.mxu0 0.0
        %2023 = vmatpush1.msra.mxu0 0.0
        %2024 = vmatprep.subr.mxu0 0.0
        %2025 = vmatpush1.msra.mxu0 0.0
        %2026 = vmatprep.subr.mxu0 0.0
        %2027 = vmatpush1.msra.mxu0 0.0
        %2028 = vmatprep.subr.mxu0 0.0
        %2029 = vmatpush1.msra.mxu0 0.0
        %2030 = vmatprep.subr.mxu0 0.0
        %2031 = vmatpush1.msra.mxu0 0.0
        %2032 = vmatprep.subr.mxu0 0.0
        %2033 = vmatpush1.msra.mxu0 0.0
        %2034 = vmatprep.subr.mxu0 0.0
        %2035 = vmatpush1.msra.mxu0 0.0
        %2036 = vmatprep.subr.mxu0 0.0
        %2037 = vmatpush1.msra.mxu0 0.0
        %2038 = vmatprep.subr.mxu0 0.0
        %2039 = vmatpush1.msra.mxu0 0.0
        %2040 = vmatprep.subr.mxu0 0.0
        %2041 = vmatpush1.msra.mxu0 0.0
        %2042 = vmatprep.subr.mxu0 0.0
        %2043 = vmatpush1.msra.mxu0 0.0
        %2044 = vmatprep.subr.mxu0 0.0
        %2045 = vmatpush1.msra.mxu0 0.0
        %2046 = vmatprep.subr.mxu0 0.0
        %2047 = vmatpush1.msra.mxu0 0.0
        %2048 = vmatprep.subr.mxu0 0.0
        %2049 = vmatpush1.msra.mxu0 0.0
        %2050 = vmatprep.subr.mxu0 0.0
        %2051 = vmatpush1.msra.mxu0 0.0
        %2052 = vmatprep.subr.mxu0 0.0
        %2053 = vmatpush1.msra.mxu0 0.0
        %2054 = vmatprep.subr.mxu0 0.0
        %2055 = vmatpush1.msra.mxu0 0.0
        %2056 = vmatprep.subr.mxu0 0.0
        %2057 = vmatpush1.msra.mxu0 0.0
        %2058 = vmatprep.subr.mxu0 0.0
        %2059 = vmatpush1.msra.mxu0 0.0
        %2060 = vmatprep.subr.mxu0 0.0
        %2061 = vmatpush1.msra.mxu0 0.0
        %2062 = vmatprep.subr.mxu0 0.0
        %2063 = vmatpush1.msra.mxu0 0.0
        %2064 = vmatprep.subr.mxu0 0.0
        %2065 = vmatpush1.msra.mxu0 0.0
        %2066 = vmatprep.subr.mxu0 0.0
        %2067 = vmatpush1.msra.mxu0 0.0
        %2068 = vmatprep.mubr.f32.mxu0 0.0
        %2069 = vmatmul.mubr.f32.gmra.mrb[0].mxu0 %v2002
        %v2070 = vpop.f32.mrb[0].mxu0
        %v2071 = vadd.f32 0.0, %v2070
        %v2072 = vpop.f32.mrb[0].mxu0
        %2073 = vdwg.mxu0
        %v2074 = vadd.f32 %v1994, %v2071
        %2075 = vst.msk [vmem:[%s1825] sm:$0xff] %vm315, %v2074
        %v2076 = vld [vmem:[%s1575] sm:$0xff]
        %v2077 = vld [vmem:[%s1825] sm:$0xff]
        %v2078 = vld [vmem:[%s572] sm:$0xff]
        %v2079 = vld [vmem:[%s572 + $0x8] sm:$0xff]
        %v2080 = vld [vmem:[%s572 + $0x10] sm:$0xff]
        %v2081 = vld [vmem:[%s572 + $0x18] sm:$0xff]
        %v2082 = vld [vmem:[%s572 + $0x20] sm:$0xff]
        %v2083 = vld [vmem:[%s572 + $0x28] sm:$0xff]
        %v2085 = vsel %vm325, %v2076, 0
        %2087 = vmatprep.subr.mxu0 0.0
        %2088 = vmatpush1.msra.mxu0 %v2078
        %2089 = vmatprep.subr.mxu0 0.0
        %2090 = vmatpush1.msra.mxu0 %v2079
        %2091 = vmatprep.subr.mxu0 0.0
        %2092 = vmatpush1.msra.mxu0 %v2080
        %2093 = vmatprep.subr.mxu0 0.0
        %2094 = vmatpush1.msra.mxu0 %v2081
        %2095 = vmatprep.subr.mxu0 0.0
        %2096 = vmatpush1.msra.mxu0 %v2082
        %2097 = vmatprep.subr.mxu0 0.0
        %2098 = vmatpush1.msra.mxu0 %v2083
        %2099 = vmatprep.subr.mxu0 0.0
        %2100 = vmatpush1.msra.mxu0 0.0
        %2101 = vmatprep.subr.mxu0 0.0
        %2102 = vmatpush1.msra.mxu0 0.0
        %2103 = vmatprep.subr.mxu0 0.0
        %2104 = vmatpush1.msra.mxu0 0.0
        %2105 = vmatprep.subr.mxu0 0.0
        %2106 = vmatpush1.msra.mxu0 0.0
        %2107 = vmatprep.subr.mxu0 0.0
        %2108 = vmatpush1.msra.mxu0 0.0
        %2109 = vmatprep.subr.mxu0 0.0
        %2110 = vmatpush1.msra.mxu0 0.0
        %2111 = vmatprep.subr.mxu0 0.0
        %2112 = vmatpush1.msra.mxu0 0.0
        %2113 = vmatprep.subr.mxu0 0.0
        %2114 = vmatpush1.msra.mxu0 0.0
        %2115 = vmatprep.subr.mxu0 0.0
        %2116 = vmatpush1.msra.mxu0 0.0
        %2117 = vmatprep.subr.mxu0 0.0
        %2118 = vmatpush1.msra.mxu0 0.0
        %2119 = vmatprep.subr.mxu0 0.0
        %2120 = vmatpush1.msra.mxu0 0.0
        %2121 = vmatprep.subr.mxu0 0.0
        %2122 = vmatpush1.msra.mxu0 0.0
        %2123 = vmatprep.subr.mxu0 0.0
        %2124 = vmatpush1.msra.mxu0 0.0
        %2125 = vmatprep.subr.mxu0 0.0
        %2126 = vmatpush1.msra.mxu0 0.0
        %2127 = vmatprep.subr.mxu0 0.0
        %2128 = vmatpush1.msra.mxu0 0.0
        %2129 = vmatprep.subr.mxu0 0.0
        %2130 = vmatpush1.msra.mxu0 0.0
        %2131 = vmatprep.subr.mxu0 0.0
        %2132 = vmatpush1.msra.mxu0 0.0
        %2133 = vmatprep.subr.mxu0 0.0
        %2134 = vmatpush1.msra.mxu0 0.0
        %2135 = vmatprep.subr.mxu0 0.0
        %2136 = vmatpush1.msra.mxu0 0.0
        %2137 = vmatprep.subr.mxu0 0.0
        %2138 = vmatpush1.msra.mxu0 0.0
        %2139 = vmatprep.subr.mxu0 0.0
        %2140 = vmatpush1.msra.mxu0 0.0
        %2141 = vmatprep.subr.mxu0 0.0
        %2142 = vmatpush1.msra.mxu0 0.0
        %2143 = vmatprep.subr.mxu0 0.0
        %2144 = vmatpush1.msra.mxu0 0.0
        %2145 = vmatprep.subr.mxu0 0.0
        %2146 = vmatpush1.msra.mxu0 0.0
        %2147 = vmatprep.subr.mxu0 0.0
        %2148 = vmatpush1.msra.mxu0 0.0
        %2149 = vmatprep.subr.mxu0 0.0
        %2150 = vmatpush1.msra.mxu0 0.0
        %2151 = vmatprep.mubr.f32.mxu0 0.0
        %2152 = vmatmul.mubr.f32.gmra.mrb[0].mxu0 %v2085
        %v2153 = vpop.f32.mrb[0].mxu0
        %v2154 = vadd.f32 0.0, %v2153
        %v2155 = vpop.f32.mrb[0].mxu0
        %2156 = vdwg.mxu0
        %v2157 = vadd.f32 %v2077, %v2154
        %2158 = vst.msk [vmem:[%s1825] sm:$0xff] %vm315, %v2157
        %v2159 = vld [vmem:[%s1575 + $0x1] sm:$0xff]
        %v2160 = vld [vmem:[%s1825] sm:$0xff]
        %v2161 = vld [vmem:[%s656] sm:$0xff]
        %v2162 = vld [vmem:[%s656 + $0x8] sm:$0xff]
        %v2163 = vld [vmem:[%s656 + $0x10] sm:$0xff]
        %v2164 = vld [vmem:[%s656 + $0x18] sm:$0xff]
        %v2165 = vld [vmem:[%s656 + $0x20] sm:$0xff]
        %v2166 = vld [vmem:[%s656 + $0x28] sm:$0xff]
        %v2168 = vsel %vm325, %v2159, 0
        %2170 = vmatprep.subr.mxu0 0.0
        %2171 = vmatpush1.msra.mxu0 %v2161
        %2172 = vmatprep.subr.mxu0 0.0
        %2173 = vmatpush1.msra.mxu0 %v2162
        %2174 = vmatprep.subr.mxu0 0.0
        %2175 = vmatpush1.msra.mxu0 %v2163
        %2176 = vmatprep.subr.mxu0 0.0
        %2177 = vmatpush1.msra.mxu0 %v2164
        %2178 = vmatprep.subr.mxu0 0.0
        %2179 = vmatpush1.msra.mxu0 %v2165
        %2180 = vmatprep.subr.mxu0 0.0
        %2181 = vmatpush1.msra.mxu0 %v2166
        %2182 = vmatprep.subr.mxu0 0.0
        %2183 = vmatpush1.msra.mxu0 0.0
        %2184 = vmatprep.subr.mxu0 0.0
        %2185 = vmatpush1.msra.mxu0 0.0
        %2186 = vmatprep.subr.mxu0 0.0
        %2187 = vmatpush1.msra.mxu0 0.0
        %2188 = vmatprep.subr.mxu0 0.0
        %2189 = vmatpush1.msra.mxu0 0.0
        %2190 = vmatprep.subr.mxu0 0.0
        %2191 = vmatpush1.msra.mxu0 0.0
        %2192 = vmatprep.subr.mxu0 0.0
        %2193 = vmatpush1.msra.mxu0 0.0
        %2194 = vmatprep.subr.mxu0 0.0
        %2195 = vmatpush1.msra.mxu0 0.0
        %2196 = vmatprep.subr.mxu0 0.0
        %2197 = vmatpush1.msra.mxu0 0.0
        %2198 = vmatprep.subr.mxu0 0.0
        %2199 = vmatpush1.msra.mxu0 0.0
        %2200 = vmatprep.subr.mxu0 0.0
        %2201 = vmatpush1.msra.mxu0 0.0
        %2202 = vmatprep.subr.mxu0 0.0
        %2203 = vmatpush1.msra.mxu0 0.0
        %2204 = vmatprep.subr.mxu0 0.0
        %2205 = vmatpush1.msra.mxu0 0.0
        %2206 = vmatprep.subr.mxu0 0.0
        %2207 = vmatpush1.msra.mxu0 0.0
        %2208 = vmatprep.subr.mxu0 0.0
        %2209 = vmatpush1.msra.mxu0 0.0
        %2210 = vmatprep.subr.mxu0 0.0
        %2211 = vmatpush1.msra.mxu0 0.0
        %2212 = vmatprep.subr.mxu0 0.0
        %2213 = vmatpush1.msra.mxu0 0.0
        %2214 = vmatprep.subr.mxu0 0.0
        %2215 = vmatpush1.msra.mxu0 0.0
        %2216 = vmatprep.subr.mxu0 0.0
        %2217 = vmatpush1.msra.mxu0 0.0
        %2218 = vmatprep.subr.mxu0 0.0
        %2219 = vmatpush1.msra.mxu0 0.0
        %2220 = vmatprep.subr.mxu0 0.0
        %2221 = vmatpush1.msra.mxu0 0.0
        %2222 = vmatprep.subr.mxu0 0.0
        %2223 = vmatpush1.msra.mxu0 0.0
        %2224 = vmatprep.subr.mxu0 0.0
        %2225 = vmatpush1.msra.mxu0 0.0
        %2226 = vmatprep.subr.mxu0 0.0
        %2227 = vmatpush1.msra.mxu0 0.0
        %2228 = vmatprep.subr.mxu0 0.0
        %2229 = vmatpush1.msra.mxu0 0.0
        %2230 = vmatprep.subr.mxu0 0.0
        %2231 = vmatpush1.msra.mxu0 0.0
        %2232 = vmatprep.subr.mxu0 0.0
        %2233 = vmatpush1.msra.mxu0 0.0
        %2234 = vmatprep.mubr.f32.mxu0 0.0
        %2235 = vmatmul.mubr.f32.gmra.mrb[0].mxu0 %v2168
        %v2236 = vpop.f32.mrb[0].mxu0
        %v2237 = vadd.f32 0.0, %v2236
        %v2238 = vpop.f32.mrb[0].mxu0
        %2239 = vdwg.mxu0
        %v2240 = vadd.f32 %v2160, %v2237
        %2241 = vst.msk [vmem:[%s1825] sm:$0xff] %vm315, %v2240
        %v2242 = vld [vmem:[%s1575 + $0x2] sm:$0xff]
        %v2243 = vld [vmem:[%s1825] sm:$0xff]
        %v2244 = vld [vmem:[%s740] sm:$0xff]
        %v2245 = vld [vmem:[%s740 + $0x8] sm:$0xff]
        %v2246 = vld [vmem:[%s740 + $0x10] sm:$0xff]
        %v2247 = vld [vmem:[%s740 + $0x18] sm:$0xff]
        %v2248 = vld [vmem:[%s740 + $0x20] sm:$0xff]
        %v2249 = vld [vmem:[%s740 + $0x28] sm:$0xff]
        %v2251 = vsel %vm325, %v2242, 0
        %2253 = vmatprep.subr.mxu0 0.0
        %2254 = vmatpush1.msra.mxu0 %v2244
        %2255 = vmatprep.subr.mxu0 0.0
        %2256 = vmatpush1.msra.mxu0 %v2245
        %2257 = vmatprep.subr.mxu0 0.0
        %2258 = vmatpush1.msra.mxu0 %v2246
        %2259 = vmatprep.subr.mxu0 0.0
        %2260 = vmatpush1.msra.mxu0 %v2247
        %2261 = vmatprep.subr.mxu0 0.0
        %2262 = vmatpush1.msra.mxu0 %v2248
        %2263 = vmatprep.subr.mxu0 0.0
        %2264 = vmatpush1.msra.mxu0 %v2249
        %2265 = vmatprep.subr.mxu0 0.0
        %2266 = vmatpush1.msra.mxu0 0.0
        %2267 = vmatprep.subr.mxu0 0.0
        %2268 = vmatpush1.msra.mxu0 0.0
        %2269 = vmatprep.subr.mxu0 0.0
        %2270 = vmatpush1.msra.mxu0 0.0
        %2271 = vmatprep.subr.mxu0 0.0
        %2272 = vmatpush1.msra.mxu0 0.0
        %2273 = vmatprep.subr.mxu0 0.0
        %2274 = vmatpush1.msra.mxu0 0.0
        %2275 = vmatprep.subr.mxu0 0.0
        %2276 = vmatpush1.msra.mxu0 0.0
        %2277 = vmatprep.subr.mxu0 0.0
        %2278 = vmatpush1.msra.mxu0 0.0
        %2279 = vmatprep.subr.mxu0 0.0
        %2280 = vmatpush1.msra.mxu0 0.0
        %2281 = vmatprep.subr.mxu0 0.0
        %2282 = vmatpush1.msra.mxu0 0.0
        %2283 = vmatprep.subr.mxu0 0.0
        %2284 = vmatpush1.msra.mxu0 0.0
        %2285 = vmatprep.subr.mxu0 0.0
        %2286 = vmatpush1.msra.mxu0 0.0
        %2287 = vmatprep.subr.mxu0 0.0
        %2288 = vmatpush1.msra.mxu0 0.0
        %2289 = vmatprep.subr.mxu0 0.0
        %2290 = vmatpush1.msra.mxu0 0.0
        %2291 = vmatprep.subr.mxu0 0.0
        %2292 = vmatpush1.msra.mxu0 0.0
        %2293 = vmatprep.subr.mxu0 0.0
        %2294 = vmatpush1.msra.mxu0 0.0
        %2295 = vmatprep.subr.mxu0 0.0
        %2296 = vmatpush1.msra.mxu0 0.0
        %2297 = vmatprep.subr.mxu0 0.0
        %2298 = vmatpush1.msra.mxu0 0.0
        %2299 = vmatprep.subr.mxu0 0.0
        %2300 = vmatpush1.msra.mxu0 0.0
        %2301 = vmatprep.subr.mxu0 0.0
        %2302 = vmatpush1.msra.mxu0 0.0
        %2303 = vmatprep.subr.mxu0 0.0
        %2304 = vmatpush1.msra.mxu0 0.0
        %2305 = vmatprep.subr.mxu0 0.0
        %2306 = vmatpush1.msra.mxu0 0.0
        %2307 = vmatprep.subr.mxu0 0.0
        %2308 = vmatpush1.msra.mxu0 0.0
        %2309 = vmatprep.subr.mxu0 0.0
        %2310 = vmatpush1.msra.mxu0 0.0
        %2311 = vmatprep.subr.mxu0 0.0
        %2312 = vmatpush1.msra.mxu0 0.0
        %2313 = vmatprep.subr.mxu0 0.0
        %2314 = vmatpush1.msra.mxu0 0.0
        %2315 = vmatprep.subr.mxu0 0.0
        %2316 = vmatpush1.msra.mxu0 0.0
        %2317 = vmatprep.mubr.f32.mxu0 0.0
        %2318 = vmatmul.mubr.f32.gmra.mrb[0].mxu0 %v2251
        %v2319 = vpop.f32.mrb[0].mxu0
        %v2320 = vadd.f32 0.0, %v2319
        %v2321 = vpop.f32.mrb[0].mxu0
        %2322 = vdwg.mxu0
        %v2323 = vadd.f32 %v2243, %v2320
        %2324 = vst.msk [vmem:[%s1825] sm:$0xff] %vm315, %v2323
        %v2325 = vld [vmem:[%s303] sm:$0xff]
        %v2326 = vld [vmem:[%s1825] sm:$0xff]
        %v2327 = vld [vmem:[%s825] sm:$0xff]
        %v2328 = vld [vmem:[%s825 + $0x8] sm:$0xff]
        %v2329 = vld [vmem:[%s825 + $0x10] sm:$0xff]
        %v2330 = vld [vmem:[%s825 + $0x18] sm:$0xff]
        %v2331 = vld [vmem:[%s825 + $0x20] sm:$0xff]
        %v2332 = vld [vmem:[%s825 + $0x28] sm:$0xff]
        %v2334 = vsel %vm325, %v2325, 0
        %2336 = vmatprep.subr.mxu0 0.0
        %2337 = vmatpush1.msra.mxu0 %v2327
        %2338 = vmatprep.subr.mxu0 0.0
        %2339 = vmatpush1.msra.mxu0 %v2328
        %2340 = vmatprep.subr.mxu0 0.0
        %2341 = vmatpush1.msra.mxu0 %v2329
        %2342 = vmatprep.subr.mxu0 0.0
        %2343 = vmatpush1.msra.mxu0 %v2330
        %2344 = vmatprep.subr.mxu0 0.0
        %2345 = vmatpush1.msra.mxu0 %v2331
        %2346 = vmatprep.subr.mxu0 0.0
        %2347 = vmatpush1.msra.mxu0 %v2332
        %2348 = vmatprep.subr.mxu0 0.0
        %2349 = vmatpush1.msra.mxu0 0.0
        %2350 = vmatprep.subr.mxu0 0.0
        %2351 = vmatpush1.msra.mxu0 0.0
        %2352 = vmatprep.subr.mxu0 0.0
        %2353 = vmatpush1.msra.mxu0 0.0
        %2354 = vmatprep.subr.mxu0 0.0
        %2355 = vmatpush1.msra.mxu0 0.0
        %2356 = vmatprep.subr.mxu0 0.0
        %2357 = vmatpush1.msra.mxu0 0.0
        %2358 = vmatprep.subr.mxu0 0.0
        %2359 = vmatpush1.msra.mxu0 0.0
        %2360 = vmatprep.subr.mxu0 0.0
        %2361 = vmatpush1.msra.mxu0 0.0
        %2362 = vmatprep.subr.mxu0 0.0
        %2363 = vmatpush1.msra.mxu0 0.0
        %2364 = vmatprep.subr.mxu0 0.0
        %2365 = vmatpush1.msra.mxu0 0.0
        %2366 = vmatprep.subr.mxu0 0.0
        %2367 = vmatpush1.msra.mxu0 0.0
        %2368 = vmatprep.subr.mxu0 0.0
        %2369 = vmatpush1.msra.mxu0 0.0
        %2370 = vmatprep.subr.mxu0 0.0
        %2371 = vmatpush1.msra.mxu0 0.0
        %2372 = vmatprep.subr.mxu0 0.0
        %2373 = vmatpush1.msra.mxu0 0.0
        %2374 = vmatprep.subr.mxu0 0.0
        %2375 = vmatpush1.msra.mxu0 0.0
        %2376 = vmatprep.subr.mxu0 0.0
        %2377 = vmatpush1.msra.mxu0 0.0
        %2378 = vmatprep.subr.mxu0 0.0
        %2379 = vmatpush1.msra.mxu0 0.0
        %2380 = vmatprep.subr.mxu0 0.0
        %2381 = vmatpush1.msra.mxu0 0.0
        %2382 = vmatprep.subr.mxu0 0.0
        %2383 = vmatpush1.msra.mxu0 0.0
        %2384 = vmatprep.subr.mxu0 0.0
        %2385 = vmatpush1.msra.mxu0 0.0
        %2386 = vmatprep.subr.mxu0 0.0
        %2387 = vmatpush1.msra.mxu0 0.0
        %2388 = vmatprep.subr.mxu0 0.0
        %2389 = vmatpush1.msra.mxu0 0.0
        %2390 = vmatprep.subr.mxu0 0.0
        %2391 = vmatpush1.msra.mxu0 0.0
        %2392 = vmatprep.subr.mxu0 0.0
        %2393 = vmatpush1.msra.mxu0 0.0
        %2394 = vmatprep.subr.mxu0 0.0
        %2395 = vmatpush1.msra.mxu0 0.0
        %2396 = vmatprep.subr.mxu0 0.0
        %2397 = vmatpush1.msra.mxu0 0.0
        %2398 = vmatprep.subr.mxu0 0.0
        %2399 = vmatpush1.msra.mxu0 0.0
        %2400 = vmatprep.mubr.f32.mxu0 0.0
        %2401 = vmatmul.mubr.f32.gmra.mrb[0].mxu0 %v2334
        %v2402 = vpop.f32.mrb[0].mxu0
        %v2403 = vadd.f32 0.0, %v2402
        %v2404 = vpop.f32.mrb[0].mxu0
        %2405 = vdwg.mxu0
        %v2406 = vadd.f32 %v2326, %v2403
        %2407 = vst.msk [vmem:[%s1825] sm:$0xff] %vm315, %v2406
        %v2408 = vld [vmem:[%s303 + $0x1] sm:$0xff]
        %v2409 = vld [vmem:[%s1825] sm:$0xff]
        %v2410 = vld [vmem:[%s909] sm:$0xff]
        %v2411 = vld [vmem:[%s909 + $0x8] sm:$0xff]
        %v2412 = vld [vmem:[%s909 + $0x10] sm:$0xff]
        %v2413 = vld [vmem:[%s909 + $0x18] sm:$0xff]
        %v2414 = vld [vmem:[%s909 + $0x20] sm:$0xff]
        %v2415 = vld [vmem:[%s909 + $0x28] sm:$0xff]
        %v2417 = vsel %vm325, %v2408, 0
        %2419 = vmatprep.subr.mxu0 0.0
        %2420 = vmatpush1.msra.mxu0 %v2410
        %2421 = vmatprep.subr.mxu0 0.0
        %2422 = vmatpush1.msra.mxu0 %v2411
        %2423 = vmatprep.subr.mxu0 0.0
        %2424 = vmatpush1.msra.mxu0 %v2412
        %2425 = vmatprep.subr.mxu0 0.0
        %2426 = vmatpush1.msra.mxu0 %v2413
        %2427 = vmatprep.subr.mxu0 0.0
        %2428 = vmatpush1.msra.mxu0 %v2414
        %2429 = vmatprep.subr.mxu0 0.0
        %2430 = vmatpush1.msra.mxu0 %v2415
        %2431 = vmatprep.subr.mxu0 0.0
        %2432 = vmatpush1.msra.mxu0 0.0
        %2433 = vmatprep.subr.mxu0 0.0
        %2434 = vmatpush1.msra.mxu0 0.0
        %2435 = vmatprep.subr.mxu0 0.0
        %2436 = vmatpush1.msra.mxu0 0.0
        %2437 = vmatprep.subr.mxu0 0.0
        %2438 = vmatpush1.msra.mxu0 0.0
        %2439 = vmatprep.subr.mxu0 0.0
        %2440 = vmatpush1.msra.mxu0 0.0
        %2441 = vmatprep.subr.mxu0 0.0
        %2442 = vmatpush1.msra.mxu0 0.0
        %2443 = vmatprep.subr.mxu0 0.0
        %2444 = vmatpush1.msra.mxu0 0.0
        %2445 = vmatprep.subr.mxu0 0.0
        %2446 = vmatpush1.msra.mxu0 0.0
        %2447 = vmatprep.subr.mxu0 0.0
        %2448 = vmatpush1.msra.mxu0 0.0
        %2449 = vmatprep.subr.mxu0 0.0
        %2450 = vmatpush1.msra.mxu0 0.0
        %2451 = vmatprep.subr.mxu0 0.0
        %2452 = vmatpush1.msra.mxu0 0.0
        %2453 = vmatprep.subr.mxu0 0.0
        %2454 = vmatpush1.msra.mxu0 0.0
        %2455 = vmatprep.subr.mxu0 0.0
        %2456 = vmatpush1.msra.mxu0 0.0
        %2457 = vmatprep.subr.mxu0 0.0
        %2458 = vmatpush1.msra.mxu0 0.0
        %2459 = vmatprep.subr.mxu0 0.0
        %2460 = vmatpush1.msra.mxu0 0.0
        %2461 = vmatprep.subr.mxu0 0.0
        %2462 = vmatpush1.msra.mxu0 0.0
        %2463 = vmatprep.subr.mxu0 0.0
        %2464 = vmatpush1.msra.mxu0 0.0
        %2465 = vmatprep.subr.mxu0 0.0
        %2466 = vmatpush1.msra.mxu0 0.0
        %2467 = vmatprep.subr.mxu0 0.0
        %2468 = vmatpush1.msra.mxu0 0.0
        %2469 = vmatprep.subr.mxu0 0.0
        %2470 = vmatpush1.msra.mxu0 0.0
        %2471 = vmatprep.subr.mxu0 0.0
        %2472 = vmatpush1.msra.mxu0 0.0
        %2473 = vmatprep.subr.mxu0 0.0
        %2474 = vmatpush1.msra.mxu0 0.0
        %2475 = vmatprep.subr.mxu0 0.0
        %2476 = vmatpush1.msra.mxu0 0.0
        %2477 = vmatprep.subr.mxu0 0.0
        %2478 = vmatpush1.msra.mxu0 0.0
        %2479 = vmatprep.subr.mxu0 0.0
        %2480 = vmatpush1.msra.mxu0 0.0
        %2481 = vmatprep.subr.mxu0 0.0
        %2482 = vmatpush1.msra.mxu0 0.0
        %2483 = vmatprep.mubr.f32.mxu0 0.0
        %2484 = vmatmul.mubr.f32.gmra.mrb[0].mxu0 %v2417
        %v2485 = vpop.f32.mrb[0].mxu0
        %v2486 = vadd.f32 0.0, %v2485
        %v2487 = vpop.f32.mrb[0].mxu0
        %2488 = vdwg.mxu0
        %v2489 = vadd.f32 %v2409, %v2486
        %2490 = vst.msk [vmem:[%s1825] sm:$0xff] %vm315, %v2489
        %v2491 = vld [vmem:[%s303 + $0x2] sm:$0xff]
        %v2492 = vld [vmem:[%s1825] sm:$0xff]
        %v2493 = vld [vmem:[%s993] sm:$0xff]
        %v2494 = vld [vmem:[%s993 + $0x8] sm:$0xff]
        %v2495 = vld [vmem:[%s993 + $0x10] sm:$0xff]
        %v2496 = vld [vmem:[%s993 + $0x18] sm:$0xff]
        %v2497 = vld [vmem:[%s993 + $0x20] sm:$0xff]
        %v2498 = vld [vmem:[%s993 + $0x28] sm:$0xff]
        %v2500 = vsel %vm325, %v2491, 0
        %2502 = vmatprep.subr.mxu0 0.0
        %2503 = vmatpush1.msra.mxu0 %v2493
        %2504 = vmatprep.subr.mxu0 0.0
        %2505 = vmatpush1.msra.mxu0 %v2494
        %2506 = vmatprep.subr.mxu0 0.0
        %2507 = vmatpush1.msra.mxu0 %v2495
        %2508 = vmatprep.subr.mxu0 0.0
        %2509 = vmatpush1.msra.mxu0 %v2496
        %2510 = vmatprep.subr.mxu0 0.0
        %2511 = vmatpush1.msra.mxu0 %v2497
        %2512 = vmatprep.subr.mxu0 0.0
        %2513 = vmatpush1.msra.mxu0 %v2498
        %2514 = vmatprep.subr.mxu0 0.0
        %2515 = vmatpush1.msra.mxu0 0.0
        %2516 = vmatprep.subr.mxu0 0.0
        %2517 = vmatpush1.msra.mxu0 0.0
        %2518 = vmatprep.subr.mxu0 0.0
        %2519 = vmatpush1.msra.mxu0 0.0
        %2520 = vmatprep.subr.mxu0 0.0
        %2521 = vmatpush1.msra.mxu0 0.0
        %2522 = vmatprep.subr.mxu0 0.0
        %2523 = vmatpush1.msra.mxu0 0.0
        %2524 = vmatprep.subr.mxu0 0.0
        %2525 = vmatpush1.msra.mxu0 0.0
        %2526 = vmatprep.subr.mxu0 0.0
        %2527 = vmatpush1.msra.mxu0 0.0
        %2528 = vmatprep.subr.mxu0 0.0
        %2529 = vmatpush1.msra.mxu0 0.0
        %2530 = vmatprep.subr.mxu0 0.0
        %2531 = vmatpush1.msra.mxu0 0.0
        %2532 = vmatprep.subr.mxu0 0.0
        %2533 = vmatpush1.msra.mxu0 0.0
        %2534 = vmatprep.subr.mxu0 0.0
        %2535 = vmatpush1.msra.mxu0 0.0
        %2536 = vmatprep.subr.mxu0 0.0
        %2537 = vmatpush1.msra.mxu0 0.0
        %2538 = vmatprep.subr.mxu0 0.0
        %2539 = vmatpush1.msra.mxu0 0.0
        %2540 = vmatprep.subr.mxu0 0.0
        %2541 = vmatpush1.msra.mxu0 0.0
        %2542 = vmatprep.subr.mxu0 0.0
        %2543 = vmatpush1.msra.mxu0 0.0
        %2544 = vmatprep.subr.mxu0 0.0
        %2545 = vmatpush1.msra.mxu0 0.0
        %2546 = vmatprep.subr.mxu0 0.0
        %2547 = vmatpush1.msra.mxu0 0.0
        %2548 = vmatprep.subr.mxu0 0.0
        %2549 = vmatpush1.msra.mxu0 0.0
        %2550 = vmatprep.subr.mxu0 0.0
        %2551 = vmatpush1.msra.mxu0 0.0
        %2552 = vmatprep.subr.mxu0 0.0
        %2553 = vmatpush1.msra.mxu0 0.0
        %2554 = vmatprep.subr.mxu0 0.0
        %2555 = vmatpush1.msra.mxu0 0.0
        %2556 = vmatprep.subr.mxu0 0.0
        %2557 = vmatpush1.msra.mxu0 0.0
        %2558 = vmatprep.subr.mxu0 0.0
        %2559 = vmatpush1.msra.mxu0 0.0
        %2560 = vmatprep.subr.mxu0 0.0
        %2561 = vmatpush1.msra.mxu0 0.0
        %2562 = vmatprep.subr.mxu0 0.0
        %2563 = vmatpush1.msra.mxu0 0.0
        %2564 = vmatprep.subr.mxu0 0.0
        %2565 = vmatpush1.msra.mxu0 0.0
        %2566 = vmatprep.mubr.f32.mxu0 0.0
        %2567 = vmatmul.mubr.f32.gmra.mrb[0].mxu0 %v2500
        %v2568 = vpop.f32.mrb[0].mxu0
        %v2569 = vadd.f32 0.0, %v2568
        %v2570 = vpop.f32.mrb[0].mxu0
        %2571 = vdwg.mxu0
        %v2572 = vadd.f32 %v2492, %v2569
        %2573 = vst.msk [vmem:[%s1825] sm:$0xff] %vm315, %v2572
        %s2574 = scalar_lea.vmem %s270, 24 [#allocation2]
        %2575 = vst.msk [vmem:[%s2574] sm:$0xff] %vm315, %v313
        %v2576 = vld [vmem:[%s1575] sm:$0xff]
        %v2577 = vld [vmem:[%s2574] sm:$0xff]
        %v2578 = vld [vmem:[%s2] sm:$0xff]
        %v2579 = vld [vmem:[%s2 + $0x8] sm:$0xff]
        %v2580 = vld [vmem:[%s2 + $0x10] sm:$0xff]
        %v2581 = vld [vmem:[%s2 + $0x18] sm:$0xff]
        %v2582 = vld [vmem:[%s2 + $0x20] sm:$0xff]
        %v2583 = vld [vmem:[%s2 + $0x28] sm:$0xff]
        %v2585 = vsel %vm325, %v2576, 0
        %2587 = vmatprep.subr.mxu0 0.0
        %2588 = vmatpush1.msra.mxu0 %v2578
        %2589 = vmatprep.subr.mxu0 0.0
        %2590 = vmatpush1.msra.mxu0 %v2579
        %2591 = vmatprep.subr.mxu0 0.0
        %2592 = vmatpush1.msra.mxu0 %v2580
        %2593 = vmatprep.subr.mxu0 0.0
        %2594 = vmatpush1.msra.mxu0 %v2581
        %2595 = vmatprep.subr.mxu0 0.0
        %2596 = vmatpush1.msra.mxu0 %v2582
        %2597 = vmatprep.subr.mxu0 0.0
        %2598 = vmatpush1.msra.mxu0 %v2583
        %2599 = vmatprep.subr.mxu0 0.0
        %2600 = vmatpush1.msra.mxu0 0.0
        %2601 = vmatprep.subr.mxu0 0.0
        %2602 = vmatpush1.msra.mxu0 0.0
        %2603 = vmatprep.subr.mxu0 0.0
        %2604 = vmatpush1.msra.mxu0 0.0
        %2605 = vmatprep.subr.mxu0 0.0
        %2606 = vmatpush1.msra.mxu0 0.0
        %2607 = vmatprep.subr.mxu0 0.0
        %2608 = vmatpush1.msra.mxu0 0.0
        %2609 = vmatprep.subr.mxu0 0.0
        %2610 = vmatpush1.msra.mxu0 0.0
        %2611 = vmatprep.subr.mxu0 0.0
        %2612 = vmatpush1.msra.mxu0 0.0
        %2613 = vmatprep.subr.mxu0 0.0
        %2614 = vmatpush1.msra.mxu0 0.0
        %2615 = vmatprep.subr.mxu0 0.0
        %2616 = vmatpush1.msra.mxu0 0.0
        %2617 = vmatprep.subr.mxu0 0.0
        %2618 = vmatpush1.msra.mxu0 0.0
        %2619 = vmatprep.subr.mxu0 0.0
        %2620 = vmatpush1.msra.mxu0 0.0
        %2621 = vmatprep.subr.mxu0 0.0
        %2622 = vmatpush1.msra.mxu0 0.0
        %2623 = vmatprep.subr.mxu0 0.0
        %2624 = vmatpush1.msra.mxu0 0.0
        %2625 = vmatprep.subr.mxu0 0.0
        %2626 = vmatpush1.msra.mxu0 0.0
        %2627 = vmatprep.subr.mxu0 0.0
        %2628 = vmatpush1.msra.mxu0 0.0
        %2629 = vmatprep.subr.mxu0 0.0
        %2630 = vmatpush1.msra.mxu0 0.0
        %2631 = vmatprep.subr.mxu0 0.0
        %2632 = vmatpush1.msra.mxu0 0.0
        %2633 = vmatprep.subr.mxu0 0.0
        %2634 = vmatpush1.msra.mxu0 0.0
        %2635 = vmatprep.subr.mxu0 0.0
        %2636 = vmatpush1.msra.mxu0 0.0
        %2637 = vmatprep.subr.mxu0 0.0
        %2638 = vmatpush1.msra.mxu0 0.0
        %2639 = vmatprep.subr.mxu0 0.0
        %2640 = vmatpush1.msra.mxu0 0.0
        %2641 = vmatprep.subr.mxu0 0.0
        %2642 = vmatpush1.msra.mxu0 0.0
        %2643 = vmatprep.subr.mxu0 0.0
        %2644 = vmatpush1.msra.mxu0 0.0
        %2645 = vmatprep.subr.mxu0 0.0
        %2646 = vmatpush1.msra.mxu0 0.0
        %2647 = vmatprep.subr.mxu0 0.0
        %2648 = vmatpush1.msra.mxu0 0.0
        %2649 = vmatprep.subr.mxu0 0.0
        %2650 = vmatpush1.msra.mxu0 0.0
        %2651 = vmatprep.mubr.f32.mxu0 0.0
        %2652 = vmatmul.mubr.f32.gmra.mrb[0].mxu0 %v2585
        %v2653 = vpop.f32.mrb[0].mxu0
        %v2654 = vadd.f32 0.0, %v2653
        %v2655 = vpop.f32.mrb[0].mxu0
        %2656 = vdwg.mxu0
        %v2657 = vadd.f32 %v2577, %v2654
        %2658 = vst.msk [vmem:[%s2574] sm:$0xff] %vm315, %v2657
        %v2659 = vld [vmem:[%s1575 + $0x1] sm:$0xff]
        %v2660 = vld [vmem:[%s2574] sm:$0xff]
        %v2661 = vld [vmem:[%s403] sm:$0xff]
        %v2662 = vld [vmem:[%s403 + $0x8] sm:$0xff]
        %v2663 = vld [vmem:[%s403 + $0x10] sm:$0xff]
        %v2664 = vld [vmem:[%s403 + $0x18] sm:$0xff]
        %v2665 = vld [vmem:[%s403 + $0x20] sm:$0xff]
        %v2666 = vld [vmem:[%s403 + $0x28] sm:$0xff]
        %v2668 = vsel %vm325, %v2659, 0
        %2670 = vmatprep.subr.mxu0 0.0
        %2671 = vmatpush1.msra.mxu0 %v2661
        %2672 = vmatprep.subr.mxu0 0.0
        %2673 = vmatpush1.msra.mxu0 %v2662
        %2674 = vmatprep.subr.mxu0 0.0
        %2675 = vmatpush1.msra.mxu0 %v2663
        %2676 = vmatprep.subr.mxu0 0.0
        %2677 = vmatpush1.msra.mxu0 %v2664
        %2678 = vmatprep.subr.mxu0 0.0
        %2679 = vmatpush1.msra.mxu0 %v2665
        %2680 = vmatprep.subr.mxu0 0.0
        %2681 = vmatpush1.msra.mxu0 %v2666
        %2682 = vmatprep.subr.mxu0 0.0
        %2683 = vmatpush1.msra.mxu0 0.0
        %2684 = vmatprep.subr.mxu0 0.0
        %2685 = vmatpush1.msra.mxu0 0.0
        %2686 = vmatprep.subr.mxu0 0.0
        %2687 = vmatpush1.msra.mxu0 0.0
        %2688 = vmatprep.subr.mxu0 0.0
        %2689 = vmatpush1.msra.mxu0 0.0
        %2690 = vmatprep.subr.mxu0 0.0
        %2691 = vmatpush1.msra.mxu0 0.0
        %2692 = vmatprep.subr.mxu0 0.0
        %2693 = vmatpush1.msra.mxu0 0.0
        %2694 = vmatprep.subr.mxu0 0.0
        %2695 = vmatpush1.msra.mxu0 0.0
        %2696 = vmatprep.subr.mxu0 0.0
        %2697 = vmatpush1.msra.mxu0 0.0
        %2698 = vmatprep.subr.mxu0 0.0
        %2699 = vmatpush1.msra.mxu0 0.0
        %2700 = vmatprep.subr.mxu0 0.0
        %2701 = vmatpush1.msra.mxu0 0.0
        %2702 = vmatprep.subr.mxu0 0.0
        %2703 = vmatpush1.msra.mxu0 0.0
        %2704 = vmatprep.subr.mxu0 0.0
        %2705 = vmatpush1.msra.mxu0 0.0
        %2706 = vmatprep.subr.mxu0 0.0
        %2707 = vmatpush1.msra.mxu0 0.0
        %2708 = vmatprep.subr.mxu0 0.0
        %2709 = vmatpush1.msra.mxu0 0.0
        %2710 = vmatprep.subr.mxu0 0.0
        %2711 = vmatpush1.msra.mxu0 0.0
        %2712 = vmatprep.subr.mxu0 0.0
        %2713 = vmatpush1.msra.mxu0 0.0
        %2714 = vmatprep.subr.mxu0 0.0
        %2715 = vmatpush1.msra.mxu0 0.0
        %2716 = vmatprep.subr.mxu0 0.0
        %2717 = vmatpush1.msra.mxu0 0.0
        %2718 = vmatprep.subr.mxu0 0.0
        %2719 = vmatpush1.msra.mxu0 0.0
        %2720 = vmatprep.subr.mxu0 0.0
        %2721 = vmatpush1.msra.mxu0 0.0
        %2722 = vmatprep.subr.mxu0 0.0
        %2723 = vmatpush1.msra.mxu0 0.0
        %2724 = vmatprep.subr.mxu0 0.0
        %2725 = vmatpush1.msra.mxu0 0.0
        %2726 = vmatprep.subr.mxu0 0.0
        %2727 = vmatpush1.msra.mxu0 0.0
        %2728 = vmatprep.subr.mxu0 0.0
        %2729 = vmatpush1.msra.mxu0 0.0
        %2730 = vmatprep.subr.mxu0 0.0
        %2731 = vmatpush1.msra.mxu0 0.0
        %2732 = vmatprep.subr.mxu0 0.0
        %2733 = vmatpush1.msra.mxu0 0.0
        %2734 = vmatprep.mubr.f32.mxu0 0.0
        %2735 = vmatmul.mubr.f32.gmra.mrb[0].mxu0 %v2668
        %v2736 = vpop.f32.mrb[0].mxu0
        %v2737 = vadd.f32 0.0, %v2736
        %v2738 = vpop.f32.mrb[0].mxu0
        %2739 = vdwg.mxu0
        %v2740 = vadd.f32 %v2660, %v2737
        %2741 = vst.msk [vmem:[%s2574] sm:$0xff] %vm315, %v2740
        %v2742 = vld [vmem:[%s1575 + $0x2] sm:$0xff]
        %v2743 = vld [vmem:[%s2574] sm:$0xff]
        %v2744 = vld [vmem:[%s487] sm:$0xff]
        %v2745 = vld [vmem:[%s487 + $0x8] sm:$0xff]
        %v2746 = vld [vmem:[%s487 + $0x10] sm:$0xff]
        %v2747 = vld [vmem:[%s487 + $0x18] sm:$0xff]
        %v2748 = vld [vmem:[%s487 + $0x20] sm:$0xff]
        %v2749 = vld [vmem:[%s487 + $0x28] sm:$0xff]
        %v2751 = vsel %vm325, %v2742, 0
        %2753 = vmatprep.subr.mxu0 0.0
        %2754 = vmatpush1.msra.mxu0 %v2744
        %2755 = vmatprep.subr.mxu0 0.0
        %2756 = vmatpush1.msra.mxu0 %v2745
        %2757 = vmatprep.subr.mxu0 0.0
        %2758 = vmatpush1.msra.mxu0 %v2746
        %2759 = vmatprep.subr.mxu0 0.0
        %2760 = vmatpush1.msra.mxu0 %v2747
        %2761 = vmatprep.subr.mxu0 0.0
        %2762 = vmatpush1.msra.mxu0 %v2748
        %2763 = vmatprep.subr.mxu0 0.0
        %2764 = vmatpush1.msra.mxu0 %v2749
        %2765 = vmatprep.subr.mxu0 0.0
        %2766 = vmatpush1.msra.mxu0 0.0
        %2767 = vmatprep.subr.mxu0 0.0
        %2768 = vmatpush1.msra.mxu0 0.0
        %2769 = vmatprep.subr.mxu0 0.0
        %2770 = vmatpush1.msra.mxu0 0.0
        %2771 = vmatprep.subr.mxu0 0.0
        %2772 = vmatpush1.msra.mxu0 0.0
        %2773 = vmatprep.subr.mxu0 0.0
        %2774 = vmatpush1.msra.mxu0 0.0
        %2775 = vmatprep.subr.mxu0 0.0
        %2776 = vmatpush1.msra.mxu0 0.0
        %2777 = vmatprep.subr.mxu0 0.0
        %2778 = vmatpush1.msra.mxu0 0.0
        %2779 = vmatprep.subr.mxu0 0.0
        %2780 = vmatpush1.msra.mxu0 0.0
        %2781 = vmatprep.subr.mxu0 0.0
        %2782 = vmatpush1.msra.mxu0 0.0
        %2783 = vmatprep.subr.mxu0 0.0
        %2784 = vmatpush1.msra.mxu0 0.0
        %2785 = vmatprep.subr.mxu0 0.0
        %2786 = vmatpush1.msra.mxu0 0.0
        %2787 = vmatprep.subr.mxu0 0.0
        %2788 = vmatpush1.msra.mxu0 0.0
        %2789 = vmatprep.subr.mxu0 0.0
        %2790 = vmatpush1.msra.mxu0 0.0
        %2791 = vmatprep.subr.mxu0 0.0
        %2792 = vmatpush1.msra.mxu0 0.0
        %2793 = vmatprep.subr.mxu0 0.0
        %2794 = vmatpush1.msra.mxu0 0.0
        %2795 = vmatprep.subr.mxu0 0.0
        %2796 = vmatpush1.msra.mxu0 0.0
        %2797 = vmatprep.subr.mxu0 0.0
        %2798 = vmatpush1.msra.mxu0 0.0
        %2799 = vmatprep.subr.mxu0 0.0
        %2800 = vmatpush1.msra.mxu0 0.0
        %2801 = vmatprep.subr.mxu0 0.0
        %2802 = vmatpush1.msra.mxu0 0.0
        %2803 = vmatprep.subr.mxu0 0.0
        %2804 = vmatpush1.msra.mxu0 0.0
        %2805 = vmatprep.subr.mxu0 0.0
        %2806 = vmatpush1.msra.mxu0 0.0
        %2807 = vmatprep.subr.mxu0 0.0
        %2808 = vmatpush1.msra.mxu0 0.0
        %2809 = vmatprep.subr.mxu0 0.0
        %2810 = vmatpush1.msra.mxu0 0.0
        %2811 = vmatprep.subr.mxu0 0.0
        %2812 = vmatpush1.msra.mxu0 0.0
        %2813 = vmatprep.subr.mxu0 0.0
        %2814 = vmatpush1.msra.mxu0 0.0
        %2815 = vmatprep.subr.mxu0 0.0
        %2816 = vmatpush1.msra.mxu0 0.0
        %2817 = vmatprep.mubr.f32.mxu0 0.0
        %2818 = vmatmul.mubr.f32.gmra.mrb[0].mxu0 %v2751
        %v2819 = vpop.f32.mrb[0].mxu0
        %v2820 = vadd.f32 0.0, %v2819
        %v2821 = vpop.f32.mrb[0].mxu0
        %2822 = vdwg.mxu0
        %v2823 = vadd.f32 %v2743, %v2820
        %2824 = vst.msk [vmem:[%s2574] sm:$0xff] %vm315, %v2823
        %v2825 = vld [vmem:[%s303] sm:$0xff]
        %v2826 = vld [vmem:[%s2574] sm:$0xff]
        %v2827 = vld [vmem:[%s572] sm:$0xff]
        %v2828 = vld [vmem:[%s572 + $0x8] sm:$0xff]
        %v2829 = vld [vmem:[%s572 + $0x10] sm:$0xff]
        %v2830 = vld [vmem:[%s572 + $0x18] sm:$0xff]
        %v2831 = vld [vmem:[%s572 + $0x20] sm:$0xff]
        %v2832 = vld [vmem:[%s572 + $0x28] sm:$0xff]
        %v2834 = vsel %vm325, %v2825, 0
        %2836 = vmatprep.subr.mxu0 0.0
        %2837 = vmatpush1.msra.mxu0 %v2827
        %2838 = vmatprep.subr.mxu0 0.0
        %2839 = vmatpush1.msra.mxu0 %v2828
        %2840 = vmatprep.subr.mxu0 0.0
        %2841 = vmatpush1.msra.mxu0 %v2829
        %2842 = vmatprep.subr.mxu0 0.0
        %2843 = vmatpush1.msra.mxu0 %v2830
        %2844 = vmatprep.subr.mxu0 0.0
        %2845 = vmatpush1.msra.mxu0 %v2831
        %2846 = vmatprep.subr.mxu0 0.0
        %2847 = vmatpush1.msra.mxu0 %v2832
        %2848 = vmatprep.subr.mxu0 0.0
        %2849 = vmatpush1.msra.mxu0 0.0
        %2850 = vmatprep.subr.mxu0 0.0
        %2851 = vmatpush1.msra.mxu0 0.0
        %2852 = vmatprep.subr.mxu0 0.0
        %2853 = vmatpush1.msra.mxu0 0.0
        %2854 = vmatprep.subr.mxu0 0.0
        %2855 = vmatpush1.msra.mxu0 0.0
        %2856 = vmatprep.subr.mxu0 0.0
        %2857 = vmatpush1.msra.mxu0 0.0
        %2858 = vmatprep.subr.mxu0 0.0
        %2859 = vmatpush1.msra.mxu0 0.0
        %2860 = vmatprep.subr.mxu0 0.0
        %2861 = vmatpush1.msra.mxu0 0.0
        %2862 = vmatprep.subr.mxu0 0.0
        %2863 = vmatpush1.msra.mxu0 0.0
        %2864 = vmatprep.subr.mxu0 0.0
        %2865 = vmatpush1.msra.mxu0 0.0
        %2866 = vmatprep.subr.mxu0 0.0
        %2867 = vmatpush1.msra.mxu0 0.0
        %2868 = vmatprep.subr.mxu0 0.0
        %2869 = vmatpush1.msra.mxu0 0.0
        %2870 = vmatprep.subr.mxu0 0.0
        %2871 = vmatpush1.msra.mxu0 0.0
        %2872 = vmatprep.subr.mxu0 0.0
        %2873 = vmatpush1.msra.mxu0 0.0
        %2874 = vmatprep.subr.mxu0 0.0
        %2875 = vmatpush1.msra.mxu0 0.0
        %2876 = vmatprep.subr.mxu0 0.0
        %2877 = vmatpush1.msra.mxu0 0.0
        %2878 = vmatprep.subr.mxu0 0.0
        %2879 = vmatpush1.msra.mxu0 0.0
        %2880 = vmatprep.subr.mxu0 0.0
        %2881 = vmatpush1.msra.mxu0 0.0
        %2882 = vmatprep.subr.mxu0 0.0
        %2883 = vmatpush1.msra.mxu0 0.0
        %2884 = vmatprep.subr.mxu0 0.0
        %2885 = vmatpush1.msra.mxu0 0.0
        %2886 = vmatprep.subr.mxu0 0.0
        %2887 = vmatpush1.msra.mxu0 0.0
        %2888 = vmatprep.subr.mxu0 0.0
        %2889 = vmatpush1.msra.mxu0 0.0
        %2890 = vmatprep.subr.mxu0 0.0
        %2891 = vmatpush1.msra.mxu0 0.0
        %2892 = vmatprep.subr.mxu0 0.0
        %2893 = vmatpush1.msra.mxu0 0.0
        %2894 = vmatprep.subr.mxu0 0.0
        %2895 = vmatpush1.msra.mxu0 0.0
        %2896 = vmatprep.subr.mxu0 0.0
        %2897 = vmatpush1.msra.mxu0 0.0
        %2898 = vmatprep.subr.mxu0 0.0
        %2899 = vmatpush1.msra.mxu0 0.0
        %2900 = vmatprep.mubr.f32.mxu0 0.0
        %2901 = vmatmul.mubr.f32.gmra.mrb[0].mxu0 %v2834
        %v2902 = vpop.f32.mrb[0].mxu0
        %v2903 = vadd.f32 0.0, %v2902
        %v2904 = vpop.f32.mrb[0].mxu0
        %2905 = vdwg.mxu0
        %v2906 = vadd.f32 %v2826, %v2903
        %2907 = vst.msk [vmem:[%s2574] sm:$0xff] %vm315, %v2906
        %v2908 = vld [vmem:[%s303 + $0x1] sm:$0xff]
        %v2909 = vld [vmem:[%s2574] sm:$0xff]
        %v2910 = vld [vmem:[%s656] sm:$0xff]
        %v2911 = vld [vmem:[%s656 + $0x8] sm:$0xff]
        %v2912 = vld [vmem:[%s656 + $0x10] sm:$0xff]
        %v2913 = vld [vmem:[%s656 + $0x18] sm:$0xff]
        %v2914 = vld [vmem:[%s656 + $0x20] sm:$0xff]
        %v2915 = vld [vmem:[%s656 + $0x28] sm:$0xff]
        %v2917 = vsel %vm325, %v2908, 0
        %2919 = vmatprep.subr.mxu0 0.0
        %2920 = vmatpush1.msra.mxu0 %v2910
        %2921 = vmatprep.subr.mxu0 0.0
        %2922 = vmatpush1.msra.mxu0 %v2911
        %2923 = vmatprep.subr.mxu0 0.0
        %2924 = vmatpush1.msra.mxu0 %v2912
        %2925 = vmatprep.subr.mxu0 0.0
        %2926 = vmatpush1.msra.mxu0 %v2913
        %2927 = vmatprep.subr.mxu0 0.0
        %2928 = vmatpush1.msra.mxu0 %v2914
        %2929 = vmatprep.subr.mxu0 0.0
        %2930 = vmatpush1.msra.mxu0 %v2915
        %2931 = vmatprep.subr.mxu0 0.0
        %2932 = vmatpush1.msra.mxu0 0.0
        %2933 = vmatprep.subr.mxu0 0.0
        %2934 = vmatpush1.msra.mxu0 0.0
        %2935 = vmatprep.subr.mxu0 0.0
        %2936 = vmatpush1.msra.mxu0 0.0
        %2937 = vmatprep.subr.mxu0 0.0
        %2938 = vmatpush1.msra.mxu0 0.0
        %2939 = vmatprep.subr.mxu0 0.0
        %2940 = vmatpush1.msra.mxu0 0.0
        %2941 = vmatprep.subr.mxu0 0.0
        %2942 = vmatpush1.msra.mxu0 0.0
        %2943 = vmatprep.subr.mxu0 0.0
        %2944 = vmatpush1.msra.mxu0 0.0
        %2945 = vmatprep.subr.mxu0 0.0
        %2946 = vmatpush1.msra.mxu0 0.0
        %2947 = vmatprep.subr.mxu0 0.0
        %2948 = vmatpush1.msra.mxu0 0.0
        %2949 = vmatprep.subr.mxu0 0.0
        %2950 = vmatpush1.msra.mxu0 0.0
        %2951 = vmatprep.subr.mxu0 0.0
        %2952 = vmatpush1.msra.mxu0 0.0
        %2953 = vmatprep.subr.mxu0 0.0
        %2954 = vmatpush1.msra.mxu0 0.0
        %2955 = vmatprep.subr.mxu0 0.0
        %2956 = vmatpush1.msra.mxu0 0.0
        %2957 = vmatprep.subr.mxu0 0.0
        %2958 = vmatpush1.msra.mxu0 0.0
        %2959 = vmatprep.subr.mxu0 0.0
        %2960 = vmatpush1.msra.mxu0 0.0
        %2961 = vmatprep.subr.mxu0 0.0
        %2962 = vmatpush1.msra.mxu0 0.0
        %2963 = vmatprep.subr.mxu0 0.0
        %2964 = vmatpush1.msra.mxu0 0.0
        %2965 = vmatprep.subr.mxu0 0.0
        %2966 = vmatpush1.msra.mxu0 0.0
        %2967 = vmatprep.subr.mxu0 0.0
        %2968 = vmatpush1.msra.mxu0 0.0
        %2969 = vmatprep.subr.mxu0 0.0
        %2970 = vmatpush1.msra.mxu0 0.0
        %2971 = vmatprep.subr.mxu0 0.0
        %2972 = vmatpush1.msra.mxu0 0.0
        %2973 = vmatprep.subr.mxu0 0.0
        %2974 = vmatpush1.msra.mxu0 0.0
        %2975 = vmatprep.subr.mxu0 0.0
        %2976 = vmatpush1.msra.mxu0 0.0
        %2977 = vmatprep.subr.mxu0 0.0
        %2978 = vmatpush1.msra.mxu0 0.0
        %2979 = vmatprep.subr.mxu0 0.0
        %2980 = vmatpush1.msra.mxu0 0.0
        %2981 = vmatprep.subr.mxu0 0.0
        %2982 = vmatpush1.msra.mxu0 0.0
        %2983 = vmatprep.mubr.f32.mxu0 0.0
        %2984 = vmatmul.mubr.f32.gmra.mrb[0].mxu0 %v2917
        %v2985 = vpop.f32.mrb[0].mxu0
        %v2986 = vadd.f32 0.0, %v2985
        %v2987 = vpop.f32.mrb[0].mxu0
        %2988 = vdwg.mxu0
        %v2989 = vadd.f32 %v2909, %v2986
        %2990 = vst.msk [vmem:[%s2574] sm:$0xff] %vm315, %v2989
        %v2991 = vld [vmem:[%s303 + $0x2] sm:$0xff]
        %v2992 = vld [vmem:[%s2574] sm:$0xff]
        %v2993 = vld [vmem:[%s740] sm:$0xff]
        %v2994 = vld [vmem:[%s740 + $0x8] sm:$0xff]
        %v2995 = vld [vmem:[%s740 + $0x10] sm:$0xff]
        %v2996 = vld [vmem:[%s740 + $0x18] sm:$0xff]
        %v2997 = vld [vmem:[%s740 + $0x20] sm:$0xff]
        %v2998 = vld [vmem:[%s740 + $0x28] sm:$0xff]
        %v3000 = vsel %vm325, %v2991, 0
        %3002 = vmatprep.subr.mxu0 0.0
        %3003 = vmatpush1.msra.mxu0 %v2993
        %3004 = vmatprep.subr.mxu0 0.0
        %3005 = vmatpush1.msra.mxu0 %v2994
        %3006 = vmatprep.subr.mxu0 0.0
        %3007 = vmatpush1.msra.mxu0 %v2995
        %3008 = vmatprep.subr.mxu0 0.0
        %3009 = vmatpush1.msra.mxu0 %v2996
        %3010 = vmatprep.subr.mxu0 0.0
        %3011 = vmatpush1.msra.mxu0 %v2997
        %3012 = vmatprep.subr.mxu0 0.0
        %3013 = vmatpush1.msra.mxu0 %v2998
        %3014 = vmatprep.subr.mxu0 0.0
        %3015 = vmatpush1.msra.mxu0 0.0
        %3016 = vmatprep.subr.mxu0 0.0
        %3017 = vmatpush1.msra.mxu0 0.0
        %3018 = vmatprep.subr.mxu0 0.0
        %3019 = vmatpush1.msra.mxu0 0.0
        %3020 = vmatprep.subr.mxu0 0.0
        %3021 = vmatpush1.msra.mxu0 0.0
        %3022 = vmatprep.subr.mxu0 0.0
        %3023 = vmatpush1.msra.mxu0 0.0
        %3024 = vmatprep.subr.mxu0 0.0
        %3025 = vmatpush1.msra.mxu0 0.0
        %3026 = vmatprep.subr.mxu0 0.0
        %3027 = vmatpush1.msra.mxu0 0.0
        %3028 = vmatprep.subr.mxu0 0.0
        %3029 = vmatpush1.msra.mxu0 0.0
        %3030 = vmatprep.subr.mxu0 0.0
        %3031 = vmatpush1.msra.mxu0 0.0
        %3032 = vmatprep.subr.mxu0 0.0
        %3033 = vmatpush1.msra.mxu0 0.0
        %3034 = vmatprep.subr.mxu0 0.0
        %3035 = vmatpush1.msra.mxu0 0.0
        %3036 = vmatprep.subr.mxu0 0.0
        %3037 = vmatpush1.msra.mxu0 0.0
        %3038 = vmatprep.subr.mxu0 0.0
        %3039 = vmatpush1.msra.mxu0 0.0
        %3040 = vmatprep.subr.mxu0 0.0
        %3041 = vmatpush1.msra.mxu0 0.0
        %3042 = vmatprep.subr.mxu0 0.0
        %3043 = vmatpush1.msra.mxu0 0.0
        %3044 = vmatprep.subr.mxu0 0.0
        %3045 = vmatpush1.msra.mxu0 0.0
        %3046 = vmatprep.subr.mxu0 0.0
        %3047 = vmatpush1.msra.mxu0 0.0
        %3048 = vmatprep.subr.mxu0 0.0
        %3049 = vmatpush1.msra.mxu0 0.0
        %3050 = vmatprep.subr.mxu0 0.0
        %3051 = vmatpush1.msra.mxu0 0.0
        %3052 = vmatprep.subr.mxu0 0.0
        %3053 = vmatpush1.msra.mxu0 0.0
        %3054 = vmatprep.subr.mxu0 0.0
        %3055 = vmatpush1.msra.mxu0 0.0
        %3056 = vmatprep.subr.mxu0 0.0
        %3057 = vmatpush1.msra.mxu0 0.0
        %3058 = vmatprep.subr.mxu0 0.0
        %3059 = vmatpush1.msra.mxu0 0.0
        %3060 = vmatprep.subr.mxu0 0.0
        %3061 = vmatpush1.msra.mxu0 0.0
        %3062 = vmatprep.subr.mxu0 0.0
        %3063 = vmatpush1.msra.mxu0 0.0
        %3064 = vmatprep.subr.mxu0 0.0
        %3065 = vmatpush1.msra.mxu0 0.0
        %3066 = vmatprep.mubr.f32.mxu0 0.0
        %3067 = vmatmul.mubr.f32.gmra.mrb[0].mxu0 %v3000
        %v3068 = vpop.f32.mrb[0].mxu0
        %v3069 = vadd.f32 0.0, %v3068
        %v3070 = vpop.f32.mrb[0].mxu0
        %3071 = vdwg.mxu0
        %v3072 = vadd.f32 %v2992, %v3069
        %3073 = vst.msk [vmem:[%s2574] sm:$0xff] %vm315, %v3072
        %s3074 = scalar_lea.vmem %s303, 16
        %v3075 = vld [vmem:[%s3074] sm:$0xff]
        %v3076 = vld [vmem:[%s2574] sm:$0xff]
        %v3077 = vld [vmem:[%s825] sm:$0xff]
        %v3078 = vld [vmem:[%s825 + $0x8] sm:$0xff]
        %v3079 = vld [vmem:[%s825 + $0x10] sm:$0xff]
        %v3080 = vld [vmem:[%s825 + $0x18] sm:$0xff]
        %v3081 = vld [vmem:[%s825 + $0x20] sm:$0xff]
        %v3082 = vld [vmem:[%s825 + $0x28] sm:$0xff]
        %v3084 = vsel %vm325, %v3075, 0
        %3086 = vmatprep.subr.mxu0 0.0
        %3087 = vmatpush1.msra.mxu0 %v3077
        %3088 = vmatprep.subr.mxu0 0.0
        %3089 = vmatpush1.msra.mxu0 %v3078
        %3090 = vmatprep.subr.mxu0 0.0
        %3091 = vmatpush1.msra.mxu0 %v3079
        %3092 = vmatprep.subr.mxu0 0.0
        %3093 = vmatpush1.msra.mxu0 %v3080
        %3094 = vmatprep.subr.mxu0 0.0
        %3095 = vmatpush1.msra.mxu0 %v3081
        %3096 = vmatprep.subr.mxu0 0.0
        %3097 = vmatpush1.msra.mxu0 %v3082
        %3098 = vmatprep.subr.mxu0 0.0
        %3099 = vmatpush1.msra.mxu0 0.0
        %3100 = vmatprep.subr.mxu0 0.0
        %3101 = vmatpush1.msra.mxu0 0.0
        %3102 = vmatprep.subr.mxu0 0.0
        %3103 = vmatpush1.msra.mxu0 0.0
        %3104 = vmatprep.subr.mxu0 0.0
        %3105 = vmatpush1.msra.mxu0 0.0
        %3106 = vmatprep.subr.mxu0 0.0
        %3107 = vmatpush1.msra.mxu0 0.0
        %3108 = vmatprep.subr.mxu0 0.0
        %3109 = vmatpush1.msra.mxu0 0.0
        %3110 = vmatprep.subr.mxu0 0.0
        %3111 = vmatpush1.msra.mxu0 0.0
        %3112 = vmatprep.subr.mxu0 0.0
        %3113 = vmatpush1.msra.mxu0 0.0
        %3114 = vmatprep.subr.mxu0 0.0
        %3115 = vmatpush1.msra.mxu0 0.0
        %3116 = vmatprep.subr.mxu0 0.0
        %3117 = vmatpush1.msra.mxu0 0.0
        %3118 = vmatprep.subr.mxu0 0.0
        %3119 = vmatpush1.msra.mxu0 0.0
        %3120 = vmatprep.subr.mxu0 0.0
        %3121 = vmatpush1.msra.mxu0 0.0
        %3122 = vmatprep.subr.mxu0 0.0
        %3123 = vmatpush1.msra.mxu0 0.0
        %3124 = vmatprep.subr.mxu0 0.0
        %3125 = vmatpush1.msra.mxu0 0.0
        %3126 = vmatprep.subr.mxu0 0.0
        %3127 = vmatpush1.msra.mxu0 0.0
        %3128 = vmatprep.subr.mxu0 0.0
        %3129 = vmatpush1.msra.mxu0 0.0
        %3130 = vmatprep.subr.mxu0 0.0
        %3131 = vmatpush1.msra.mxu0 0.0
        %3132 = vmatprep.subr.mxu0 0.0
        %3133 = vmatpush1.msra.mxu0 0.0
        %3134 = vmatprep.subr.mxu0 0.0
        %3135 = vmatpush1.msra.mxu0 0.0
        %3136 = vmatprep.subr.mxu0 0.0
        %3137 = vmatpush1.msra.mxu0 0.0
        %3138 = vmatprep.subr.mxu0 0.0
        %3139 = vmatpush1.msra.mxu0 0.0
        %3140 = vmatprep.subr.mxu0 0.0
        %3141 = vmatpush1.msra.mxu0 0.0
        %3142 = vmatprep.subr.mxu0 0.0
        %3143 = vmatpush1.msra.mxu0 0.0
        %3144 = vmatprep.subr.mxu0 0.0
        %3145 = vmatpush1.msra.mxu0 0.0
        %3146 = vmatprep.subr.mxu0 0.0
        %3147 = vmatpush1.msra.mxu0 0.0
        %3148 = vmatprep.subr.mxu0 0.0
        %3149 = vmatpush1.msra.mxu0 0.0
        %3150 = vmatprep.mubr.f32.mxu0 0.0
        %3151 = vmatmul.mubr.f32.gmra.mrb[0].mxu0 %v3084
        %v3152 = vpop.f32.mrb[0].mxu0
        %v3153 = vadd.f32 0.0, %v3152
        %v3154 = vpop.f32.mrb[0].mxu0
        %3155 = vdwg.mxu0
        %v3156 = vadd.f32 %v3076, %v3153
        %3157 = vst.msk [vmem:[%s2574] sm:$0xff] %vm315, %v3156
        %v3158 = vld [vmem:[%s3074 + $0x1] sm:$0xff]
        %v3159 = vld [vmem:[%s2574] sm:$0xff]
        %v3160 = vld [vmem:[%s909] sm:$0xff]
        %v3161 = vld [vmem:[%s909 + $0x8] sm:$0xff]
        %v3162 = vld [vmem:[%s909 + $0x10] sm:$0xff]
        %v3163 = vld [vmem:[%s909 + $0x18] sm:$0xff]
        %v3164 = vld [vmem:[%s909 + $0x20] sm:$0xff]
        %v3165 = vld [vmem:[%s909 + $0x28] sm:$0xff]
        %v3167 = vsel %vm325, %v3158, 0
        %3169 = vmatprep.subr.mxu0 0.0
        %3170 = vmatpush1.msra.mxu0 %v3160
        %3171 = vmatprep.subr.mxu0 0.0
        %3172 = vmatpush1.msra.mxu0 %v3161
        %3173 = vmatprep.subr.mxu0 0.0
        %3174 = vmatpush1.msra.mxu0 %v3162
        %3175 = vmatprep.subr.mxu0 0.0
        %3176 = vmatpush1.msra.mxu0 %v3163
        %3177 = vmatprep.subr.mxu0 0.0
        %3178 = vmatpush1.msra.mxu0 %v3164
        %3179 = vmatprep.subr.mxu0 0.0
        %3180 = vmatpush1.msra.mxu0 %v3165
        %3181 = vmatprep.subr.mxu0 0.0
        %3182 = vmatpush1.msra.mxu0 0.0
        %3183 = vmatprep.subr.mxu0 0.0
        %3184 = vmatpush1.msra.mxu0 0.0
        %3185 = vmatprep.subr.mxu0 0.0
        %3186 = vmatpush1.msra.mxu0 0.0
        %3187 = vmatprep.subr.mxu0 0.0
        %3188 = vmatpush1.msra.mxu0 0.0
        %3189 = vmatprep.subr.mxu0 0.0
        %3190 = vmatpush1.msra.mxu0 0.0
        %3191 = vmatprep.subr.mxu0 0.0
        %3192 = vmatpush1.msra.mxu0 0.0
        %3193 = vmatprep.subr.mxu0 0.0
        %3194 = vmatpush1.msra.mxu0 0.0
        %3195 = vmatprep.subr.mxu0 0.0
        %3196 = vmatpush1.msra.mxu0 0.0
        %3197 = vmatprep.subr.mxu0 0.0
        %3198 = vmatpush1.msra.mxu0 0.0
        %3199 = vmatprep.subr.mxu0 0.0
        %3200 = vmatpush1.msra.mxu0 0.0
        %3201 = vmatprep.subr.mxu0 0.0
        %3202 = vmatpush1.msra.mxu0 0.0
        %3203 = vmatprep.subr.mxu0 0.0
        %3204 = vmatpush1.msra.mxu0 0.0
        %3205 = vmatprep.subr.mxu0 0.0
        %3206 = vmatpush1.msra.mxu0 0.0
        %3207 = vmatprep.subr.mxu0 0.0
        %3208 = vmatpush1.msra.mxu0 0.0
        %3209 = vmatprep.subr.mxu0 0.0
        %3210 = vmatpush1.msra.mxu0 0.0
        %3211 = vmatprep.subr.mxu0 0.0
        %3212 = vmatpush1.msra.mxu0 0.0
        %3213 = vmatprep.subr.mxu0 0.0
        %3214 = vmatpush1.msra.mxu0 0.0
        %3215 = vmatprep.subr.mxu0 0.0
        %3216 = vmatpush1.msra.mxu0 0.0
        %3217 = vmatprep.subr.mxu0 0.0
        %3218 = vmatpush1.msra.mxu0 0.0
        %3219 = vmatprep.subr.mxu0 0.0
        %3220 = vmatpush1.msra.mxu0 0.0
        %3221 = vmatprep.subr.mxu0 0.0
        %3222 = vmatpush1.msra.mxu0 0.0
        %3223 = vmatprep.subr.mxu0 0.0
        %3224 = vmatpush1.msra.mxu0 0.0
        %3225 = vmatprep.subr.mxu0 0.0
        %3226 = vmatpush1.msra.mxu0 0.0
        %3227 = vmatprep.subr.mxu0 0.0
        %3228 = vmatpush1.msra.mxu0 0.0
        %3229 = vmatprep.subr.mxu0 0.0
        %3230 = vmatpush1.msra.mxu0 0.0
        %3231 = vmatprep.subr.mxu0 0.0
        %3232 = vmatpush1.msra.mxu0 0.0
        %3233 = vmatprep.mubr.f32.mxu0 0.0
        %3234 = vmatmul.mubr.f32.gmra.mrb[0].mxu0 %v3167
        %v3235 = vpop.f32.mrb[0].mxu0
        %v3236 = vadd.f32 0.0, %v3235
        %v3237 = vpop.f32.mrb[0].mxu0
        %3238 = vdwg.mxu0
        %v3239 = vadd.f32 %v3159, %v3236
        %3240 = vst.msk [vmem:[%s2574] sm:$0xff] %vm315, %v3239
        %v3241 = vld [vmem:[%s3074 + $0x2] sm:$0xff]
        %v3242 = vld [vmem:[%s2574] sm:$0xff]
        %v3243 = vld [vmem:[%s993] sm:$0xff]
        %v3244 = vld [vmem:[%s993 + $0x8] sm:$0xff]
        %v3245 = vld [vmem:[%s993 + $0x10] sm:$0xff]
        %v3246 = vld [vmem:[%s993 + $0x18] sm:$0xff]
        %v3247 = vld [vmem:[%s993 + $0x20] sm:$0xff]
        %v3248 = vld [vmem:[%s993 + $0x28] sm:$0xff]
        %v3250 = vsel %vm325, %v3241, 0
        %3252 = vmatprep.subr.mxu0 0.0
        %3253 = vmatpush1.msra.mxu0 %v3243
        %3254 = vmatprep.subr.mxu0 0.0
        %3255 = vmatpush1.msra.mxu0 %v3244
        %3256 = vmatprep.subr.mxu0 0.0
        %3257 = vmatpush1.msra.mxu0 %v3245
        %3258 = vmatprep.subr.mxu0 0.0
        %3259 = vmatpush1.msra.mxu0 %v3246
        %3260 = vmatprep.subr.mxu0 0.0
        %3261 = vmatpush1.msra.mxu0 %v3247
        %3262 = vmatprep.subr.mxu0 0.0
        %3263 = vmatpush1.msra.mxu0 %v3248
        %3264 = vmatprep.subr.mxu0 0.0
        %3265 = vmatpush1.msra.mxu0 0.0
        %3266 = vmatprep.subr.mxu0 0.0
        %3267 = vmatpush1.msra.mxu0 0.0
        %3268 = vmatprep.subr.mxu0 0.0
        %3269 = vmatpush1.msra.mxu0 0.0
        %3270 = vmatprep.subr.mxu0 0.0
        %3271 = vmatpush1.msra.mxu0 0.0
        %3272 = vmatprep.subr.mxu0 0.0
        %3273 = vmatpush1.msra.mxu0 0.0
        %3274 = vmatprep.subr.mxu0 0.0
        %3275 = vmatpush1.msra.mxu0 0.0
        %3276 = vmatprep.subr.mxu0 0.0
        %3277 = vmatpush1.msra.mxu0 0.0
        %3278 = vmatprep.subr.mxu0 0.0
        %3279 = vmatpush1.msra.mxu0 0.0
        %3280 = vmatprep.subr.mxu0 0.0
        %3281 = vmatpush1.msra.mxu0 0.0
        %3282 = vmatprep.subr.mxu0 0.0
        %3283 = vmatpush1.msra.mxu0 0.0
        %3284 = vmatprep.subr.mxu0 0.0
        %3285 = vmatpush1.msra.mxu0 0.0
        %3286 = vmatprep.subr.mxu0 0.0
        %3287 = vmatpush1.msra.mxu0 0.0
        %3288 = vmatprep.subr.mxu0 0.0
        %3289 = vmatpush1.msra.mxu0 0.0
        %3290 = vmatprep.subr.mxu0 0.0
        %3291 = vmatpush1.msra.mxu0 0.0
        %3292 = vmatprep.subr.mxu0 0.0
        %3293 = vmatpush1.msra.mxu0 0.0
        %3294 = vmatprep.subr.mxu0 0.0
        %3295 = vmatpush1.msra.mxu0 0.0
        %3296 = vmatprep.subr.mxu0 0.0
        %3297 = vmatpush1.msra.mxu0 0.0
        %3298 = vmatprep.subr.mxu0 0.0
        %3299 = vmatpush1.msra.mxu0 0.0
        %3300 = vmatprep.subr.mxu0 0.0
        %3301 = vmatpush1.msra.mxu0 0.0
        %3302 = vmatprep.subr.mxu0 0.0
        %3303 = vmatpush1.msra.mxu0 0.0
        %3304 = vmatprep.subr.mxu0 0.0
        %3305 = vmatpush1.msra.mxu0 0.0
        %3306 = vmatprep.subr.mxu0 0.0
        %3307 = vmatpush1.msra.mxu0 0.0
        %3308 = vmatprep.subr.mxu0 0.0
        %3309 = vmatpush1.msra.mxu0 0.0
        %3310 = vmatprep.subr.mxu0 0.0
        %3311 = vmatpush1.msra.mxu0 0.0
        %3312 = vmatprep.subr.mxu0 0.0
        %3313 = vmatpush1.msra.mxu0 0.0
        %3314 = vmatprep.subr.mxu0 0.0
        %3315 = vmatpush1.msra.mxu0 0.0
        %3316 = vmatprep.mubr.f32.mxu0 0.0
        %3317 = vmatmul.mubr.f32.gmra.mrb[0].mxu0 %v3250
        %v3318 = vpop.f32.mrb[0].mxu0
        %v3319 = vadd.f32 0.0, %v3318
        %v3320 = vpop.f32.mrb[0].mxu0
        %3321 = vdwg.mxu0
        %v3322 = vadd.f32 %v3242, %v3319
        %3323 = vst.msk [vmem:[%s2574] sm:$0xff] %vm315, %v3322
        %s3324 = sand.u32 %s142, 1
        %s3325 = scalar_lea.sflag [#allocation3], %s3324
        %s3326 = sand.u32 %s142, 1
        %s3327 = smul.addr %s3326, 32
        %s3328 = scalar_lea.vmem [#allocation2], %s3327
        // Predicated region
        $region37: #{tpu_custom_call.1} parent=35 // pred_check
          %p3329 = pneg %p152
        $region38: #{tpu_custom_call.1} parent=35 // pred_check_branch
          %3331 = sbr.rel (%p3329) target = $region40
        $region39: #{tpu_custom_call.1} parent=35 // pred_region
          %s3332 = smul.u32 4, %s23
          %s3334 = ssub.s32 512, 512
          %3335 = vsyncadd %s3325, %s3334
          %s3336 = smul.addr %s22, 8
          %s3337 = sadd.s32 %s3332, %s3336
          %s3338 = smul.addr %s3337, 128
          %s3339 = scalar_lea.hbm %s4, %s3338
          %s3340 = sshll.u32 %s3328, 4
          %s3341 = int_to_ptr.vmem [resolvable:$true] %s3340
          %3346 = dma.vmem_to_hbm [thread:$0]  %s3341, 512, %s3339, %s3325, 128, 128, 8
        $region40: #{tpu_custom_call.1} parent=35 // pred_fallthru
          _
      $region36: #{tpu_custom_call.1} parent=5 // pred_fallthru
        _
      %p3347 = scmp.le.s32.totalorder 2, %s13
      // Predicated region
      $region41: #{tpu_custom_call.1} parent=5 // pred_check
        %p3348 = pneg %p3347
      $region42: #{tpu_custom_call.1} parent=5 // pred_check_branch
        %3350 = sbr.rel (%p3348) target = $region44
      $region43: #{tpu_custom_call.1} parent=5 // pred_region
        %s3351 = ssub.s32 %s13, 2
        // Predicated region
        $region45: #{tpu_custom_call.1} parent=43 // pred_check
          %p3352 = pneg %p158
        $region46: #{tpu_custom_call.1} parent=43 // pred_check_branch
          %3354 = sbr.rel (%p3352) target = $region48
        $region47: #{tpu_custom_call.1} parent=43 // pred_region
          %s3355 = sand.u32 %s143, 1
          %s3356 = scalar_lea.sflag [#allocation3], %s3355
          %s3357 = sand.u32 %s143, 1
          %s3358 = smul.addr %s3357, 32
          %s3359 = scalar_lea.vmem [#allocation2], %s3358
          %3360 = dma.done %s3356, 512
        $region48: #{tpu_custom_call.1} parent=43 // pred_fallthru
          _
      $region44: #{tpu_custom_call.1} parent=5 // pred_fallthru
        _
    $region6: #{tpu_custom_call.1} parent=1 // loop_footer
      %s17 = sadd.s32 1, %s13
    $region7: #{tpu_custom_call.1} parent=1 // loop_footer_branch
      %12 = sbr.rel target = $region3
    $region8: #{tpu_custom_call.1} parent=1 // loop_exit
      _
    %3361 = vsyncpa [#allocation3], 1
    %s3362 = scalar_lea.sflag [#allocation3], 1
    %3363 = vsyncpa %s3362, 1

</llo_original>
